<compile_context>
chip_gen: v7x
topology: tpu7x:2x2x1
jax: 0.10.0
libtpu: 0.0.40
codegen_flags: <defaults>
</compile_context>

<pallas_src>
import jax
import jax.numpy as jnp
from jax.experimental import pallas as pl
from jax.experimental.pallas import tpu as pltpu

# ----------------------------- config (small, synthetic) --------------------
N_NODES = 8
N_EDGES = 16
BATCH = 2
HIDDEN = 32
LAYERS = 2
HEADS = 2
IN_CHANNELS = 16
NEG_SLOPE = 0.2  # leaky_relu slope used inside GATConv and between layers


def _leaky_relu(x, slope=NEG_SLOPE):
    return jnp.where(x > 0, x, slope * x)


# ----------------------------- Pallas kernel --------------------------------
def gatgfn_kernel(
    xt_ref,       # (Cin, N)   node features, transposed
    st_ref,       # (N, E)     one_hot(src).T
    d_ref,        # (E, N)     one_hot(dst)
    dt_ref,       # (N, E)     one_hot(dst).T
    state_ref,    # (B, E)
    w0_ref,       # (H, Cin)   input embedding weight (PyTorch layout)
    b0t_ref,      # (H, 1)
    wlin_ref,     # (L, K*H, H) GATConv lin weights (PyTorch layout)
    asrc_ref,     # (L, K, K*H) block-row att_src
    adst_ref,     # (L, K, K*H) block-row att_dst
    expt_ref,     # (K*H, K)    0/1 head-broadcast matrix
    hmt_ref,      # (H, K*H)    1/K head-mean matrix
    gbias_ref,    # (L, H, 1)
    wxa_ref,      # (L, A, H)   x_to_alpha weight, split per layer
    bxat_ref,     # (A, 1)
    wr1_ref,      # (H, A)      read_out_logits[0] weight (PyTorch layout)
    br1t_ref,     # (H, 1)
    wr1a_ref,     # (H, L*K)    Wr1[:, 1:]   (alpha part)
    wr1s_ref,     # (H, 1)      Wr1[:, 0:1]  (state part)
    wr2_ref,      # (1, H)      read_out_logits[2] weight
    br2_ref,      # (1, 1)
    out_ref,      # (B, E+1)
    alphaT_ref,   # scratch (L*K, E)  attention weights (heads on sublanes)
):
    f32 = jnp.float32
    H = w0_ref.shape[0]
    L = wlin_ref.shape[0]
    K = wlin_ref.shape[1] // H
    B = state_ref.shape[0]

    ST = st_ref[...]       # (N, E)
    D = d_ref[...]         # (E, N)
    DT = dt_ref[...]       # (N, E)
    expT = expt_ref[...]   # (K*H, K)
    hmT = hmt_ref[...]     # (H, K*H)

    # -------- input embedding (features on sublanes, nodes on lanes) --------
    hT = jnp.dot(w0_ref[...], xt_ref[...],
                 preferred_element_type=f32) + b0t_ref[...]          # (H, N)

    xmT = bxat_ref[...]    # (A, 1) accumulator: mean_n(x_to_alpha(cat(x_ls)))^T

    for l in range(L):
        # per-head linear transform for all heads at once
        xwT = jnp.dot(wlin_ref[l], hT, preferred_element_type=f32)   # (K*H, N)

        # attention projections, all heads at once
        a_srcT = jnp.dot(asrc_ref[l], xwT, preferred_element_type=f32)  # (K, N)
        a_dstT = jnp.dot(adst_ref[l], xwT, preferred_element_type=f32)  # (K, N)

        # per-edge raw attention:  alpha_src[src_e] + alpha_dst[dst_e]
        e_alphaT = (jnp.dot(a_srcT, ST, preferred_element_type=f32)
                    + jnp.dot(a_dstT, DT, preferred_element_type=f32))  # (K, E)
        e_alphaT = _leaky_relu(e_alphaT)

        # segment softmax over incoming edges of each dst node, all heads at
        # once.  A per-head global max is used; softmax is shift-invariant, so
        # this matches PyG's per-segment-max formulation.
        g_max = jnp.max(e_alphaT, axis=1, keepdims=True)                 # (K, 1)
        exp_aT = jnp.exp(e_alphaT - g_max)                               # (K, E)
        node_sumT = jnp.dot(exp_aT, D, preferred_element_type=f32)       # (K, N)
        e_sumT = jnp.dot(node_sumT, DT, preferred_element_type=f32)      # (K, E)
        alphaT = exp_aT / (e_sumT + 1e-16)                               # (K, E)
        # NOTE: GATConv attention dropout is identity in eval mode.

        # message passing, all heads at once
        x_srcT = jnp.dot(xwT, ST, preferred_element_type=f32)            # (K*H, E)
        alpha_bT = jnp.dot(expT, alphaT, preferred_element_type=f32)     # (K*H, E)
        aggT = jnp.dot(alpha_bT * x_srcT, D, preferred_element_type=f32)  # (K*H, N)
        # concat=False  =>  mean over heads, then add bias
        out_lT = jnp.dot(hmT, aggT, preferred_element_type=f32) + gbias_ref[l]  # (H, N)

        # contribution of this layer to mean_nodes(x_to_alpha(cat(x_ls)))
        xmeanT = jnp.mean(out_lT, axis=1, keepdims=True)                 # (H, 1)
        xmT = xmT + jnp.dot(wxa_ref[l], xmeanT, preferred_element_type=f32)  # (A, 1)

        # attention weights already live as (heads on sublanes, edges on lanes)
        alphaT_ref[l * K:(l + 1) * K, :] = alphaT

        if l + 1 < L:
            hT = _leaky_relu(out_lT)

    # -------- read-out MLP (lane-dense: lanes = edges) -----------------------
    # graph-summary row, identical for every batch element
    h1xT = jnp.maximum(
        jnp.dot(wr1_ref[...], xmT, preferred_element_type=f32) + br1t_ref[...],
        0.0)                                                             # (H, 1)
    pf_x = jnp.dot(wr2_ref[...], h1xT, preferred_element_type=f32) + br2_ref[...]  # (1, 1)

    # edge rows: only the state row differs between batch elements
    h1_sharedT = (jnp.dot(wr1a_ref[...], alphaT_ref[...],
                          preferred_element_type=f32) + br1t_ref[...])   # (H, E)
    wr1s = wr1s_ref[...]                                                 # (H, 1)
    wr2 = wr2_ref[...]                                                   # (1, H)
    br2 = br2_ref[...]                                                   # (1, 1)
    state = state_ref[...]                                               # (B, E)

    rows = []
    for b in range(B):
        h1_bT = jnp.maximum(h1_sharedT + wr1s * state[b:b + 1, :], 0.0)  # (H, E)
        pf_bT = jnp.dot(wr2, h1_bT, preferred_element_type=f32) + br2    # (1, E)
        rows.append(jnp.concatenate([pf_x, pf_bT], axis=1))              # (1, E+1)
    out_ref[...] = jnp.concatenate(rows, axis=0)                         # (B, E+1)


# ----------------------------- parameter packing -----------------------------
def _pack_params(p):
    """Pre-arrange the base parameters into the layouts consumed by the kernel."""
    L, H, kh = p["wlin"].shape
    K = kh // H
    A = p["bxa"].shape[1]
    f32 = jnp.float32
    eye_k = jnp.eye(K, dtype=f32)

    # block-row layout of the attention vectors: blk[l, k, j*H + h] = a[l,k,h]*(k==j)
    def block_rows(a):
        return jnp.einsum("lkh,kj->lkjh", a, eye_k).reshape(L, K, K * H)

    return dict(
        w0=p["w0t"].T,                                        # (H, Cin)
        b0t=p["b0"].T,                                        # (H, 1)
        wlin=jnp.swapaxes(p["wlin"], 1, 2),                   # (L, K*H, H)
        asrc=block_rows(p["asrc"]),                           # (L, K, K*H)
        adst=block_rows(p["adst"]),                           # (L, K, K*H)
        expT=jnp.kron(eye_k, jnp.ones((H, 1), f32)),          # (K*H, K)
        hmT=jnp.kron(jnp.ones((1, K), f32), jnp.eye(H, dtype=f32)) / K,  # (H, K*H)
        gbias=p["gbias"][:, :, None],                         # (L, H, 1)
        wxa=jnp.swapaxes(p["wxat"].reshape(L, H, A), 1, 2),   # (L, A, H)
        bxat=p["bxa"].T,                                      # (A, 1)
        wr1=p["wr1t"].T,                                      # (H, A)
        br1t=p["br1"].T,                                      # (H, 1)
        wr1a=p["wr1t"][1:, :].T,                              # (H, L*K)
        wr1s=p["wr1t"][0:1, :].T,                             # (H, 1)
        wr2=p["wr2t"].T,                                      # (1, H)
        br2=p["br2"],                                         # (1, 1)
    )


# ----------------------------- wrapper ---------------------------------------
def gatgfn_forward(x, edge_index, state, params):
    """x: (N, Cin) f32, edge_index: (2, E) int32, state: (B, E) f32.
    Returns pf_logits: (B, E+1, 1) f32 (matches the PyTorch output)."""
    n = x.shape[0]
    e = edge_index.shape[1]
    b = state.shape[0]
    L, H, kh = params["wlin"].shape
    K = kh // H

    src, dst = edge_index[0], edge_index[1]
    ST = jax.nn.one_hot(src, n, dtype=jnp.float32).T      # (N, E)
    D = jax.nn.one_hot(dst, n, dtype=jnp.float32)         # (E, N)
    DT = D.T                                              # (N, E)
    kp = _pack_params(params)

    inputs = (
        x.astype(jnp.float32).T, ST, D, DT, state.astype(jnp.float32),
        kp["w0"], kp["b0t"], kp["wlin"], kp["asrc"], kp["adst"],
        kp["expT"], kp["hmT"], kp["gbias"],
        kp["wxa"], kp["bxat"],
        kp["wr1"], kp["br1t"], kp["wr1a"], kp["wr1s"], kp["wr2"], kp["br2"],
    )

    out = pl.pallas_call(
        gatgfn_kernel,
        out_shape=jax.ShapeDtypeStruct((b, e + 1), jnp.float32),
        in_specs=[pl.BlockSpec(memory_space=pltpu.MemorySpace.VMEM)] * len(inputs),
        out_specs=pl.BlockSpec(memory_space=pltpu.MemorySpace.VMEM),
        scratch_shapes=[pltpu.VMEM((L * K, e), jnp.float32)],
    )(*inputs)
    return out.reshape(b, e + 1, 1)


# ----------------------------- pure-JAX reference ----------------------------
def gatgfn_reference(x, edge_index, state, params):
    """Dense pure-JAX mirror of the PyTorch forward (eval mode)."""
    n = x.shape[0]
    e = edge_index.shape[1]
    b = state.shape[0]
    L, H, kh = params["wlin"].shape
    K = kh // H
    src, dst = edge_index[0], edge_index[1]
    S = jax.nn.one_hot(src, n, dtype=jnp.float32)
    D = jax.nn.one_hot(dst, n, dtype=jnp.float32)

    h = x @ params["w0t"] + params["b0"]
    x_pieces, alpha_pieces = [], []
    for l in range(L):
        xw = h @ params["wlin"][l]                       # (N, K*H)
        out_sum = 0.0
        for k in range(K):
            xw_k = xw[:, k * H:(k + 1) * H]
            a_src = jnp.sum(xw_k * params["asrc"][l, k], axis=1, keepdims=True)
            a_dst = jnp.sum(xw_k * params["adst"][l, k], axis=1, keepdims=True)
            ea = _leaky_relu(S @ a_src + D @ a_dst)      # (E, 1)
            masked = jnp.where(D > 0, ea, -1e30)         # (E, N)
            node_max = jnp.max(masked, axis=0, keepdims=True)
            e_max = jnp.sum(D * node_max, axis=1, keepdims=True)
            exp_a = jnp.exp(ea - e_max)
            node_sum = jnp.sum(D * exp_a, axis=0, keepdims=True)
            e_sum = jnp.sum(D * node_sum, axis=1, keepdims=True)
            alpha = exp_a / (e_sum + 1e-16)
            out_sum = out_sum + D.T @ (alpha * (S @ xw_k))
            alpha_pieces.append(alpha)
        out_l = out_sum / K + params["gbias"][l][None, :]
        x_pieces.append(out_l)
        h = _leaky_relu(out_l)
    x_ls = jnp.concatenate(x_pieces, axis=1)
    alpha_ls = jnp.concatenate(alpha_pieces, axis=1)     # (E, L*K)
    x_logits = x_ls @ params["wxat"] + params["bxa"]     # (N, A)
    xm = jnp.mean(x_logits, axis=0, keepdims=True)       # (1, A)
    concated = jnp.concatenate(
        [state[:, :, None],
         jnp.broadcast_to(alpha_ls[None], (b, e, alpha_ls.shape[1]))], axis=-1)
    logits = jnp.concatenate(
        [jnp.broadcast_to(xm[None], (b, 1, xm.shape[1])), concated], axis=1)
    h1 = jnp.maximum(logits @ params["wr1t"] + params["br1"], 0.0)
    pf = h1 @ params["wr2t"] + params["br2"]
    return pf                                             # (B, E+1, 1)


def init_params(key):
    """Deterministic synthetic parameters (shapes follow GATGFN.__init__)."""
    a = LAYERS * HEADS + 1
    ks = jax.random.split(key, 12)

    def rnd(k, shape, scale=0.1):
        return scale * jax.random.normal(k, shape, dtype=jnp.float32)

    return dict(
        # input_embedding = nn.Linear(in_channels, hidden_dim)
        w0t=rnd(ks[0], (IN_CHANNELS, HIDDEN)),
        b0=rnd(ks[1], (1, HIDDEN)),
        # L x GATConv(hidden, hidden, heads=K, concat=False)
        wlin=rnd(ks[2], (LAYERS, HIDDEN, HEADS * HIDDEN)),
        asrc=rnd(ks[3], (LAYERS, HEADS, HIDDEN)),
        adst=rnd(ks[4], (LAYERS, HEADS, HIDDEN)),
        gbias=rnd(ks[5], (LAYERS, HIDDEN)),
        # x_to_alpha = nn.Linear(L*H, L*K+1)
        wxat=rnd(ks[6], (LAYERS * HIDDEN, a)),
        bxa=rnd(ks[7], (1, a)),
        # read_out_logits = Linear(L*K+1, H) -> ReLU -> Linear(H, 1)
        wr1t=rnd(ks[8], (a, HIDDEN)),
        br1=rnd(ks[9], (1, HIDDEN)),
        wr2t=rnd(ks[10], (HIDDEN, 1)),
        br2=rnd(ks[11], (1, 1)),
    )


if __name__ == "__main__":
    key = jax.random.PRNGKey(0)
    k_x, k_src, k_dst, k_state, k_params = jax.random.split(key, 5)

    x = jax.random.normal(k_x, (N_NODES, IN_CHANNELS), dtype=jnp.float32)
    src = jax.random.randint(k_src, (N_EDGES,), 0, N_NODES, dtype=jnp.int32)
    dst = jax.random.randint(k_dst, (N_EDGES,), 0, N_NODES, dtype=jnp.int32)
    edge_index = jnp.stack([src, dst], axis=0)                        # (2, E)
    state = (jax.random.uniform(k_state, (BATCH, N_EDGES)) < 0.5).astype(jnp.float32)

    params = init_params(k_params)

    pf_logits = gatgfn_forward(x, edge_index, state, params)          # (B, E+1, 1)
    jax.block_until_ready(pf_logits)
    assert pf_logits.shape == (BATCH, N_EDGES + 1, 1)
    assert bool(jnp.all(jnp.isfinite(pf_logits)))

    # correctness self-check against a plain-JAX dense reference
    pf_ref = gatgfn_reference(x, edge_index, state, params)
    max_err = float(jnp.max(jnp.abs(pf_logits - pf_ref)))
    assert max_err < 1e-2, f"kernel/reference mismatch: max abs err = {max_err}"

    print("KERNEL_OK")
</pallas_src>

<mosaic_0001>
module attributes {stable_mosaic.version = 11 : i64} {
  func.func @gatgfn_kernel(%arg0: memref<16x8xf32, #tpu.memory_space<vmem>>, %arg1: memref<8x16xf32, #tpu.memory_space<vmem>>, %arg2: memref<16x8xf32, #tpu.memory_space<vmem>>, %arg3: memref<8x16xf32, #tpu.memory_space<vmem>>, %arg4: memref<2x16xf32, #tpu.memory_space<vmem>>, %arg5: memref<32x16xf32, #tpu.memory_space<vmem>>, %arg6: memref<32x1xf32, #tpu.memory_space<vmem>>, %arg7: memref<2x64x32xf32, #tpu.memory_space<vmem>>, %arg8: memref<2x2x64xf32, #tpu.memory_space<vmem>>, %arg9: memref<2x2x64xf32, #tpu.memory_space<vmem>>, %arg10: memref<64x2xf32, #tpu.memory_space<vmem>>, %arg11: memref<32x64xf32, #tpu.memory_space<vmem>>, %arg12: memref<2x32x1xf32, #tpu.memory_space<vmem>>, %arg13: memref<2x5x32xf32, #tpu.memory_space<vmem>>, %arg14: memref<5x1xf32, #tpu.memory_space<vmem>>, %arg15: memref<32x5xf32, #tpu.memory_space<vmem>>, %arg16: memref<32x1xf32, #tpu.memory_space<vmem>>, %arg17: memref<32x4xf32, #tpu.memory_space<vmem>>, %arg18: memref<32x1xf32, #tpu.memory_space<vmem>>, %arg19: memref<1x32xf32, #tpu.memory_space<vmem>>, %arg20: memref<1x1xf32, #tpu.memory_space<vmem>>, %arg21: memref<2x17xf32, #tpu.memory_space<vmem>>, %arg22: memref<4x16xf32, #tpu.memory_space<vmem>>) attributes {dimension_semantics = [], scalar_prefetch = 0 : i64, scratch_operands = 1 : i64, tpu.core_type = #tpu.core_type<tc>} {
    %c0 = arith.constant 0 : index
    %c0_0 = arith.constant 0 : index
    %0 = vector.load %arg1[%c0, %c0_0] : memref<8x16xf32, #tpu.memory_space<vmem>>, vector<8x16xf32>
    %c0_1 = arith.constant 0 : index
    %c0_2 = arith.constant 0 : index
    %1 = vector.load %arg2[%c0_1, %c0_2] : memref<16x8xf32, #tpu.memory_space<vmem>>, vector<16x8xf32>
    %c0_3 = arith.constant 0 : index
    %c0_4 = arith.constant 0 : index
    %2 = vector.load %arg3[%c0_3, %c0_4] : memref<8x16xf32, #tpu.memory_space<vmem>>, vector<8x16xf32>
    %c0_5 = arith.constant 0 : index
    %c0_6 = arith.constant 0 : index
    %3 = vector.load %arg10[%c0_5, %c0_6] : memref<64x2xf32, #tpu.memory_space<vmem>>, vector<64x2xf32>
    %c0_7 = arith.constant 0 : index
    %c0_8 = arith.constant 0 : index
    %4 = vector.load %arg11[%c0_7, %c0_8] : memref<32x64xf32, #tpu.memory_space<vmem>>, vector<32x64xf32>
    %c0_9 = arith.constant 0 : index
    %c0_10 = arith.constant 0 : index
    %5 = vector.load %arg5[%c0_9, %c0_10] : memref<32x16xf32, #tpu.memory_space<vmem>>, vector<32x16xf32>
    %c0_11 = arith.constant 0 : index
    %c0_12 = arith.constant 0 : index
    %6 = vector.load %arg0[%c0_11, %c0_12] : memref<16x8xf32, #tpu.memory_space<vmem>>, vector<16x8xf32>
    %cst = arith.constant dense<0.000000e+00> : vector<32x8xf32>
    %7 = tpu.matmul %5, %6, %cst {dimension_numbers = #tpu.dot_dimension_numbers<[1], [0], [0], [1], [0, 0, 1, 1], [], []>} : vector<32x16xf32>, vector<16x8xf32>, vector<32x8xf32> -> vector<32x8xf32>
    %c0_13 = arith.constant 0 : index
    %c0_14 = arith.constant 0 : index
    %8 = vector.load %arg6[%c0_13, %c0_14] : memref<32x1xf32, #tpu.memory_space<vmem>>, vector<32x1xf32>
    %9 = vector.broadcast %8 : vector<32x1xf32> to vector<32x8xf32>
    %10 = arith.addf %7, %9 : vector<32x8xf32>
    %c0_15 = arith.constant 0 : index
    %c0_16 = arith.constant 0 : index
    %11 = vector.load %arg14[%c0_15, %c0_16] : memref<5x1xf32, #tpu.memory_space<vmem>>, vector<5x1xf32>
    %c0_17 = arith.constant 0 : index
    %c0_18 = arith.constant 0 : index
    %c0_19 = arith.constant 0 : index
    %12 = vector.load %arg7[%c0_17, %c0_18, %c0_19] : memref<2x64x32xf32, #tpu.memory_space<vmem>>, vector<1x64x32xf32>
    %13 = vector.shape_cast %12 : vector<1x64x32xf32> to vector<64x32xf32>
    %cst_20 = arith.constant dense<0.000000e+00> : vector<64x8xf32>
    %14 = tpu.matmul %13, %10, %cst_20 {dimension_numbers = #tpu.dot_dimension_numbers<[1], [0], [0], [1], [0, 0, 1, 1], [], []>} : vector<64x32xf32>, vector<32x8xf32>, vector<64x8xf32> -> vector<64x8xf32>
    %c0_21 = arith.constant 0 : index
    %c0_22 = arith.constant 0 : index
    %c0_23 = arith.constant 0 : index
    %15 = vector.load %arg8[%c0_21, %c0_22, %c0_23] : memref<2x2x64xf32, #tpu.memory_space<vmem>>, vector<1x2x64xf32>
    %16 = vector.shape_cast %15 : vector<1x2x64xf32> to vector<2x64xf32>
    %cst_24 = arith.constant dense<0.000000e+00> : vector<2x8xf32>
    %17 = tpu.matmul %16, %14, %cst_24 {dimension_numbers = #tpu.dot_dimension_numbers<[1], [0], [0], [1], [0, 0, 1, 1], [], []>} : vector<2x64xf32>, vector<64x8xf32>, vector<2x8xf32> -> vector<2x8xf32>
    %c0_25 = arith.constant 0 : index
    %c0_26 = arith.constant 0 : index
    %c0_27 = arith.constant 0 : index
    %18 = vector.load %arg9[%c0_25, %c0_26, %c0_27] : memref<2x2x64xf32, #tpu.memory_space<vmem>>, vector<1x2x64xf32>
    %19 = vector.shape_cast %18 : vector<1x2x64xf32> to vector<2x64xf32>
    %cst_28 = arith.constant dense<0.000000e+00> : vector<2x8xf32>
    %20 = tpu.matmul %19, %14, %cst_28 {dimension_numbers = #tpu.dot_dimension_numbers<[1], [0], [0], [1], [0, 0, 1, 1], [], []>} : vector<2x64xf32>, vector<64x8xf32>, vector<2x8xf32> -> vector<2x8xf32>
    %cst_29 = arith.constant dense<0.000000e+00> : vector<2x16xf32>
    %21 = tpu.matmul %17, %0, %cst_29 {dimension_numbers = #tpu.dot_dimension_numbers<[1], [0], [0], [1], [0, 0, 1, 1], [], []>} : vector<2x8xf32>, vector<8x16xf32>, vector<2x16xf32> -> vector<2x16xf32>
    %cst_30 = arith.constant dense<0.000000e+00> : vector<2x16xf32>
    %22 = tpu.matmul %20, %2, %cst_30 {dimension_numbers = #tpu.dot_dimension_numbers<[1], [0], [0], [1], [0, 0, 1, 1], [], []>} : vector<2x8xf32>, vector<8x16xf32>, vector<2x16xf32> -> vector<2x16xf32>
    %23 = arith.addf %21, %22 : vector<2x16xf32>
    %cst_31 = arith.constant 0.000000e+00 : f32
    %24 = vector.broadcast %cst_31 : f32 to vector<2x16xf32>
    %25 = arith.cmpf ogt, %23, %24 : vector<2x16xf32>
    %cst_32 = arith.constant 2.000000e-01 : f32
    %26 = vector.broadcast %cst_32 : f32 to vector<2x16xf32>
    %27 = arith.mulf %26, %23 : vector<2x16xf32>
    %28 = arith.select %25, %23, %27 : vector<2x16xi1>, vector<2x16xf32>
    %cst_33 = arith.constant dense<0xFF800000> : vector<2xf32>
    %29 = vector.multi_reduction <maximumf>, %28, %cst_33 [1] : vector<2x16xf32> to vector<2xf32>
    %30 = vector.shape_cast %29 : vector<2xf32> to vector<2x1xf32>
    %31 = vector.broadcast %30 : vector<2x1xf32> to vector<2x16xf32>
    %32 = arith.subf %28, %31 : vector<2x16xf32>
    %33 = math.exp %32 : vector<2x16xf32>
    %cst_34 = arith.constant dense<0.000000e+00> : vector<2x8xf32>
    %34 = tpu.matmul %33, %1, %cst_34 {dimension_numbers = #tpu.dot_dimension_numbers<[1], [0], [0], [1], [0, 0, 1, 1], [], []>} : vector<2x16xf32>, vector<16x8xf32>, vector<2x8xf32> -> vector<2x8xf32>
    %cst_35 = arith.constant dense<0.000000e+00> : vector<2x16xf32>
    %35 = tpu.matmul %34, %2, %cst_35 {dimension_numbers = #tpu.dot_dimension_numbers<[1], [0], [0], [1], [0, 0, 1, 1], [], []>} : vector<2x8xf32>, vector<8x16xf32>, vector<2x16xf32> -> vector<2x16xf32>
    %cst_36 = arith.constant 1.000000e-16 : f32
    %36 = vector.broadcast %cst_36 : f32 to vector<2x16xf32>
    %37 = arith.addf %35, %36 : vector<2x16xf32>
    %38 = arith.divf %33, %37 : vector<2x16xf32>
    %cst_37 = arith.constant dense<0.000000e+00> : vector<64x16xf32>
    %39 = tpu.matmul %14, %0, %cst_37 {dimension_numbers = #tpu.dot_dimension_numbers<[1], [0], [0], [1], [0, 0, 1, 1], [], []>} : vector<64x8xf32>, vector<8x16xf32>, vector<64x16xf32> -> vector<64x16xf32>
    %cst_38 = arith.constant dense<0.000000e+00> : vector<64x16xf32>
    %40 = tpu.matmul %3, %38, %cst_38 {dimension_numbers = #tpu.dot_dimension_numbers<[1], [0], [0], [1], [0, 0, 1, 1], [], []>} : vector<64x2xf32>, vector<2x16xf32>, vector<64x16xf32> -> vector<64x16xf32>
    %41 = arith.mulf %40, %39 : vector<64x16xf32>
    %cst_39 = arith.constant dense<0.000000e+00> : vector<64x8xf32>
    %42 = tpu.matmul %41, %1, %cst_39 {dimension_numbers = #tpu.dot_dimension_numbers<[1], [0], [0], [1], [0, 0, 1, 1], [], []>} : vector<64x16xf32>, vector<16x8xf32>, vector<64x8xf32> -> vector<64x8xf32>
    %cst_40 = arith.constant dense<0.000000e+00> : vector<32x8xf32>
    %43 = tpu.matmul %4, %42, %cst_40 {dimension_numbers = #tpu.dot_dimension_numbers<[1], [0], [0], [1], [0, 0, 1, 1], [], []>} : vector<32x64xf32>, vector<64x8xf32>, vector<32x8xf32> -> vector<32x8xf32>
    %c0_41 = arith.constant 0 : index
    %c0_42 = arith.constant 0 : index
    %c0_43 = arith.constant 0 : index
    %44 = vector.load %arg12[%c0_41, %c0_42, %c0_43] : memref<2x32x1xf32, #tpu.memory_space<vmem>>, vector<1x32x1xf32>
    %45 = vector.shape_cast %44 : vector<1x32x1xf32> to vector<32x1xf32>
    %46 = vector.broadcast %45 : vector<32x1xf32> to vector<32x8xf32>
    %47 = arith.addf %43, %46 : vector<32x8xf32>
    %cst_44 = arith.constant dense<0.000000e+00> : vector<32xf32>
    %48 = vector.multi_reduction <add>, %47, %cst_44 [1] : vector<32x8xf32> to vector<32xf32>
    %49 = vector.shape_cast %48 : vector<32xf32> to vector<32x1xf32>
    %cst_45 = arith.constant 8.000000e+00 : f32
    %50 = vector.broadcast %cst_45 : f32 to vector<32x1xf32>
    %51 = arith.divf %49, %50 : vector<32x1xf32>
    %c0_46 = arith.constant 0 : index
    %c0_47 = arith.constant 0 : index
    %c0_48 = arith.constant 0 : index
    %52 = vector.load %arg13[%c0_46, %c0_47, %c0_48] : memref<2x5x32xf32, #tpu.memory_space<vmem>>, vector<1x5x32xf32>
    %53 = vector.shape_cast %52 : vector<1x5x32xf32> to vector<5x32xf32>
    %cst_49 = arith.constant dense<0.000000e+00> : vector<5x1xf32>
    %54 = tpu.matmul %53, %51, %cst_49 {dimension_numbers = #tpu.dot_dimension_numbers<[1], [0], [0], [1], [0, 0, 1, 1], [], []>} : vector<5x32xf32>, vector<32x1xf32>, vector<5x1xf32> -> vector<5x1xf32>
    %55 = arith.addf %11, %54 : vector<5x1xf32>
    %c0_50 = arith.constant 0 : index
    %c0_51 = arith.constant 0 : index
    %56 = vector.load %arg22[%c0_50, %c0_51] : memref<4x16xf32, #tpu.memory_space<vmem>>, vector<2x16xf32>
    tpu.vector_store %arg22[%c0_50, %c0_51], %38 {strides = array<i32>} : memref<4x16xf32, #tpu.memory_space<vmem>>, vector<2x16xf32>,
    %cst_52 = arith.constant 0.000000e+00 : f32
    %57 = vector.broadcast %cst_52 : f32 to vector<32x8xf32>
    %58 = arith.cmpf ogt, %47, %57 : vector<32x8xf32>
    %cst_53 = arith.constant 2.000000e-01 : f32
    %59 = vector.broadcast %cst_53 : f32 to vector<32x8xf32>
    %60 = arith.mulf %59, %47 : vector<32x8xf32>
    %61 = arith.select %58, %47, %60 : vector<32x8xi1>, vector<32x8xf32>
    %c1 = arith.constant 1 : index
    %c0_54 = arith.constant 0 : index
    %c0_55 = arith.constant 0 : index
    %62 = vector.load %arg7[%c1, %c0_54, %c0_55] : memref<2x64x32xf32, #tpu.memory_space<vmem>>, vector<1x64x32xf32>
    %63 = vector.shape_cast %62 : vector<1x64x32xf32> to vector<64x32xf32>
    %cst_56 = arith.constant dense<0.000000e+00> : vector<64x8xf32>
    %64 = tpu.matmul %63, %61, %cst_56 {dimension_numbers = #tpu.dot_dimension_numbers<[1], [0], [0], [1], [0, 0, 1, 1], [], []>} : vector<64x32xf32>, vector<32x8xf32>, vector<64x8xf32> -> vector<64x8xf32>
    %c1_57 = arith.constant 1 : index
    %c0_58 = arith.constant 0 : index
    %c0_59 = arith.constant 0 : index
    %65 = vector.load %arg8[%c1_57, %c0_58, %c0_59] : memref<2x2x64xf32, #tpu.memory_space<vmem>>, vector<1x2x64xf32>
    %66 = vector.shape_cast %65 : vector<1x2x64xf32> to vector<2x64xf32>
    %cst_60 = arith.constant dense<0.000000e+00> : vector<2x8xf32>
    %67 = tpu.matmul %66, %64, %cst_60 {dimension_numbers = #tpu.dot_dimension_numbers<[1], [0], [0], [1], [0, 0, 1, 1], [], []>} : vector<2x64xf32>, vector<64x8xf32>, vector<2x8xf32> -> vector<2x8xf32>
    %c1_61 = arith.constant 1 : index
    %c0_62 = arith.constant 0 : index
    %c0_63 = arith.constant 0 : index
    %68 = vector.load %arg9[%c1_61, %c0_62, %c0_63] : memref<2x2x64xf32, #tpu.memory_space<vmem>>, vector<1x2x64xf32>
    %69 = vector.shape_cast %68 : vector<1x2x64xf32> to vector<2x64xf32>
    %cst_64 = arith.constant dense<0.000000e+00> : vector<2x8xf32>
    %70 = tpu.matmul %69, %64, %cst_64 {dimension_numbers = #tpu.dot_dimension_numbers<[1], [0], [0], [1], [0, 0, 1, 1], [], []>} : vector<2x64xf32>, vector<64x8xf32>, vector<2x8xf32> -> vector<2x8xf32>
    %cst_65 = arith.constant dense<0.000000e+00> : vector<2x16xf32>
    %71 = tpu.matmul %67, %0, %cst_65 {dimension_numbers = #tpu.dot_dimension_numbers<[1], [0], [0], [1], [0, 0, 1, 1], [], []>} : vector<2x8xf32>, vector<8x16xf32>, vector<2x16xf32> -> vector<2x16xf32>
    %cst_66 = arith.constant dense<0.000000e+00> : vector<2x16xf32>
    %72 = tpu.matmul %70, %2, %cst_66 {dimension_numbers = #tpu.dot_dimension_numbers<[1], [0], [0], [1], [0, 0, 1, 1], [], []>} : vector<2x8xf32>, vector<8x16xf32>, vector<2x16xf32> -> vector<2x16xf32>
    %73 = arith.addf %71, %72 : vector<2x16xf32>
    %cst_67 = arith.constant 0.000000e+00 : f32
    %74 = vector.broadcast %cst_67 : f32 to vector<2x16xf32>
    %75 = arith.cmpf ogt, %73, %74 : vector<2x16xf32>
    %cst_68 = arith.constant 2.000000e-01 : f32
    %76 = vector.broadcast %cst_68 : f32 to vector<2x16xf32>
    %77 = arith.mulf %76, %73 : vector<2x16xf32>
    %78 = arith.select %75, %73, %77 : vector<2x16xi1>, vector<2x16xf32>
    %cst_69 = arith.constant dense<0xFF800000> : vector<2xf32>
    %79 = vector.multi_reduction <maximumf>, %78, %cst_69 [1] : vector<2x16xf32> to vector<2xf32>
    %80 = vector.shape_cast %79 : vector<2xf32> to vector<2x1xf32>
    %81 = vector.broadcast %80 : vector<2x1xf32> to vector<2x16xf32>
    %82 = arith.subf %78, %81 : vector<2x16xf32>
    %83 = math.exp %82 : vector<2x16xf32>
    %cst_70 = arith.constant dense<0.000000e+00> : vector<2x8xf32>
    %84 = tpu.matmul %83, %1, %cst_70 {dimension_numbers = #tpu.dot_dimension_numbers<[1], [0], [0], [1], [0, 0, 1, 1], [], []>} : vector<2x16xf32>, vector<16x8xf32>, vector<2x8xf32> -> vector<2x8xf32>
    %cst_71 = arith.constant dense<0.000000e+00> : vector<2x16xf32>
    %85 = tpu.matmul %84, %2, %cst_71 {dimension_numbers = #tpu.dot_dimension_numbers<[1], [0], [0], [1], [0, 0, 1, 1], [], []>} : vector<2x8xf32>, vector<8x16xf32>, vector<2x16xf32> -> vector<2x16xf32>
    %cst_72 = arith.constant 1.000000e-16 : f32
    %86 = vector.broadcast %cst_72 : f32 to vector<2x16xf32>
    %87 = arith.addf %85, %86 : vector<2x16xf32>
    %88 = arith.divf %83, %87 : vector<2x16xf32>
    %cst_73 = arith.constant dense<0.000000e+00> : vector<64x16xf32>
    %89 = tpu.matmul %64, %0, %cst_73 {dimension_numbers = #tpu.dot_dimension_numbers<[1], [0], [0], [1], [0, 0, 1, 1], [], []>} : vector<64x8xf32>, vector<8x16xf32>, vector<64x16xf32> -> vector<64x16xf32>
    %cst_74 = arith.constant dense<0.000000e+00> : vector<64x16xf32>
    %90 = tpu.matmul %3, %88, %cst_74 {dimension_numbers = #tpu.dot_dimension_numbers<[1], [0], [0], [1], [0, 0, 1, 1], [], []>} : vector<64x2xf32>, vector<2x16xf32>, vector<64x16xf32> -> vector<64x16xf32>
    %91 = arith.mulf %90, %89 : vector<64x16xf32>
    %cst_75 = arith.constant dense<0.000000e+00> : vector<64x8xf32>
    %92 = tpu.matmul %91, %1, %cst_75 {dimension_numbers = #tpu.dot_dimension_numbers<[1], [0], [0], [1], [0, 0, 1, 1], [], []>} : vector<64x16xf32>, vector<16x8xf32>, vector<64x8xf32> -> vector<64x8xf32>
    %cst_76 = arith.constant dense<0.000000e+00> : vector<32x8xf32>
    %93 = tpu.matmul %4, %92, %cst_76 {dimension_numbers = #tpu.dot_dimension_numbers<[1], [0], [0], [1], [0, 0, 1, 1], [], []>} : vector<32x64xf32>, vector<64x8xf32>, vector<32x8xf32> -> vector<32x8xf32>
    %c1_77 = arith.constant 1 : index
    %c0_78 = arith.constant 0 : index
    %c0_79 = arith.constant 0 : index
    %94 = vector.load %arg12[%c1_77, %c0_78, %c0_79] : memref<2x32x1xf32, #tpu.memory_space<vmem>>, vector<1x32x1xf32>
    %95 = vector.shape_cast %94 : vector<1x32x1xf32> to vector<32x1xf32>
    %96 = vector.broadcast %95 : vector<32x1xf32> to vector<32x8xf32>
    %97 = arith.addf %93, %96 : vector<32x8xf32>
    %cst_80 = arith.constant dense<0.000000e+00> : vector<32xf32>
    %98 = vector.multi_reduction <add>, %97, %cst_80 [1] : vector<32x8xf32> to vector<32xf32>
    %99 = vector.shape_cast %98 : vector<32xf32> to vector<32x1xf32>
    %cst_81 = arith.constant 8.000000e+00 : f32
    %100 = vector.broadcast %cst_81 : f32 to vector<32x1xf32>
    %101 = arith.divf %99, %100 : vector<32x1xf32>
    %c1_82 = arith.constant 1 : index
    %c0_83 = arith.constant 0 : index
    %c0_84 = arith.constant 0 : index
    %102 = vector.load %arg13[%c1_82, %c0_83, %c0_84] : memref<2x5x32xf32, #tpu.memory_space<vmem>>, vector<1x5x32xf32>
    %103 = vector.shape_cast %102 : vector<1x5x32xf32> to vector<5x32xf32>
    %cst_85 = arith.constant dense<0.000000e+00> : vector<5x1xf32>
    %104 = tpu.matmul %103, %101, %cst_85 {dimension_numbers = #tpu.dot_dimension_numbers<[1], [0], [0], [1], [0, 0, 1, 1], [], []>} : vector<5x32xf32>, vector<32x1xf32>, vector<5x1xf32> -> vector<5x1xf32>
    %105 = arith.addf %55, %104 : vector<5x1xf32>
    %c2 = arith.constant 2 : index
    %c0_86 = arith.constant 0 : index
    %106 = vector.load %arg22[%c2, %c0_86] : memref<4x16xf32, #tpu.memory_space<vmem>>, vector<2x16xf32>
    tpu.vector_store %arg22[%c2, %c0_86], %88 {strides = array<i32>} : memref<4x16xf32, #tpu.memory_space<vmem>>, vector<2x16xf32>,
    %c0_87 = arith.constant 0 : index
    %c0_88 = arith.constant 0 : index
    %107 = vector.load %arg15[%c0_87, %c0_88] : memref<32x5xf32, #tpu.memory_space<vmem>>, vector<32x5xf32>
    %cst_89 = arith.constant dense<0.000000e+00> : vector<32x1xf32>
    %108 = tpu.matmul %107, %105, %cst_89 {dimension_numbers = #tpu.dot_dimension_numbers<[1], [0], [0], [1], [0, 0, 1, 1], [], []>} : vector<32x5xf32>, vector<5x1xf32>, vector<32x1xf32> -> vector<32x1xf32>
    %c0_90 = arith.constant 0 : index
    %c0_91 = arith.constant 0 : index
    %109 = vector.load %arg16[%c0_90, %c0_91] : memref<32x1xf32, #tpu.memory_space<vmem>>, vector<32x1xf32>
    %110 = arith.addf %108, %109 : vector<32x1xf32>
    %cst_92 = arith.constant 0.000000e+00 : f32
    %111 = vector.broadcast %cst_92 : f32 to vector<32x1xf32>
    %112 = arith.maximumf %110, %111 : vector<32x1xf32>
    %c0_93 = arith.constant 0 : index
    %c0_94 = arith.constant 0 : index
    %113 = vector.load %arg19[%c0_93, %c0_94] : memref<1x32xf32, #tpu.memory_space<vmem>>, vector<1x32xf32>
    %cst_95 = arith.constant dense<0.000000e+00> : vector<1x1xf32>
    %114 = tpu.matmul %113, %112, %cst_95 {dimension_numbers = #tpu.dot_dimension_numbers<[1], [0], [0], [1], [0, 0, 1, 1], [], []>} : vector<1x32xf32>, vector<32x1xf32>, vector<1x1xf32> -> vector<1x1xf32>
    %c0_96 = arith.constant 0 : index
    %c0_97 = arith.constant 0 : index
    %115 = vector.load %arg20[%c0_96, %c0_97] : memref<1x1xf32, #tpu.memory_space<vmem>>, vector<1x1xf32>
    %116 = arith.addf %114, %115 : vector<1x1xf32>
    %c0_98 = arith.constant 0 : index
    %c0_99 = arith.constant 0 : index
    %117 = vector.load %arg17[%c0_98, %c0_99] : memref<32x4xf32, #tpu.memory_space<vmem>>, vector<32x4xf32>
    %c0_100 = arith.constant 0 : index
    %c0_101 = arith.constant 0 : index
    %118 = vector.load %arg22[%c0_100, %c0_101] : memref<4x16xf32, #tpu.memory_space<vmem>>, vector<4x16xf32>
    %cst_102 = arith.constant dense<0.000000e+00> : vector<32x16xf32>
    %119 = tpu.matmul %117, %118, %cst_102 {dimension_numbers = #tpu.dot_dimension_numbers<[1], [0], [0], [1], [0, 0, 1, 1], [], []>} : vector<32x4xf32>, vector<4x16xf32>, vector<32x16xf32> -> vector<32x16xf32>
    %c0_103 = arith.constant 0 : index
    %c0_104 = arith.constant 0 : index
    %120 = vector.load %arg16[%c0_103, %c0_104] : memref<32x1xf32, #tpu.memory_space<vmem>>, vector<32x1xf32>
    %121 = vector.broadcast %120 : vector<32x1xf32> to vector<32x16xf32>
    %122 = arith.addf %119, %121 : vector<32x16xf32>
    %c0_105 = arith.constant 0 : index
    %c0_106 = arith.constant 0 : index
    %123 = vector.load %arg18[%c0_105, %c0_106] : memref<32x1xf32, #tpu.memory_space<vmem>>, vector<32x1xf32>
    %c0_107 = arith.constant 0 : index
    %c0_108 = arith.constant 0 : index
    %124 = vector.load %arg19[%c0_107, %c0_108] : memref<1x32xf32, #tpu.memory_space<vmem>>, vector<1x32xf32>
    %c0_109 = arith.constant 0 : index
    %c0_110 = arith.constant 0 : index
    %125 = vector.load %arg20[%c0_109, %c0_110] : memref<1x1xf32, #tpu.memory_space<vmem>>, vector<1x1xf32>
    %c0_111 = arith.constant 0 : index
    %c0_112 = arith.constant 0 : index
    %126 = vector.load %arg4[%c0_111, %c0_112] : memref<2x16xf32, #tpu.memory_space<vmem>>, vector<2x16xf32>
    %127 = vector.extract_strided_slice %126 {offsets = [0, 0], sizes = [1, 16], strides = [1, 1]} : vector<2x16xf32> to vector<1x16xf32>
    %128 = vector.broadcast %123 : vector<32x1xf32> to vector<32x16xf32>
    %129 = vector.broadcast %127 : vector<1x16xf32> to vector<32x16xf32>
    %130 = arith.mulf %128, %129 : vector<32x16xf32>
    %131 = arith.addf %122, %130 : vector<32x16xf32>
    %cst_113 = arith.constant 0.000000e+00 : f32
    %132 = vector.broadcast %cst_113 : f32 to vector<32x16xf32>
    %133 = arith.maximumf %131, %132 : vector<32x16xf32>
    %cst_114 = arith.constant dense<0.000000e+00> : vector<1x16xf32>
    %134 = tpu.matmul %124, %133, %cst_114 {dimension_numbers = #tpu.dot_dimension_numbers<[1], [0], [0], [1], [0, 0, 1, 1], [], []>} : vector<1x32xf32>, vector<32x16xf32>, vector<1x16xf32> -> vector<1x16xf32>
    %135 = vector.broadcast %125 : vector<1x1xf32> to vector<1x16xf32>
    %136 = arith.addf %134, %135 : vector<1x16xf32>
    %137 = tpu.concatenate %116, %136 in 1 : vector<1x1xf32>, vector<1x16xf32> -> vector<1x17xf32>
    %138 = vector.extract_strided_slice %126 {offsets = [1, 0], sizes = [1, 16], strides = [1, 1]} : vector<2x16xf32> to vector<1x16xf32>
    %139 = vector.broadcast %123 : vector<32x1xf32> to vector<32x16xf32>
    %140 = vector.broadcast %138 : vector<1x16xf32> to vector<32x16xf32>
    %141 = arith.mulf %139, %140 : vector<32x16xf32>
    %142 = arith.addf %122, %141 : vector<32x16xf32>
    %cst_115 = arith.constant 0.000000e+00 : f32
    %143 = vector.broadcast %cst_115 : f32 to vector<32x16xf32>
    %144 = arith.maximumf %142, %143 : vector<32x16xf32>
    %cst_116 = arith.constant dense<0.000000e+00> : vector<1x16xf32>
    %145 = tpu.matmul %124, %144, %cst_116 {dimension_numbers = #tpu.dot_dimension_numbers<[1], [0], [0], [1], [0, 0, 1, 1], [], []>} : vector<1x32xf32>, vector<32x16xf32>, vector<1x16xf32> -> vector<1x16xf32>
    %146 = vector.broadcast %125 : vector<1x1xf32> to vector<1x16xf32>
    %147 = arith.addf %145, %146 : vector<1x16xf32>
    %148 = tpu.concatenate %116, %147 in 1 : vector<1x1xf32>, vector<1x16xf32> -> vector<1x17xf32>
    %149 = tpu.concatenate %137, %148 in 0 : vector<1x17xf32>, vector<1x17xf32> -> vector<2x17xf32>
    %c0_117 = arith.constant 0 : index
    %c0_118 = arith.constant 0 : index
    %150 = vector.load %arg21[%c0_117, %c0_118] : memref<2x17xf32, #tpu.memory_space<vmem>>, vector<2x17xf32>
    tpu.vector_store %arg21[%c0_117, %c0_118], %149 {strides = array<i32>} : memref<2x17xf32, #tpu.memory_space<vmem>>, vector<2x17xf32>,
    return
  }
}

</mosaic_0001>

<llo_original>
// kernel: tpu_custom_call.1
$region0: #{tpu_custom_call.1}
  #allocation0 [shape = 'u32[]', space=smem, size = 0x4, offset = 0x4, fixed_abs, tag = 'smem constant byte address 0x4 - core index']
  #allocation1 [shape = 'u32[144,128]{1,0:T(1,128)}', space=vmem, size = 0x12000, scoped, tag = 'internal scratch']
  #allocation2 [shape = 'f32[4,16]{1,0:T(4,128)}', space=vmem, size = 0x800, scoped, tag = 'scratch operand']
  #allocation3 [shape = 'f32[1,1]{1,0:T(1,128)S(1)}', space=vmem, size = 0x200, scoped, tag = 'scoped memory for tpu_custom_call.1']
  %s0 = inlined_call_operand.vmem [shape: f32[16,8], index: 0, kind: input, shape index: {}]
  %s1 = inlined_call_operand.vmem [shape: f32[8,16], index: 1, kind: input, shape index: {}]
  %s2 = inlined_call_operand.vmem [shape: f32[16,8], index: 2, kind: input, shape index: {}]
  %s3 = inlined_call_operand.vmem [shape: f32[8,16], index: 3, kind: input, shape index: {}]
  %s4 = inlined_call_operand.vmem [shape: f32[2,16], index: 4, kind: input, shape index: {}]
  %s5 = inlined_call_operand.vmem [shape: f32[32,16], index: 5, kind: input, shape index: {}]
  %s6 = inlined_call_operand.vmem [shape: f32[32,1], index: 6, kind: input, shape index: {}]
  %s7 = inlined_call_operand.vmem [shape: f32[2,64,32], index: 7, kind: input, shape index: {}]
  %s8 = inlined_call_operand.vmem [shape: f32[2,2,64], index: 8, kind: input, shape index: {}]
  %s9 = inlined_call_operand.vmem [shape: f32[2,2,64], index: 9, kind: input, shape index: {}]
  %s10 = inlined_call_operand.vmem [shape: f32[64,2], index: 10, kind: input, shape index: {}]
  %s11 = inlined_call_operand.vmem [shape: f32[32,64], index: 11, kind: input, shape index: {}]
  %s12 = inlined_call_operand.vmem [shape: f32[2,32,1], index: 12, kind: input, shape index: {}]
  %s13 = inlined_call_operand.vmem [shape: f32[2,5,32], index: 13, kind: input, shape index: {}]
  %s14 = inlined_call_operand.vmem [shape: f32[5,1], index: 14, kind: input, shape index: {}]
  %s15 = inlined_call_operand.vmem [shape: f32[32,5], index: 15, kind: input, shape index: {}]
  %s16 = inlined_call_operand.vmem [shape: f32[32,1], index: 16, kind: input, shape index: {}]
  %s17 = inlined_call_operand.vmem [shape: f32[32,4], index: 17, kind: input, shape index: {}]
  %s18 = inlined_call_operand.vmem [shape: f32[32,1], index: 18, kind: input, shape index: {}]
  %s19 = inlined_call_operand.vmem [shape: f32[1,32], index: 19, kind: input, shape index: {}]
  %s20 = inlined_call_operand.<no memory space> [shape: f32[1,1], index: 20, kind: input, shape index: {}]
  %s21 = inlined_call_operand.hbm [shape: f32[2,17], index: 21, kind: output, shape index: {}]
  %s22 = sld [smem:[#allocation0]]
  $region94: #{tpu_custom_call.1} parent=0
    _
  %s24 = ssub.s32 1, %s22
  %s25 = scalar_select 0, %s24, %s22
  %v26 = vstv %s20
  %27 = vst [vmem:[#allocation3] sm:$0x1] %v26
  $region1: #{tpu_custom_call.1} parent=0
    #allocation4 [shape = 'u8[1024]{0}', space=vmem, size = 0x400, scoped, tag = 'output window, operand 0, single buffered']
    #allocation5 [shape = 's32[1]{0}', space=sflag, size = 0x4, scoped, tag = 'scoped memory for tpu_custom_call.1']
    %28 = vsyncpa [#allocation5], 0
    // Predicated region
    $region2: #{tpu_custom_call.1} parent=1 // pred_check
      _
    $region3: #{tpu_custom_call.1} parent=1 // pred_check_branch
      %30 = sbr.rel (0) target = $region5
    $region4: #{tpu_custom_call.1} parent=1 // pred_region
      _
    $region5: #{tpu_custom_call.1} parent=1 // pred_fallthru
      _
    // Predicated region
    $region6: #{tpu_custom_call.1} parent=1 // pred_check
      _
    $region7: #{tpu_custom_call.1} parent=1 // pred_check_branch
      %32 = sbr.rel (0) target = $region9
    $region8: #{tpu_custom_call.1} parent=1 // pred_region
      _
    $region9: #{tpu_custom_call.1} parent=1 // pred_fallthru
      _
    // Predicated region
    $region10: #{tpu_custom_call.1} parent=1 // pred_check
      _
    $region11: #{tpu_custom_call.1} parent=1 // pred_check_branch
      %34 = sbr.rel (0) target = $region13
    $region12: #{tpu_custom_call.1} parent=1 // pred_region
      _
    $region13: #{tpu_custom_call.1} parent=1 // pred_fallthru
      _
    // Predicated region
    $region14: #{tpu_custom_call.1} parent=1 // pred_check
      _
    $region15: #{tpu_custom_call.1} parent=1 // pred_check_branch
      %36 = sbr.rel (0) target = $region17
    $region16: #{tpu_custom_call.1} parent=1 // pred_region
      _
    $region17: #{tpu_custom_call.1} parent=1 // pred_fallthru
      _
    // Predicated region
    $region18: #{tpu_custom_call.1} parent=1 // pred_check
      _
    $region19: #{tpu_custom_call.1} parent=1 // pred_check_branch
      %38 = sbr.rel (0) target = $region21
    $region20: #{tpu_custom_call.1} parent=1 // pred_region
      _
    $region21: #{tpu_custom_call.1} parent=1 // pred_fallthru
      _
    // Predicated region
    $region22: #{tpu_custom_call.1} parent=1 // pred_check
      _
    $region23: #{tpu_custom_call.1} parent=1 // pred_check_branch
      %40 = sbr.rel (0) target = $region25
    $region24: #{tpu_custom_call.1} parent=1 // pred_region
      _
    $region25: #{tpu_custom_call.1} parent=1 // pred_fallthru
      _
    // Predicated region
    $region26: #{tpu_custom_call.1} parent=1 // pred_check
      _
    $region27: #{tpu_custom_call.1} parent=1 // pred_check_branch
      %42 = sbr.rel (0) target = $region29
    $region28: #{tpu_custom_call.1} parent=1 // pred_region
      _
    $region29: #{tpu_custom_call.1} parent=1 // pred_fallthru
      _
    // Predicated region
    $region30: #{tpu_custom_call.1} parent=1 // pred_check
      _
    $region31: #{tpu_custom_call.1} parent=1 // pred_check_branch
      %44 = sbr.rel (0) target = $region33
    $region32: #{tpu_custom_call.1} parent=1 // pred_region
      _
    $region33: #{tpu_custom_call.1} parent=1 // pred_fallthru
      _
    // Predicated region
    $region34: #{tpu_custom_call.1} parent=1 // pred_check
      _
    $region35: #{tpu_custom_call.1} parent=1 // pred_check_branch
      %46 = sbr.rel (0) target = $region37
    $region36: #{tpu_custom_call.1} parent=1 // pred_region
      _
    $region37: #{tpu_custom_call.1} parent=1 // pred_fallthru
      _
    // Predicated region
    $region38: #{tpu_custom_call.1} parent=1 // pred_check
      _
    $region39: #{tpu_custom_call.1} parent=1 // pred_check_branch
      %48 = sbr.rel (0) target = $region41
    $region40: #{tpu_custom_call.1} parent=1 // pred_region
      _
    $region41: #{tpu_custom_call.1} parent=1 // pred_fallthru
      _
    // Predicated region
    $region42: #{tpu_custom_call.1} parent=1 // pred_check
      _
    $region43: #{tpu_custom_call.1} parent=1 // pred_check_branch
      %50 = sbr.rel (0) target = $region45
    $region44: #{tpu_custom_call.1} parent=1 // pred_region
      _
    $region45: #{tpu_custom_call.1} parent=1 // pred_fallthru
      _
    // Predicated region
    $region46: #{tpu_custom_call.1} parent=1 // pred_check
      _
    $region47: #{tpu_custom_call.1} parent=1 // pred_check_branch
      %52 = sbr.rel (0) target = $region49
    $region48: #{tpu_custom_call.1} parent=1 // pred_region
      _
    $region49: #{tpu_custom_call.1} parent=1 // pred_fallthru
      _
    // Predicated region
    $region50: #{tpu_custom_call.1} parent=1 // pred_check
      _
    $region51: #{tpu_custom_call.1} parent=1 // pred_check_branch
      %54 = sbr.rel (0) target = $region53
    $region52: #{tpu_custom_call.1} parent=1 // pred_region
      _
    $region53: #{tpu_custom_call.1} parent=1 // pred_fallthru
      _
    // Predicated region
    $region54: #{tpu_custom_call.1} parent=1 // pred_check
      _
    $region55: #{tpu_custom_call.1} parent=1 // pred_check_branch
      %56 = sbr.rel (0) target = $region57
    $region56: #{tpu_custom_call.1} parent=1 // pred_region
      _
    $region57: #{tpu_custom_call.1} parent=1 // pred_fallthru
      _
    // Predicated region
    $region58: #{tpu_custom_call.1} parent=1 // pred_check
      _
    $region59: #{tpu_custom_call.1} parent=1 // pred_check_branch
      %58 = sbr.rel (0) target = $region61
    $region60: #{tpu_custom_call.1} parent=1 // pred_region
      _
    $region61: #{tpu_custom_call.1} parent=1 // pred_fallthru
      _
    // Predicated region
    $region62: #{tpu_custom_call.1} parent=1 // pred_check
      _
    $region63: #{tpu_custom_call.1} parent=1 // pred_check_branch
      %60 = sbr.rel (0) target = $region65
    $region64: #{tpu_custom_call.1} parent=1 // pred_region
      _
    $region65: #{tpu_custom_call.1} parent=1 // pred_fallthru
      _
    // Predicated region
    $region66: #{tpu_custom_call.1} parent=1 // pred_check
      _
    $region67: #{tpu_custom_call.1} parent=1 // pred_check_branch
      %62 = sbr.rel (0) target = $region69
    $region68: #{tpu_custom_call.1} parent=1 // pred_region
      _
    $region69: #{tpu_custom_call.1} parent=1 // pred_fallthru
      _
    // Predicated region
    $region70: #{tpu_custom_call.1} parent=1 // pred_check
      _
    $region71: #{tpu_custom_call.1} parent=1 // pred_check_branch
      %64 = sbr.rel (0) target = $region73
    $region72: #{tpu_custom_call.1} parent=1 // pred_region
      _
    $region73: #{tpu_custom_call.1} parent=1 // pred_fallthru
      _
    // Predicated region
    $region74: #{tpu_custom_call.1} parent=1 // pred_check
      _
    $region75: #{tpu_custom_call.1} parent=1 // pred_check_branch
      %66 = sbr.rel (0) target = $region77
    $region76: #{tpu_custom_call.1} parent=1 // pred_region
      _
    $region77: #{tpu_custom_call.1} parent=1 // pred_fallthru
      _
    // Predicated region
    $region78: #{tpu_custom_call.1} parent=1 // pred_check
      _
    $region79: #{tpu_custom_call.1} parent=1 // pred_check_branch
      %68 = sbr.rel (0) target = $region81
    $region80: #{tpu_custom_call.1} parent=1 // pred_region
      _
    $region81: #{tpu_custom_call.1} parent=1 // pred_fallthru
      _
    // Predicated region
    $region82: #{tpu_custom_call.1} parent=1 // pred_check
      _
    $region83: #{tpu_custom_call.1} parent=1 // pred_check_branch
      %70 = sbr.rel (0) target = $region85
    $region84: #{tpu_custom_call.1} parent=1 // pred_region
      _
    $region85: #{tpu_custom_call.1} parent=1 // pred_fallthru
      _
    %v71 = vld [vmem:[%s1] sm:$0xff]
    %v72 = vld [vmem:[%s2] sm:$0xff]
    %v73 = vld [vmem:[%s2 + $0x8] sm:$0xff]
    %v74 = vld [vmem:[%s3] sm:$0xff]
    %v75 = vld [vmem:[%s10] sm:$0xff]
    %v76 = vld [vmem:[%s10 + $0x8] sm:$0xff]
    %v77 = vld [vmem:[%s10 + $0x10] sm:$0xff]
    %v78 = vld [vmem:[%s10 + $0x18] sm:$0xff]
    %v79 = vld [vmem:[%s10 + $0x20] sm:$0xff]
    %v80 = vld [vmem:[%s10 + $0x28] sm:$0xff]
    %v81 = vld [vmem:[%s10 + $0x30] sm:$0xff]
    %v82 = vld [vmem:[%s10 + $0x38] sm:$0xff]
    %v83 = vld [vmem:[%s11] sm:$0xff]
    %v84 = vld [vmem:[%s11 + $0x8] sm:$0xff]
    %v85 = vld [vmem:[%s11 + $0x10] sm:$0xff]
    %v86 = vld [vmem:[%s11 + $0x18] sm:$0xff]
    %v87 = vld [vmem:[%s5] sm:$0xff]
    %v88 = vld [vmem:[%s5 + $0x8] sm:$0xff]
    %v89 = vld [vmem:[%s5 + $0x10] sm:$0xff]
    %v90 = vld [vmem:[%s5 + $0x18] sm:$0xff]
    %v91 = vld [vmem:[%s0] sm:$0xff]
    %v92 = vld [vmem:[%s0 + $0x8] sm:$0xff]
    %v93 = vld [vmem:[%s6] sm:$0xff]
    %v94 = vld [vmem:[%s6 + $0x8] sm:$0xff]
    %v95 = vld [vmem:[%s6 + $0x10] sm:$0xff]
    %v96 = vld [vmem:[%s6 + $0x18] sm:$0xff]
    %98 = vset.pattern.permute.xlu0 0
    %99 = vperm.xlu0 %98, %v93
    %v100 = vpop.permute.xlu0 %99
    %103 = vset.pattern.permute.xlu0 0
    %104 = vperm.xlu0 %103, %v94
    %v105 = vpop.permute.xlu0 %104
    %108 = vset.pattern.permute.xlu0 0
    %109 = vperm.xlu0 %108, %v95
    %v110 = vpop.permute.xlu0 %109
    %113 = vset.pattern.permute.xlu0 0
    %114 = vperm.xlu0 %113, %v96
    %v115 = vpop.permute.xlu0 %114
    %vm117 = vcmask 130048
    %v119 = vsel %vm117, %v87, 0
    %v122 = vsel %vm117, %v88, 0
    %v125 = vsel %vm117, %v89, 0
    %v128 = vsel %vm117, %v90, 0
    %130 = vmatprep.subr.mxu0 0.0
    %131 = vmatpush1.msra.mxu0 %v91
    %132 = vmatprep.subr.mxu0 0.0
    %133 = vmatpush1.msra.mxu0 %v92
    %134 = vmatprep.subr.mxu0 0.0
    %135 = vmatpush1.msra.mxu0 0.0
    %136 = vmatprep.subr.mxu0 0.0
    %137 = vmatpush1.msra.mxu0 0.0
    %138 = vmatprep.subr.mxu0 0.0
    %139 = vmatpush1.msra.mxu0 0.0
    %140 = vmatprep.subr.mxu0 0.0
    %141 = vmatpush1.msra.mxu0 0.0
    %142 = vmatprep.subr.mxu0 0.0
    %143 = vmatpush1.msra.mxu0 0.0
    %144 = vmatprep.subr.mxu0 0.0
    %145 = vmatpush1.msra.mxu0 0.0
    %146 = vmatprep.subr.mxu0 0.0
    %147 = vmatpush1.msra.mxu0 0.0
    %148 = vmatprep.subr.mxu0 0.0
    %149 = vmatpush1.msra.mxu0 0.0
    %150 = vmatprep.subr.mxu0 0.0
    %151 = vmatpush1.msra.mxu0 0.0
    %152 = vmatprep.subr.mxu0 0.0
    %153 = vmatpush1.msra.mxu0 0.0
    %154 = vmatprep.subr.mxu0 0.0
    %155 = vmatpush1.msra.mxu0 0.0
    %156 = vmatprep.subr.mxu0 0.0
    %157 = vmatpush1.msra.mxu0 0.0
    %158 = vmatprep.subr.mxu0 0.0
    %159 = vmatpush1.msra.mxu0 0.0
    %160 = vmatprep.subr.mxu0 0.0
    %161 = vmatpush1.msra.mxu0 0.0
    %162 = vmatprep.subr.mxu0 0.0
    %163 = vmatpush1.msra.mxu0 0.0
    %164 = vmatprep.subr.mxu0 0.0
    %165 = vmatpush1.msra.mxu0 0.0
    %166 = vmatprep.subr.mxu0 0.0
    %167 = vmatpush1.msra.mxu0 0.0
    %168 = vmatprep.subr.mxu0 0.0
    %169 = vmatpush1.msra.mxu0 0.0
    %170 = vmatprep.subr.mxu0 0.0
    %171 = vmatpush1.msra.mxu0 0.0
    %172 = vmatprep.subr.mxu0 0.0
    %173 = vmatpush1.msra.mxu0 0.0
    %174 = vmatprep.subr.mxu0 0.0
    %175 = vmatpush1.msra.mxu0 0.0
    %176 = vmatprep.subr.mxu0 0.0
    %177 = vmatpush1.msra.mxu0 0.0
    %178 = vmatprep.subr.mxu0 0.0
    %179 = vmatpush1.msra.mxu0 0.0
    %180 = vmatprep.subr.mxu0 0.0
    %181 = vmatpush1.msra.mxu0 0.0
    %182 = vmatprep.subr.mxu0 0.0
    %183 = vmatpush1.msra.mxu0 0.0
    %184 = vmatprep.subr.mxu0 0.0
    %185 = vmatpush1.msra.mxu0 0.0
    %186 = vmatprep.subr.mxu0 0.0
    %187 = vmatpush1.msra.mxu0 0.0
    %188 = vmatprep.subr.mxu0 0.0
    %189 = vmatpush1.msra.mxu0 0.0
    %190 = vmatprep.subr.mxu0 0.0
    %191 = vmatpush1.msra.mxu0 0.0
    %192 = vmatprep.subr.mxu0 0.0
    %193 = vmatpush1.msra.mxu0 0.0
    %194 = vmatprep.mubr.f32.mxu0 0.0
    %195 = vmatmul.mubr.f32.gmra.mrb[0].mxu0 %v119
    %v196 = vpop.f32.mrb[0].mxu0
    %v197 = vadd.f32 %v100, %v196
    %v198 = vpop.f32.mrb[0].mxu0
    %199 = vmatprep.mubr.f32.mxu0 0.0
    %200 = vmatmul.mubr.f32.gmra.mrb[0].mxu0 %v122
    %v201 = vpop.f32.mrb[0].mxu0
    %v202 = vadd.f32 %v105, %v201
    %v203 = vpop.f32.mrb[0].mxu0
    %204 = vmatprep.mubr.f32.mxu0 0.0
    %205 = vmatmul.mubr.f32.gmra.mrb[0].mxu0 %v125
    %v206 = vpop.f32.mrb[0].mxu0
    %v207 = vadd.f32 %v110, %v206
    %v208 = vpop.f32.mrb[0].mxu0
    %209 = vmatprep.mubr.f32.mxu0 0.0
    %210 = vmatmul.mubr.f32.gmra.mrb[0].mxu0 %v128
    %v211 = vpop.f32.mrb[0].mxu0
    %v212 = vadd.f32 %v115, %v211
    %v213 = vpop.f32.mrb[0].mxu0
    %214 = vdwg.mxu0
    %v215 = vld [vmem:[%s14] sm:$0x1f]
    %v216 = vld [vmem:[%s7] sm:$0xff]
    %v217 = vld [vmem:[%s7 + $0x8] sm:$0xff]
    %v218 = vld [vmem:[%s7 + $0x10] sm:$0xff]
    %v219 = vld [vmem:[%s7 + $0x18] sm:$0xff]
    %v220 = vld [vmem:[%s7 + $0x20] sm:$0xff]
    %v221 = vld [vmem:[%s7 + $0x28] sm:$0xff]
    %v222 = vld [vmem:[%s7 + $0x30] sm:$0xff]
    %v223 = vld [vmem:[%s7 + $0x38] sm:$0xff]
    %vm224 = vcmask 261120
    %v226 = vsel %vm224, %v216, 0
    %v229 = vsel %vm224, %v217, 0
    %v232 = vsel %vm224, %v218, 0
    %v235 = vsel %vm224, %v219, 0
    %v238 = vsel %vm224, %v220, 0
    %v241 = vsel %vm224, %v221, 0
    %v244 = vsel %vm224, %v222, 0
    %v247 = vsel %vm224, %v223, 0
    %249 = vmatprep.subr.mxu0 0.0
    %250 = vmatpush1.msra.mxu0 %v197
    %251 = vmatprep.subr.mxu0 0.0
    %252 = vmatpush1.msra.mxu0 %v202
    %253 = vmatprep.subr.mxu0 0.0
    %254 = vmatpush1.msra.mxu0 %v207
    %255 = vmatprep.subr.mxu0 0.0
    %256 = vmatpush1.msra.mxu0 %v212
    %257 = vmatprep.subr.mxu0 0.0
    %258 = vmatpush1.msra.mxu0 0.0
    %259 = vmatprep.subr.mxu0 0.0
    %260 = vmatpush1.msra.mxu0 0.0
    %261 = vmatprep.subr.mxu0 0.0
    %262 = vmatpush1.msra.mxu0 0.0
    %263 = vmatprep.subr.mxu0 0.0
    %264 = vmatpush1.msra.mxu0 0.0
    %265 = vmatprep.subr.mxu0 0.0
    %266 = vmatpush1.msra.mxu0 0.0
    %267 = vmatprep.subr.mxu0 0.0
    %268 = vmatpush1.msra.mxu0 0.0
    %269 = vmatprep.subr.mxu0 0.0
    %270 = vmatpush1.msra.mxu0 0.0
    %271 = vmatprep.subr.mxu0 0.0
    %272 = vmatpush1.msra.mxu0 0.0
    %273 = vmatprep.subr.mxu0 0.0
    %274 = vmatpush1.msra.mxu0 0.0
    %275 = vmatprep.subr.mxu0 0.0
    %276 = vmatpush1.msra.mxu0 0.0
    %277 = vmatprep.subr.mxu0 0.0
    %278 = vmatpush1.msra.mxu0 0.0
    %279 = vmatprep.subr.mxu0 0.0
    %280 = vmatpush1.msra.mxu0 0.0
    %281 = vmatprep.subr.mxu0 0.0
    %282 = vmatpush1.msra.mxu0 0.0
    %283 = vmatprep.subr.mxu0 0.0
    %284 = vmatpush1.msra.mxu0 0.0
    %285 = vmatprep.subr.mxu0 0.0
    %286 = vmatpush1.msra.mxu0 0.0
    %287 = vmatprep.subr.mxu0 0.0
    %288 = vmatpush1.msra.mxu0 0.0
    %289 = vmatprep.subr.mxu0 0.0
    %290 = vmatpush1.msra.mxu0 0.0
    %291 = vmatprep.subr.mxu0 0.0
    %292 = vmatpush1.msra.mxu0 0.0
    %293 = vmatprep.subr.mxu0 0.0
    %294 = vmatpush1.msra.mxu0 0.0
    %295 = vmatprep.subr.mxu0 0.0
    %296 = vmatpush1.msra.mxu0 0.0
    %297 = vmatprep.subr.mxu0 0.0
    %298 = vmatpush1.msra.mxu0 0.0
    %299 = vmatprep.subr.mxu0 0.0
    %300 = vmatpush1.msra.mxu0 0.0
    %301 = vmatprep.subr.mxu0 0.0
    %302 = vmatpush1.msra.mxu0 0.0
    %303 = vmatprep.subr.mxu0 0.0
    %304 = vmatpush1.msra.mxu0 0.0
    %305 = vmatprep.subr.mxu0 0.0
    %306 = vmatpush1.msra.mxu0 0.0
    %307 = vmatprep.subr.mxu0 0.0
    %308 = vmatpush1.msra.mxu0 0.0
    %309 = vmatprep.subr.mxu0 0.0
    %310 = vmatpush1.msra.mxu0 0.0
    %311 = vmatprep.subr.mxu0 0.0
    %312 = vmatpush1.msra.mxu0 0.0
    %313 = vmatprep.mubr.f32.mxu0 0.0
    %314 = vmatmul.mubr.f32.gmra.mrb[0].mxu0 %v226
    %v315 = vpop.f32.mrb[0].mxu0
    %v316 = vadd.f32 0.0, %v315
    %v317 = vpop.f32.mrb[0].mxu0
    %318 = vmatprep.mubr.f32.mxu0 0.0
    %319 = vmatmul.mubr.f32.gmra.mrb[0].mxu0 %v229
    %v320 = vpop.f32.mrb[0].mxu0
    %v321 = vadd.f32 0.0, %v320
    %v322 = vpop.f32.mrb[0].mxu0
    %323 = vmatprep.mubr.f32.mxu0 0.0
    %324 = vmatmul.mubr.f32.gmra.mrb[0].mxu0 %v232
    %v325 = vpop.f32.mrb[0].mxu0
    %v326 = vadd.f32 0.0, %v325
    %v327 = vpop.f32.mrb[0].mxu0
    %328 = vmatprep.mubr.f32.mxu0 0.0
    %329 = vmatmul.mubr.f32.gmra.mrb[0].mxu0 %v235
    %v330 = vpop.f32.mrb[0].mxu0
    %v331 = vadd.f32 0.0, %v330
    %v332 = vpop.f32.mrb[0].mxu0
    %333 = vmatprep.mubr.f32.mxu0 0.0
    %334 = vmatmul.mubr.f32.gmra.mrb[0].mxu0 %v238
    %v335 = vpop.f32.mrb[0].mxu0
    %v336 = vadd.f32 0.0, %v335
    %v337 = vpop.f32.mrb[0].mxu0
    %338 = vmatprep.mubr.f32.mxu0 0.0
    %339 = vmatmul.mubr.f32.gmra.mrb[0].mxu0 %v241
    %v340 = vpop.f32.mrb[0].mxu0
    %v341 = vadd.f32 0.0, %v340
    %v342 = vpop.f32.mrb[0].mxu0
    %343 = vmatprep.mubr.f32.mxu0 0.0
    %344 = vmatmul.mubr.f32.gmra.mrb[0].mxu0 %v244
    %v345 = vpop.f32.mrb[0].mxu0
    %v346 = vadd.f32 0.0, %v345
    %v347 = vpop.f32.mrb[0].mxu0
    %348 = vmatprep.mubr.f32.mxu0 0.0
    %349 = vmatmul.mubr.f32.gmra.mrb[0].mxu0 %v247
    %v350 = vpop.f32.mrb[0].mxu0
    %v351 = vadd.f32 0.0, %v350
    %v352 = vpop.f32.mrb[0].mxu0
    %353 = vdwg.mxu0
    %v354 = vld [vmem:[%s8] sm:$0x3]
    %vm355 = vcmask 523264
    %v357 = vsel %vm355, %v354, 0
    %359 = vmatprep.subr.mxu0 0.0
    %360 = vmatpush1.msra.mxu0 %v316
    %361 = vmatprep.subr.mxu0 0.0
    %362 = vmatpush1.msra.mxu0 %v321
    %363 = vmatprep.subr.mxu0 0.0
    %364 = vmatpush1.msra.mxu0 %v326
    %365 = vmatprep.subr.mxu0 0.0
    %366 = vmatpush1.msra.mxu0 %v331
    %367 = vmatprep.subr.mxu0 0.0
    %368 = vmatpush1.msra.mxu0 %v336
    %369 = vmatprep.subr.mxu0 0.0
    %370 = vmatpush1.msra.mxu0 %v341
    %371 = vmatprep.subr.mxu0 0.0
    %372 = vmatpush1.msra.mxu0 %v346
    %373 = vmatprep.subr.mxu0 0.0
    %374 = vmatpush1.msra.mxu0 %v351
    %375 = vmatprep.subr.mxu0 0.0
    %376 = vmatpush1.msra.mxu0 0.0
    %377 = vmatprep.subr.mxu0 0.0
    %378 = vmatpush1.msra.mxu0 0.0
    %379 = vmatprep.subr.mxu0 0.0
    %380 = vmatpush1.msra.mxu0 0.0
    %381 = vmatprep.subr.mxu0 0.0
    %382 = vmatpush1.msra.mxu0 0.0
    %383 = vmatprep.subr.mxu0 0.0
    %384 = vmatpush1.msra.mxu0 0.0
    %385 = vmatprep.subr.mxu0 0.0
    %386 = vmatpush1.msra.mxu0 0.0
    %387 = vmatprep.subr.mxu0 0.0
    %388 = vmatpush1.msra.mxu0 0.0
    %389 = vmatprep.subr.mxu0 0.0
    %390 = vmatpush1.msra.mxu0 0.0
    %391 = vmatprep.subr.mxu0 0.0
    %392 = vmatpush1.msra.mxu0 0.0
    %393 = vmatprep.subr.mxu0 0.0
    %394 = vmatpush1.msra.mxu0 0.0
    %395 = vmatprep.subr.mxu0 0.0
    %396 = vmatpush1.msra.mxu0 0.0
    %397 = vmatprep.subr.mxu0 0.0
    %398 = vmatpush1.msra.mxu0 0.0
    %399 = vmatprep.subr.mxu0 0.0
    %400 = vmatpush1.msra.mxu0 0.0
    %401 = vmatprep.subr.mxu0 0.0
    %402 = vmatpush1.msra.mxu0 0.0
    %403 = vmatprep.subr.mxu0 0.0
    %404 = vmatpush1.msra.mxu0 0.0
    %405 = vmatprep.subr.mxu0 0.0
    %406 = vmatpush1.msra.mxu0 0.0
    %407 = vmatprep.subr.mxu0 0.0
    %408 = vmatpush1.msra.mxu0 0.0
    %409 = vmatprep.subr.mxu0 0.0
    %410 = vmatpush1.msra.mxu0 0.0
    %411 = vmatprep.subr.mxu0 0.0
    %412 = vmatpush1.msra.mxu0 0.0
    %413 = vmatprep.subr.mxu0 0.0
    %414 = vmatpush1.msra.mxu0 0.0
    %415 = vmatprep.subr.mxu0 0.0
    %416 = vmatpush1.msra.mxu0 0.0
    %417 = vmatprep.subr.mxu0 0.0
    %418 = vmatpush1.msra.mxu0 0.0
    %419 = vmatprep.subr.mxu0 0.0
    %420 = vmatpush1.msra.mxu0 0.0
    %421 = vmatprep.subr.mxu0 0.0
    %422 = vmatpush1.msra.mxu0 0.0
    %423 = vmatprep.mubr.f32.mxu0 0.0
    %424 = vmatmul.mubr.f32.gmra.mrb[0].mxu0 %v357
    %v425 = vpop.f32.mrb[0].mxu0
    %v426 = vadd.f32 0.0, %v425
    %v427 = vpop.f32.mrb[0].mxu0
    %428 = vdwg.mxu0
    %v429 = vld [vmem:[%s9] sm:$0x3]
    %v431 = vsel %vm355, %v429, 0
    %433 = vmatprep.subr.mxu0 0.0
    %434 = vmatpush1.msra.mxu0 %v316
    %435 = vmatprep.subr.mxu0 0.0
    %436 = vmatpush1.msra.mxu0 %v321
    %437 = vmatprep.subr.mxu0 0.0
    %438 = vmatpush1.msra.mxu0 %v326
    %439 = vmatprep.subr.mxu0 0.0
    %440 = vmatpush1.msra.mxu0 %v331
    %441 = vmatprep.subr.mxu0 0.0
    %442 = vmatpush1.msra.mxu0 %v336
    %443 = vmatprep.subr.mxu0 0.0
    %444 = vmatpush1.msra.mxu0 %v341
    %445 = vmatprep.subr.mxu0 0.0
    %446 = vmatpush1.msra.mxu0 %v346
    %447 = vmatprep.subr.mxu0 0.0
    %448 = vmatpush1.msra.mxu0 %v351
    %449 = vmatprep.subr.mxu0 0.0
    %450 = vmatpush1.msra.mxu0 0.0
    %451 = vmatprep.subr.mxu0 0.0
    %452 = vmatpush1.msra.mxu0 0.0
    %453 = vmatprep.subr.mxu0 0.0
    %454 = vmatpush1.msra.mxu0 0.0
    %455 = vmatprep.subr.mxu0 0.0
    %456 = vmatpush1.msra.mxu0 0.0
    %457 = vmatprep.subr.mxu0 0.0
    %458 = vmatpush1.msra.mxu0 0.0
    %459 = vmatprep.subr.mxu0 0.0
    %460 = vmatpush1.msra.mxu0 0.0
    %461 = vmatprep.subr.mxu0 0.0
    %462 = vmatpush1.msra.mxu0 0.0
    %463 = vmatprep.subr.mxu0 0.0
    %464 = vmatpush1.msra.mxu0 0.0
    %465 = vmatprep.subr.mxu0 0.0
    %466 = vmatpush1.msra.mxu0 0.0
    %467 = vmatprep.subr.mxu0 0.0
    %468 = vmatpush1.msra.mxu0 0.0
    %469 = vmatprep.subr.mxu0 0.0
    %470 = vmatpush1.msra.mxu0 0.0
    %471 = vmatprep.subr.mxu0 0.0
    %472 = vmatpush1.msra.mxu0 0.0
    %473 = vmatprep.subr.mxu0 0.0
    %474 = vmatpush1.msra.mxu0 0.0
    %475 = vmatprep.subr.mxu0 0.0
    %476 = vmatpush1.msra.mxu0 0.0
    %477 = vmatprep.subr.mxu0 0.0
    %478 = vmatpush1.msra.mxu0 0.0
    %479 = vmatprep.subr.mxu0 0.0
    %480 = vmatpush1.msra.mxu0 0.0
    %481 = vmatprep.subr.mxu0 0.0
    %482 = vmatpush1.msra.mxu0 0.0
    %483 = vmatprep.subr.mxu0 0.0
    %484 = vmatpush1.msra.mxu0 0.0
    %485 = vmatprep.subr.mxu0 0.0
    %486 = vmatpush1.msra.mxu0 0.0
    %487 = vmatprep.subr.mxu0 0.0
    %488 = vmatpush1.msra.mxu0 0.0
    %489 = vmatprep.subr.mxu0 0.0
    %490 = vmatpush1.msra.mxu0 0.0
    %491 = vmatprep.subr.mxu0 0.0
    %492 = vmatpush1.msra.mxu0 0.0
    %493 = vmatprep.subr.mxu0 0.0
    %494 = vmatpush1.msra.mxu0 0.0
    %495 = vmatprep.subr.mxu0 0.0
    %496 = vmatpush1.msra.mxu0 0.0
    %497 = vmatprep.mubr.f32.mxu0 0.0
    %498 = vmatmul.mubr.f32.gmra.mrb[0].mxu0 %v431
    %v499 = vpop.f32.mrb[0].mxu0
    %v500 = vadd.f32 0.0, %v499
    %v501 = vpop.f32.mrb[0].mxu0
    %502 = vdwg.mxu0
    %vm503 = vcmask 64512
    %v505 = vsel %vm503, %v500, 0
    %507 = vmatprep.subr.mxu0 0.0
    %508 = vmatpush1.msra.mxu0 %v74
    %509 = vmatprep.subr.mxu0 0.0
    %510 = vmatpush1.msra.mxu0 0.0
    %511 = vmatprep.subr.mxu0 0.0
    %512 = vmatpush1.msra.mxu0 0.0
    %513 = vmatprep.subr.mxu0 0.0
    %514 = vmatpush1.msra.mxu0 0.0
    %515 = vmatprep.subr.mxu0 0.0
    %516 = vmatpush1.msra.mxu0 0.0
    %517 = vmatprep.subr.mxu0 0.0
    %518 = vmatpush1.msra.mxu0 0.0
    %519 = vmatprep.subr.mxu0 0.0
    %520 = vmatpush1.msra.mxu0 0.0
    %521 = vmatprep.subr.mxu0 0.0
    %522 = vmatpush1.msra.mxu0 0.0
    %523 = vmatprep.subr.mxu0 0.0
    %524 = vmatpush1.msra.mxu0 0.0
    %525 = vmatprep.subr.mxu0 0.0
    %526 = vmatpush1.msra.mxu0 0.0
    %527 = vmatprep.subr.mxu0 0.0
    %528 = vmatpush1.msra.mxu0 0.0
    %529 = vmatprep.subr.mxu0 0.0
    %530 = vmatpush1.msra.mxu0 0.0
    %531 = vmatprep.subr.mxu0 0.0
    %532 = vmatpush1.msra.mxu0 0.0
    %533 = vmatprep.subr.mxu0 0.0
    %534 = vmatpush1.msra.mxu0 0.0
    %535 = vmatprep.subr.mxu0 0.0
    %536 = vmatpush1.msra.mxu0 0.0
    %537 = vmatprep.subr.mxu0 0.0
    %538 = vmatpush1.msra.mxu0 0.0
    %539 = vmatprep.subr.mxu0 0.0
    %540 = vmatpush1.msra.mxu0 0.0
    %541 = vmatprep.subr.mxu0 0.0
    %542 = vmatpush1.msra.mxu0 0.0
    %543 = vmatprep.subr.mxu0 0.0
    %544 = vmatpush1.msra.mxu0 0.0
    %545 = vmatprep.subr.mxu0 0.0
    %546 = vmatpush1.msra.mxu0 0.0
    %547 = vmatprep.subr.mxu0 0.0
    %548 = vmatpush1.msra.mxu0 0.0
    %549 = vmatprep.subr.mxu0 0.0
    %550 = vmatpush1.msra.mxu0 0.0
    %551 = vmatprep.subr.mxu0 0.0
    %552 = vmatpush1.msra.mxu0 0.0
    %553 = vmatprep.subr.mxu0 0.0
    %554 = vmatpush1.msra.mxu0 0.0
    %555 = vmatprep.subr.mxu0 0.0
    %556 = vmatpush1.msra.mxu0 0.0
    %557 = vmatprep.subr.mxu0 0.0
    %558 = vmatpush1.msra.mxu0 0.0
    %559 = vmatprep.subr.mxu0 0.0
    %560 = vmatpush1.msra.mxu0 0.0
    %561 = vmatprep.subr.mxu0 0.0
    %562 = vmatpush1.msra.mxu0 0.0
    %563 = vmatprep.subr.mxu0 0.0
    %564 = vmatpush1.msra.mxu0 0.0
    %565 = vmatprep.subr.mxu0 0.0
    %566 = vmatpush1.msra.mxu0 0.0
    %567 = vmatprep.subr.mxu0 0.0
    %568 = vmatpush1.msra.mxu0 0.0
    %569 = vmatprep.subr.mxu0 0.0
    %570 = vmatpush1.msra.mxu0 0.0
    %571 = vmatprep.mubr.f32.mxu0 0.0
    %572 = vmatmul.mubr.f32.gmra.mrb[0].mxu0 %v505
    %v573 = vpop.f32.mrb[0].mxu0
    %v574 = vadd.f32 0.0, %v573
    %v575 = vpop.f32.mrb[0].mxu0
    %576 = vdwg.mxu0
    %v578 = vsel %vm503, %v426, 0
    %580 = vmatprep.subr.mxu0 0.0
    %581 = vmatpush1.msra.mxu0 %v71
    %582 = vmatprep.subr.mxu0 0.0
    %583 = vmatpush1.msra.mxu0 0.0
    %584 = vmatprep.subr.mxu0 0.0
    %585 = vmatpush1.msra.mxu0 0.0
    %586 = vmatprep.subr.mxu0 0.0
    %587 = vmatpush1.msra.mxu0 0.0
    %588 = vmatprep.subr.mxu0 0.0
    %589 = vmatpush1.msra.mxu0 0.0
    %590 = vmatprep.subr.mxu0 0.0
    %591 = vmatpush1.msra.mxu0 0.0
    %592 = vmatprep.subr.mxu0 0.0
    %593 = vmatpush1.msra.mxu0 0.0
    %594 = vmatprep.subr.mxu0 0.0
    %595 = vmatpush1.msra.mxu0 0.0
    %596 = vmatprep.subr.mxu0 0.0
    %597 = vmatpush1.msra.mxu0 0.0
    %598 = vmatprep.subr.mxu0 0.0
    %599 = vmatpush1.msra.mxu0 0.0
    %600 = vmatprep.subr.mxu0 0.0
    %601 = vmatpush1.msra.mxu0 0.0
    %602 = vmatprep.subr.mxu0 0.0
    %603 = vmatpush1.msra.mxu0 0.0
    %604 = vmatprep.subr.mxu0 0.0
    %605 = vmatpush1.msra.mxu0 0.0
    %606 = vmatprep.subr.mxu0 0.0
    %607 = vmatpush1.msra.mxu0 0.0
    %608 = vmatprep.subr.mxu0 0.0
    %609 = vmatpush1.msra.mxu0 0.0
    %610 = vmatprep.subr.mxu0 0.0
    %611 = vmatpush1.msra.mxu0 0.0
    %612 = vmatprep.subr.mxu0 0.0
    %613 = vmatpush1.msra.mxu0 0.0
    %614 = vmatprep.subr.mxu0 0.0
    %615 = vmatpush1.msra.mxu0 0.0
    %616 = vmatprep.subr.mxu0 0.0
    %617 = vmatpush1.msra.mxu0 0.0
    %618 = vmatprep.subr.mxu0 0.0
    %619 = vmatpush1.msra.mxu0 0.0
    %620 = vmatprep.subr.mxu0 0.0
    %621 = vmatpush1.msra.mxu0 0.0
    %622 = vmatprep.subr.mxu0 0.0
    %623 = vmatpush1.msra.mxu0 0.0
    %624 = vmatprep.subr.mxu0 0.0
    %625 = vmatpush1.msra.mxu0 0.0
    %626 = vmatprep.subr.mxu0 0.0
    %627 = vmatpush1.msra.mxu0 0.0
    %628 = vmatprep.subr.mxu0 0.0
    %629 = vmatpush1.msra.mxu0 0.0
    %630 = vmatprep.subr.mxu0 0.0
    %631 = vmatpush1.msra.mxu0 0.0
    %632 = vmatprep.subr.mxu0 0.0
    %633 = vmatpush1.msra.mxu0 0.0
    %634 = vmatprep.subr.mxu0 0.0
    %635 = vmatpush1.msra.mxu0 0.0
    %636 = vmatprep.subr.mxu0 0.0
    %637 = vmatpush1.msra.mxu0 0.0
    %638 = vmatprep.subr.mxu0 0.0
    %639 = vmatpush1.msra.mxu0 0.0
    %640 = vmatprep.subr.mxu0 0.0
    %641 = vmatpush1.msra.mxu0 0.0
    %642 = vmatprep.subr.mxu0 0.0
    %643 = vmatpush1.msra.mxu0 0.0
    %644 = vmatprep.mubr.f32.mxu0 0.0
    %645 = vmatmul.mubr.f32.gmra.mrb[0].mxu0 %v578
    %v646 = vpop.f32.mrb[0].mxu0
    %v647 = vadd.f32 %v574, %v646
    %v648 = vpop.f32.mrb[0].mxu0
    %649 = vdwg.mxu0
    %vm650 = vcmp.gt.f32.partialorder %v647, 0.0
    %v651 = vmul.f32 %v647, 0.2
    %v652 = vsel %vm650, %v647, %v651
    %vm653 = vcmask 123904
    %v654 = vsel %vm653, %v652, -inf
    %655 = vmax.xlane.f32.xlu0 %v654
    %v656 = vpop.xlane.xlu0 %655
    %v657 = vsub.f32 %v652, %v656
    %v658 = vmul.f32 %v657, 1.442695
    %v659 = vpow.pop %v658
    %v661 = vsel %vm117, %v659, 0
    %663 = vmatprep.subr.mxu0 0.0
    %664 = vmatpush1.msra.mxu0 %v72
    %665 = vmatprep.subr.mxu0 0.0
    %666 = vmatpush1.msra.mxu0 %v73
    %667 = vmatprep.subr.mxu0 0.0
    %668 = vmatpush1.msra.mxu0 0.0
    %669 = vmatprep.subr.mxu0 0.0
    %670 = vmatpush1.msra.mxu0 0.0
    %671 = vmatprep.subr.mxu0 0.0
    %672 = vmatpush1.msra.mxu0 0.0
    %673 = vmatprep.subr.mxu0 0.0
    %674 = vmatpush1.msra.mxu0 0.0
    %675 = vmatprep.subr.mxu0 0.0
    %676 = vmatpush1.msra.mxu0 0.0
    %677 = vmatprep.subr.mxu0 0.0
    %678 = vmatpush1.msra.mxu0 0.0
    %679 = vmatprep.subr.mxu0 0.0
    %680 = vmatpush1.msra.mxu0 0.0
    %681 = vmatprep.subr.mxu0 0.0
    %682 = vmatpush1.msra.mxu0 0.0
    %683 = vmatprep.subr.mxu0 0.0
    %684 = vmatpush1.msra.mxu0 0.0
    %685 = vmatprep.subr.mxu0 0.0
    %686 = vmatpush1.msra.mxu0 0.0
    %687 = vmatprep.subr.mxu0 0.0
    %688 = vmatpush1.msra.mxu0 0.0
    %689 = vmatprep.subr.mxu0 0.0
    %690 = vmatpush1.msra.mxu0 0.0
    %691 = vmatprep.subr.mxu0 0.0
    %692 = vmatpush1.msra.mxu0 0.0
    %693 = vmatprep.subr.mxu0 0.0
    %694 = vmatpush1.msra.mxu0 0.0
    %695 = vmatprep.subr.mxu0 0.0
    %696 = vmatpush1.msra.mxu0 0.0
    %697 = vmatprep.subr.mxu0 0.0
    %698 = vmatpush1.msra.mxu0 0.0
    %699 = vmatprep.subr.mxu0 0.0
    %700 = vmatpush1.msra.mxu0 0.0
    %701 = vmatprep.subr.mxu0 0.0
    %702 = vmatpush1.msra.mxu0 0.0
    %703 = vmatprep.subr.mxu0 0.0
    %704 = vmatpush1.msra.mxu0 0.0
    %705 = vmatprep.subr.mxu0 0.0
    %706 = vmatpush1.msra.mxu0 0.0
    %707 = vmatprep.subr.mxu0 0.0
    %708 = vmatpush1.msra.mxu0 0.0
    %709 = vmatprep.subr.mxu0 0.0
    %710 = vmatpush1.msra.mxu0 0.0
    %711 = vmatprep.subr.mxu0 0.0
    %712 = vmatpush1.msra.mxu0 0.0
    %713 = vmatprep.subr.mxu0 0.0
    %714 = vmatpush1.msra.mxu0 0.0
    %715 = vmatprep.subr.mxu0 0.0
    %716 = vmatpush1.msra.mxu0 0.0
    %717 = vmatprep.subr.mxu0 0.0
    %718 = vmatpush1.msra.mxu0 0.0
    %719 = vmatprep.subr.mxu0 0.0
    %720 = vmatpush1.msra.mxu0 0.0
    %721 = vmatprep.subr.mxu0 0.0
    %722 = vmatpush1.msra.mxu0 0.0
    %723 = vmatprep.subr.mxu0 0.0
    %724 = vmatpush1.msra.mxu0 0.0
    %725 = vmatprep.subr.mxu0 0.0
    %726 = vmatpush1.msra.mxu0 0.0
    %727 = vmatprep.mubr.f32.mxu0 0.0
    %728 = vmatmul.mubr.f32.gmra.mrb[0].mxu0 %v661
    %v729 = vpop.f32.mrb[0].mxu0
    %v730 = vadd.f32 0.0, %v729
    %v731 = vpop.f32.mrb[0].mxu0
    %732 = vdwg.mxu0
    %v734 = vsel %vm503, %v730, 0
    %736 = vmatprep.subr.mxu0 0.0
    %737 = vmatpush1.msra.mxu0 %v74
    %738 = vmatprep.subr.mxu0 0.0
    %739 = vmatpush1.msra.mxu0 0.0
    %740 = vmatprep.subr.mxu0 0.0
    %741 = vmatpush1.msra.mxu0 0.0
    %742 = vmatprep.subr.mxu0 0.0
    %743 = vmatpush1.msra.mxu0 0.0
    %744 = vmatprep.subr.mxu0 0.0
    %745 = vmatpush1.msra.mxu0 0.0
    %746 = vmatprep.subr.mxu0 0.0
    %747 = vmatpush1.msra.mxu0 0.0
    %748 = vmatprep.subr.mxu0 0.0
    %749 = vmatpush1.msra.mxu0 0.0
    %750 = vmatprep.subr.mxu0 0.0
    %751 = vmatpush1.msra.mxu0 0.0
    %752 = vmatprep.subr.mxu0 0.0
    %753 = vmatpush1.msra.mxu0 0.0
    %754 = vmatprep.subr.mxu0 0.0
    %755 = vmatpush1.msra.mxu0 0.0
    %756 = vmatprep.subr.mxu0 0.0
    %757 = vmatpush1.msra.mxu0 0.0
    %758 = vmatprep.subr.mxu0 0.0
    %759 = vmatpush1.msra.mxu0 0.0
    %760 = vmatprep.subr.mxu0 0.0
    %761 = vmatpush1.msra.mxu0 0.0
    %762 = vmatprep.subr.mxu0 0.0
    %763 = vmatpush1.msra.mxu0 0.0
    %764 = vmatprep.subr.mxu0 0.0
    %765 = vmatpush1.msra.mxu0 0.0
    %766 = vmatprep.subr.mxu0 0.0
    %767 = vmatpush1.msra.mxu0 0.0
    %768 = vmatprep.subr.mxu0 0.0
    %769 = vmatpush1.msra.mxu0 0.0
    %770 = vmatprep.subr.mxu0 0.0
    %771 = vmatpush1.msra.mxu0 0.0
    %772 = vmatprep.subr.mxu0 0.0
    %773 = vmatpush1.msra.mxu0 0.0
    %774 = vmatprep.subr.mxu0 0.0
    %775 = vmatpush1.msra.mxu0 0.0
    %776 = vmatprep.subr.mxu0 0.0
    %777 = vmatpush1.msra.mxu0 0.0
    %778 = vmatprep.subr.mxu0 0.0
    %779 = vmatpush1.msra.mxu0 0.0
    %780 = vmatprep.subr.mxu0 0.0
    %781 = vmatpush1.msra.mxu0 0.0
    %782 = vmatprep.subr.mxu0 0.0
    %783 = vmatpush1.msra.mxu0 0.0
    %784 = vmatprep.subr.mxu0 0.0
    %785 = vmatpush1.msra.mxu0 0.0
    %786 = vmatprep.subr.mxu0 0.0
    %787 = vmatpush1.msra.mxu0 0.0
    %788 = vmatprep.subr.mxu0 0.0
    %789 = vmatpush1.msra.mxu0 0.0
    %790 = vmatprep.subr.mxu0 0.0
    %791 = vmatpush1.msra.mxu0 0.0
    %792 = vmatprep.subr.mxu0 0.0
    %793 = vmatpush1.msra.mxu0 0.0
    %794 = vmatprep.subr.mxu0 0.0
    %795 = vmatpush1.msra.mxu0 0.0
    %796 = vmatprep.subr.mxu0 0.0
    %797 = vmatpush1.msra.mxu0 0.0
    %798 = vmatprep.subr.mxu0 0.0
    %799 = vmatpush1.msra.mxu0 0.0
    %800 = vmatprep.mubr.f32.mxu0 0.0
    %801 = vmatmul.mubr.f32.gmra.mrb[0].mxu0 %v734
    %v802 = vpop.f32.mrb[0].mxu0
    %v803 = vadd.f32 1e-16, %v802
    %v804 = vpop.f32.mrb[0].mxu0
    %805 = vdwg.mxu0
    %v806 = vrcp.pop %v803
    %v807 = vmul.f32 %v659, %v806
    %v809 = vsel %vm503, %v316, 0
    %v812 = vsel %vm503, %v321, 0
    %v815 = vsel %vm503, %v326, 0
    %v818 = vsel %vm503, %v331, 0
    %v821 = vsel %vm503, %v336, 0
    %v824 = vsel %vm503, %v341, 0
    %v827 = vsel %vm503, %v346, 0
    %v830 = vsel %vm503, %v351, 0
    %832 = vmatprep.subr.mxu0 0.0
    %833 = vmatpush1.msra.mxu0 %v71
    %834 = vmatprep.subr.mxu0 0.0
    %835 = vmatpush1.msra.mxu0 0.0
    %836 = vmatprep.subr.mxu0 0.0
    %837 = vmatpush1.msra.mxu0 0.0
    %838 = vmatprep.subr.mxu0 0.0
    %839 = vmatpush1.msra.mxu0 0.0
    %840 = vmatprep.subr.mxu0 0.0
    %841 = vmatpush1.msra.mxu0 0.0
    %842 = vmatprep.subr.mxu0 0.0
    %843 = vmatpush1.msra.mxu0 0.0
    %844 = vmatprep.subr.mxu0 0.0
    %845 = vmatpush1.msra.mxu0 0.0
    %846 = vmatprep.subr.mxu0 0.0
    %847 = vmatpush1.msra.mxu0 0.0
    %848 = vmatprep.subr.mxu0 0.0
    %849 = vmatpush1.msra.mxu0 0.0
    %850 = vmatprep.subr.mxu0 0.0
    %851 = vmatpush1.msra.mxu0 0.0
    %852 = vmatprep.subr.mxu0 0.0
    %853 = vmatpush1.msra.mxu0 0.0
    %854 = vmatprep.subr.mxu0 0.0
    %855 = vmatpush1.msra.mxu0 0.0
    %856 = vmatprep.subr.mxu0 0.0
    %857 = vmatpush1.msra.mxu0 0.0
    %858 = vmatprep.subr.mxu0 0.0
    %859 = vmatpush1.msra.mxu0 0.0
    %860 = vmatprep.subr.mxu0 0.0
    %861 = vmatpush1.msra.mxu0 0.0
    %862 = vmatprep.subr.mxu0 0.0
    %863 = vmatpush1.msra.mxu0 0.0
    %864 = vmatprep.subr.mxu0 0.0
    %865 = vmatpush1.msra.mxu0 0.0
    %866 = vmatprep.subr.mxu0 0.0
    %867 = vmatpush1.msra.mxu0 0.0
    %868 = vmatprep.subr.mxu0 0.0
    %869 = vmatpush1.msra.mxu0 0.0
    %870 = vmatprep.subr.mxu0 0.0
    %871 = vmatpush1.msra.mxu0 0.0
    %872 = vmatprep.subr.mxu0 0.0
    %873 = vmatpush1.msra.mxu0 0.0
    %874 = vmatprep.subr.mxu0 0.0
    %875 = vmatpush1.msra.mxu0 0.0
    %876 = vmatprep.subr.mxu0 0.0
    %877 = vmatpush1.msra.mxu0 0.0
    %878 = vmatprep.subr.mxu0 0.0
    %879 = vmatpush1.msra.mxu0 0.0
    %880 = vmatprep.subr.mxu0 0.0
    %881 = vmatpush1.msra.mxu0 0.0
    %882 = vmatprep.subr.mxu0 0.0
    %883 = vmatpush1.msra.mxu0 0.0
    %884 = vmatprep.subr.mxu0 0.0
    %885 = vmatpush1.msra.mxu0 0.0
    %886 = vmatprep.subr.mxu0 0.0
    %887 = vmatpush1.msra.mxu0 0.0
    %888 = vmatprep.subr.mxu0 0.0
    %889 = vmatpush1.msra.mxu0 0.0
    %890 = vmatprep.subr.mxu0 0.0
    %891 = vmatpush1.msra.mxu0 0.0
    %892 = vmatprep.subr.mxu0 0.0
    %893 = vmatpush1.msra.mxu0 0.0
    %894 = vmatprep.subr.mxu0 0.0
    %895 = vmatpush1.msra.mxu0 0.0
    %896 = vmatprep.mubr.f32.mxu0 0.0
    %897 = vmatmul.mubr.f32.gmra.mrb[0].mxu0 %v809
    %v898 = vpop.f32.mrb[0].mxu0
    %v899 = vadd.f32 0.0, %v898
    %v900 = vpop.f32.mrb[0].mxu0
    %901 = vmatprep.mubr.f32.mxu0 0.0
    %902 = vmatmul.mubr.f32.gmra.mrb[0].mxu0 %v812
    %v903 = vpop.f32.mrb[0].mxu0
    %v904 = vadd.f32 0.0, %v903
    %v905 = vpop.f32.mrb[0].mxu0
    %906 = vmatprep.mubr.f32.mxu0 0.0
    %907 = vmatmul.mubr.f32.gmra.mrb[0].mxu0 %v815
    %v908 = vpop.f32.mrb[0].mxu0
    %v909 = vadd.f32 0.0, %v908
    %v910 = vpop.f32.mrb[0].mxu0
    %911 = vmatprep.mubr.f32.mxu0 0.0
    %912 = vmatmul.mubr.f32.gmra.mrb[0].mxu0 %v818
    %v913 = vpop.f32.mrb[0].mxu0
    %v914 = vadd.f32 0.0, %v913
    %v915 = vpop.f32.mrb[0].mxu0
    %916 = vmatprep.mubr.f32.mxu0 0.0
    %917 = vmatmul.mubr.f32.gmra.mrb[0].mxu0 %v821
    %v918 = vpop.f32.mrb[0].mxu0
    %v919 = vadd.f32 0.0, %v918
    %v920 = vpop.f32.mrb[0].mxu0
    %921 = vmatprep.mubr.f32.mxu0 0.0
    %922 = vmatmul.mubr.f32.gmra.mrb[0].mxu0 %v824
    %v923 = vpop.f32.mrb[0].mxu0
    %v924 = vadd.f32 0.0, %v923
    %v925 = vpop.f32.mrb[0].mxu0
    %926 = vmatprep.mubr.f32.mxu0 0.0
    %927 = vmatmul.mubr.f32.gmra.mrb[0].mxu0 %v827
    %v928 = vpop.f32.mrb[0].mxu0
    %v929 = vadd.f32 0.0, %v928
    %v930 = vpop.f32.mrb[0].mxu0
    %931 = vmatprep.mubr.f32.mxu0 0.0
    %932 = vmatmul.mubr.f32.gmra.mrb[0].mxu0 %v830
    %v933 = vpop.f32.mrb[0].mxu0
    %v934 = vadd.f32 0.0, %v933
    %v935 = vpop.f32.mrb[0].mxu0
    %936 = vdwg.mxu0
    %vm937 = vcmask 15360
    %v939 = vsel %vm937, %v75, 0
    %v942 = vsel %vm937, %v76, 0
    %v945 = vsel %vm937, %v77, 0
    %v948 = vsel %vm937, %v78, 0
    %v951 = vsel %vm937, %v79, 0
    %v954 = vsel %vm937, %v80, 0
    %v957 = vsel %vm937, %v81, 0
    %v960 = vsel %vm937, %v82, 0
    %vm962 = vcmask 1041408
    %v964 = vsel %vm962, %v807, 0
    %966 = vmatprep.subr.mxu0 0.0
    %967 = vmatpush1.msra.mxu0 %v964
    %968 = vmatprep.subr.mxu0 0.0
    %969 = vmatpush1.msra.mxu0 0.0
    %970 = vmatprep.subr.mxu0 0.0
    %971 = vmatpush1.msra.mxu0 0.0
    %972 = vmatprep.subr.mxu0 0.0
    %973 = vmatpush1.msra.mxu0 0.0
    %974 = vmatprep.subr.mxu0 0.0
    %975 = vmatpush1.msra.mxu0 0.0
    %976 = vmatprep.subr.mxu0 0.0
    %977 = vmatpush1.msra.mxu0 0.0
    %978 = vmatprep.subr.mxu0 0.0
    %979 = vmatpush1.msra.mxu0 0.0
    %980 = vmatprep.subr.mxu0 0.0
    %981 = vmatpush1.msra.mxu0 0.0
    %982 = vmatprep.subr.mxu0 0.0
    %983 = vmatpush1.msra.mxu0 0.0
    %984 = vmatprep.subr.mxu0 0.0
    %985 = vmatpush1.msra.mxu0 0.0
    %986 = vmatprep.subr.mxu0 0.0
    %987 = vmatpush1.msra.mxu0 0.0
    %988 = vmatprep.subr.mxu0 0.0
    %989 = vmatpush1.msra.mxu0 0.0
    %990 = vmatprep.subr.mxu0 0.0
    %991 = vmatpush1.msra.mxu0 0.0
    %992 = vmatprep.subr.mxu0 0.0
    %993 = vmatpush1.msra.mxu0 0.0
    %994 = vmatprep.subr.mxu0 0.0
    %995 = vmatpush1.msra.mxu0 0.0
    %996 = vmatprep.subr.mxu0 0.0
    %997 = vmatpush1.msra.mxu0 0.0
    %998 = vmatprep.subr.mxu0 0.0
    %999 = vmatpush1.msra.mxu0 0.0
    %1000 = vmatprep.subr.mxu0 0.0
    %1001 = vmatpush1.msra.mxu0 0.0
    %1002 = vmatprep.subr.mxu0 0.0
    %1003 = vmatpush1.msra.mxu0 0.0
    %1004 = vmatprep.subr.mxu0 0.0
    %1005 = vmatpush1.msra.mxu0 0.0
    %1006 = vmatprep.subr.mxu0 0.0
    %1007 = vmatpush1.msra.mxu0 0.0
    %1008 = vmatprep.subr.mxu0 0.0
    %1009 = vmatpush1.msra.mxu0 0.0
    %1010 = vmatprep.subr.mxu0 0.0
    %1011 = vmatpush1.msra.mxu0 0.0
    %1012 = vmatprep.subr.mxu0 0.0
    %1013 = vmatpush1.msra.mxu0 0.0
    %1014 = vmatprep.subr.mxu0 0.0
    %1015 = vmatpush1.msra.mxu0 0.0
    %1016 = vmatprep.subr.mxu0 0.0
    %1017 = vmatpush1.msra.mxu0 0.0
    %1018 = vmatprep.subr.mxu0 0.0
    %1019 = vmatpush1.msra.mxu0 0.0
    %1020 = vmatprep.subr.mxu0 0.0
    %1021 = vmatpush1.msra.mxu0 0.0
    %1022 = vmatprep.subr.mxu0 0.0
    %1023 = vmatpush1.msra.mxu0 0.0
    %1024 = vmatprep.subr.mxu0 0.0
    %1025 = vmatpush1.msra.mxu0 0.0
    %1026 = vmatprep.subr.mxu0 0.0
    %1027 = vmatpush1.msra.mxu0 0.0
    %1028 = vmatprep.subr.mxu0 0.0
    %1029 = vmatpush1.msra.mxu0 0.0
    %1030 = vmatprep.mubr.f32.mxu0 0.0
    %1031 = vmatmul.mubr.f32.gmra.mrb[0].mxu0 %v939
    %v1032 = vpop.f32.mrb[0].mxu0
    %v1033 = vadd.f32 0.0, %v1032
    %v1034 = vpop.f32.mrb[0].mxu0
    %1035 = vmatprep.mubr.f32.mxu0 0.0
    %1036 = vmatmul.mubr.f32.gmra.mrb[0].mxu0 %v942
    %v1037 = vpop.f32.mrb[0].mxu0
    %v1038 = vadd.f32 0.0, %v1037
    %v1039 = vpop.f32.mrb[0].mxu0
    %1040 = vmatprep.mubr.f32.mxu0 0.0
    %1041 = vmatmul.mubr.f32.gmra.mrb[0].mxu0 %v945
    %v1042 = vpop.f32.mrb[0].mxu0
    %v1043 = vadd.f32 0.0, %v1042
    %v1044 = vpop.f32.mrb[0].mxu0
    %1045 = vmatprep.mubr.f32.mxu0 0.0
    %1046 = vmatmul.mubr.f32.gmra.mrb[0].mxu0 %v948
    %v1047 = vpop.f32.mrb[0].mxu0
    %v1048 = vadd.f32 0.0, %v1047
    %v1049 = vpop.f32.mrb[0].mxu0
    %1050 = vmatprep.mubr.f32.mxu0 0.0
    %1051 = vmatmul.mubr.f32.gmra.mrb[0].mxu0 %v951
    %v1052 = vpop.f32.mrb[0].mxu0
    %v1053 = vadd.f32 0.0, %v1052
    %v1054 = vpop.f32.mrb[0].mxu0
    %1055 = vmatprep.mubr.f32.mxu0 0.0
    %1056 = vmatmul.mubr.f32.gmra.mrb[0].mxu0 %v954
    %v1057 = vpop.f32.mrb[0].mxu0
    %v1058 = vadd.f32 0.0, %v1057
    %v1059 = vpop.f32.mrb[0].mxu0
    %1060 = vmatprep.mubr.f32.mxu0 0.0
    %1061 = vmatmul.mubr.f32.gmra.mrb[0].mxu0 %v957
    %v1062 = vpop.f32.mrb[0].mxu0
    %v1063 = vadd.f32 0.0, %v1062
    %v1064 = vpop.f32.mrb[0].mxu0
    %1065 = vmatprep.mubr.f32.mxu0 0.0
    %1066 = vmatmul.mubr.f32.gmra.mrb[0].mxu0 %v960
    %v1067 = vpop.f32.mrb[0].mxu0
    %v1068 = vadd.f32 0.0, %v1067
    %v1069 = vpop.f32.mrb[0].mxu0
    %1070 = vdwg.mxu0
    %v1071 = vmul.f32 %v1033, %v899
    %v1072 = vmul.f32 %v1038, %v904
    %v1073 = vmul.f32 %v1043, %v909
    %v1074 = vmul.f32 %v1048, %v914
    %v1075 = vmul.f32 %v1053, %v919
    %v1076 = vmul.f32 %v1058, %v924
    %v1077 = vmul.f32 %v1063, %v929
    %v1078 = vmul.f32 %v1068, %v934
    %v1080 = vsel %vm117, %v1071, 0
    %v1083 = vsel %vm117, %v1072, 0
    %v1086 = vsel %vm117, %v1073, 0
    %v1089 = vsel %vm117, %v1074, 0
    %v1092 = vsel %vm117, %v1075, 0
    %v1095 = vsel %vm117, %v1076, 0
    %v1098 = vsel %vm117, %v1077, 0
    %v1101 = vsel %vm117, %v1078, 0
    %1103 = vmatprep.subr.mxu0 0.0
    %1104 = vmatpush1.msra.mxu0 %v72
    %1105 = vmatprep.subr.mxu0 0.0
    %1106 = vmatpush1.msra.mxu0 %v73
    %1107 = vmatprep.subr.mxu0 0.0
    %1108 = vmatpush1.msra.mxu0 0.0
    %1109 = vmatprep.subr.mxu0 0.0
    %1110 = vmatpush1.msra.mxu0 0.0
    %1111 = vmatprep.subr.mxu0 0.0
    %1112 = vmatpush1.msra.mxu0 0.0
    %1113 = vmatprep.subr.mxu0 0.0
    %1114 = vmatpush1.msra.mxu0 0.0
    %1115 = vmatprep.subr.mxu0 0.0
    %1116 = vmatpush1.msra.mxu0 0.0
    %1117 = vmatprep.subr.mxu0 0.0
    %1118 = vmatpush1.msra.mxu0 0.0
    %1119 = vmatprep.subr.mxu0 0.0
    %1120 = vmatpush1.msra.mxu0 0.0
    %1121 = vmatprep.subr.mxu0 0.0
    %1122 = vmatpush1.msra.mxu0 0.0
    %1123 = vmatprep.subr.mxu0 0.0
    %1124 = vmatpush1.msra.mxu0 0.0
    %1125 = vmatprep.subr.mxu0 0.0
    %1126 = vmatpush1.msra.mxu0 0.0
    %1127 = vmatprep.subr.mxu0 0.0
    %1128 = vmatpush1.msra.mxu0 0.0
    %1129 = vmatprep.subr.mxu0 0.0
    %1130 = vmatpush1.msra.mxu0 0.0
    %1131 = vmatprep.subr.mxu0 0.0
    %1132 = vmatpush1.msra.mxu0 0.0
    %1133 = vmatprep.subr.mxu0 0.0
    %1134 = vmatpush1.msra.mxu0 0.0
    %1135 = vmatprep.subr.mxu0 0.0
    %1136 = vmatpush1.msra.mxu0 0.0
    %1137 = vmatprep.subr.mxu0 0.0
    %1138 = vmatpush1.msra.mxu0 0.0
    %1139 = vmatprep.subr.mxu0 0.0
    %1140 = vmatpush1.msra.mxu0 0.0
    %1141 = vmatprep.subr.mxu0 0.0
    %1142 = vmatpush1.msra.mxu0 0.0
    %1143 = vmatprep.subr.mxu0 0.0
    %1144 = vmatpush1.msra.mxu0 0.0
    %1145 = vmatprep.subr.mxu0 0.0
    %1146 = vmatpush1.msra.mxu0 0.0
    %1147 = vmatprep.subr.mxu0 0.0
    %1148 = vmatpush1.msra.mxu0 0.0
    %1149 = vmatprep.subr.mxu0 0.0
    %1150 = vmatpush1.msra.mxu0 0.0
    %1151 = vmatprep.subr.mxu0 0.0
    %1152 = vmatpush1.msra.mxu0 0.0
    %1153 = vmatprep.subr.mxu0 0.0
    %1154 = vmatpush1.msra.mxu0 0.0
    %1155 = vmatprep.subr.mxu0 0.0
    %1156 = vmatpush1.msra.mxu0 0.0
    %1157 = vmatprep.subr.mxu0 0.0
    %1158 = vmatpush1.msra.mxu0 0.0
    %1159 = vmatprep.subr.mxu0 0.0
    %1160 = vmatpush1.msra.mxu0 0.0
    %1161 = vmatprep.subr.mxu0 0.0
    %1162 = vmatpush1.msra.mxu0 0.0
    %1163 = vmatprep.subr.mxu0 0.0
    %1164 = vmatpush1.msra.mxu0 0.0
    %1165 = vmatprep.subr.mxu0 0.0
    %1166 = vmatpush1.msra.mxu0 0.0
    %1167 = vmatprep.mubr.f32.mxu0 0.0
    %1168 = vmatmul.mubr.f32.gmra.mrb[0].mxu0 %v1080
    %v1169 = vpop.f32.mrb[0].mxu0
    %v1170 = vadd.f32 0.0, %v1169
    %v1171 = vpop.f32.mrb[0].mxu0
    %1172 = vmatprep.mubr.f32.mxu0 0.0
    %1173 = vmatmul.mubr.f32.gmra.mrb[0].mxu0 %v1083
    %v1174 = vpop.f32.mrb[0].mxu0
    %v1175 = vadd.f32 0.0, %v1174
    %v1176 = vpop.f32.mrb[0].mxu0
    %1177 = vmatprep.mubr.f32.mxu0 0.0
    %1178 = vmatmul.mubr.f32.gmra.mrb[0].mxu0 %v1086
    %v1179 = vpop.f32.mrb[0].mxu0
    %v1180 = vadd.f32 0.0, %v1179
    %v1181 = vpop.f32.mrb[0].mxu0
    %1182 = vmatprep.mubr.f32.mxu0 0.0
    %1183 = vmatmul.mubr.f32.gmra.mrb[0].mxu0 %v1089
    %v1184 = vpop.f32.mrb[0].mxu0
    %v1185 = vadd.f32 0.0, %v1184
    %v1186 = vpop.f32.mrb[0].mxu0
    %1187 = vmatprep.mubr.f32.mxu0 0.0
    %1188 = vmatmul.mubr.f32.gmra.mrb[0].mxu0 %v1092
    %v1189 = vpop.f32.mrb[0].mxu0
    %v1190 = vadd.f32 0.0, %v1189
    %v1191 = vpop.f32.mrb[0].mxu0
    %1192 = vmatprep.mubr.f32.mxu0 0.0
    %1193 = vmatmul.mubr.f32.gmra.mrb[0].mxu0 %v1095
    %v1194 = vpop.f32.mrb[0].mxu0
    %v1195 = vadd.f32 0.0, %v1194
    %v1196 = vpop.f32.mrb[0].mxu0
    %1197 = vmatprep.mubr.f32.mxu0 0.0
    %1198 = vmatmul.mubr.f32.gmra.mrb[0].mxu0 %v1098
    %v1199 = vpop.f32.mrb[0].mxu0
    %v1200 = vadd.f32 0.0, %v1199
    %v1201 = vpop.f32.mrb[0].mxu0
    %1202 = vmatprep.mubr.f32.mxu0 0.0
    %1203 = vmatmul.mubr.f32.gmra.mrb[0].mxu0 %v1101
    %v1204 = vpop.f32.mrb[0].mxu0
    %v1205 = vadd.f32 0.0, %v1204
    %v1206 = vpop.f32.mrb[0].mxu0
    %1207 = vdwg.mxu0
    %v1208 = vld [vmem:[%s12] sm:$0xff]
    %v1209 = vld [vmem:[%s12 + $0x8] sm:$0xff]
    %v1210 = vld [vmem:[%s12 + $0x10] sm:$0xff]
    %v1211 = vld [vmem:[%s12 + $0x18] sm:$0xff]
    %1213 = vset.pattern.permute.xlu0 0
    %1214 = vperm.xlu0 %1213, %v1208
    %v1215 = vpop.permute.xlu0 %1214
    %1218 = vset.pattern.permute.xlu0 0
    %1219 = vperm.xlu0 %1218, %v1209
    %v1220 = vpop.permute.xlu0 %1219
    %1223 = vset.pattern.permute.xlu0 0
    %1224 = vperm.xlu0 %1223, %v1210
    %v1225 = vpop.permute.xlu0 %1224
    %1228 = vset.pattern.permute.xlu0 0
    %1229 = vperm.xlu0 %1228, %v1211
    %v1230 = vpop.permute.xlu0 %1229
    %v1233 = vsel %vm355, %v83, 0
    %v1236 = vsel %vm355, %v84, 0
    %v1239 = vsel %vm355, %v85, 0
    %v1242 = vsel %vm355, %v86, 0
    %1244 = vmatprep.subr.mxu0 0.0
    %1245 = vmatpush1.msra.mxu0 %v1170
    %1246 = vmatprep.subr.mxu0 0.0
    %1247 = vmatpush1.msra.mxu0 %v1175
    %1248 = vmatprep.subr.mxu0 0.0
    %1249 = vmatpush1.msra.mxu0 %v1180
    %1250 = vmatprep.subr.mxu0 0.0
    %1251 = vmatpush1.msra.mxu0 %v1185
    %1252 = vmatprep.subr.mxu0 0.0
    %1253 = vmatpush1.msra.mxu0 %v1190
    %1254 = vmatprep.subr.mxu0 0.0
    %1255 = vmatpush1.msra.mxu0 %v1195
    %1256 = vmatprep.subr.mxu0 0.0
    %1257 = vmatpush1.msra.mxu0 %v1200
    %1258 = vmatprep.subr.mxu0 0.0
    %1259 = vmatpush1.msra.mxu0 %v1205
    %1260 = vmatprep.subr.mxu0 0.0
    %1261 = vmatpush1.msra.mxu0 0.0
    %1262 = vmatprep.subr.mxu0 0.0
    %1263 = vmatpush1.msra.mxu0 0.0
    %1264 = vmatprep.subr.mxu0 0.0
    %1265 = vmatpush1.msra.mxu0 0.0
    %1266 = vmatprep.subr.mxu0 0.0
    %1267 = vmatpush1.msra.mxu0 0.0
    %1268 = vmatprep.subr.mxu0 0.0
    %1269 = vmatpush1.msra.mxu0 0.0
    %1270 = vmatprep.subr.mxu0 0.0
    %1271 = vmatpush1.msra.mxu0 0.0
    %1272 = vmatprep.subr.mxu0 0.0
    %1273 = vmatpush1.msra.mxu0 0.0
    %1274 = vmatprep.subr.mxu0 0.0
    %1275 = vmatpush1.msra.mxu0 0.0
    %1276 = vmatprep.subr.mxu0 0.0
    %1277 = vmatpush1.msra.mxu0 0.0
    %1278 = vmatprep.subr.mxu0 0.0
    %1279 = vmatpush1.msra.mxu0 0.0
    %1280 = vmatprep.subr.mxu0 0.0
    %1281 = vmatpush1.msra.mxu0 0.0
    %1282 = vmatprep.subr.mxu0 0.0
    %1283 = vmatpush1.msra.mxu0 0.0
    %1284 = vmatprep.subr.mxu0 0.0
    %1285 = vmatpush1.msra.mxu0 0.0
    %1286 = vmatprep.subr.mxu0 0.0
    %1287 = vmatpush1.msra.mxu0 0.0
    %1288 = vmatprep.subr.mxu0 0.0
    %1289 = vmatpush1.msra.mxu0 0.0
    %1290 = vmatprep.subr.mxu0 0.0
    %1291 = vmatpush1.msra.mxu0 0.0
    %1292 = vmatprep.subr.mxu0 0.0
    %1293 = vmatpush1.msra.mxu0 0.0
    %1294 = vmatprep.subr.mxu0 0.0
    %1295 = vmatpush1.msra.mxu0 0.0
    %1296 = vmatprep.subr.mxu0 0.0
    %1297 = vmatpush1.msra.mxu0 0.0
    %1298 = vmatprep.subr.mxu0 0.0
    %1299 = vmatpush1.msra.mxu0 0.0
    %1300 = vmatprep.subr.mxu0 0.0
    %1301 = vmatpush1.msra.mxu0 0.0
    %1302 = vmatprep.subr.mxu0 0.0
    %1303 = vmatpush1.msra.mxu0 0.0
    %1304 = vmatprep.subr.mxu0 0.0
    %1305 = vmatpush1.msra.mxu0 0.0
    %1306 = vmatprep.subr.mxu0 0.0
    %1307 = vmatpush1.msra.mxu0 0.0
    %1308 = vmatprep.mubr.f32.mxu0 0.0
    %1309 = vmatmul.mubr.f32.gmra.mrb[0].mxu0 %v1233
    %v1310 = vpop.f32.mrb[0].mxu0
    %v1311 = vadd.f32 %v1215, %v1310
    %v1312 = vpop.f32.mrb[0].mxu0
    %1313 = vmatprep.mubr.f32.mxu0 0.0
    %1314 = vmatmul.mubr.f32.gmra.mrb[0].mxu0 %v1236
    %v1315 = vpop.f32.mrb[0].mxu0
    %v1316 = vadd.f32 %v1220, %v1315
    %v1317 = vpop.f32.mrb[0].mxu0
    %1318 = vmatprep.mubr.f32.mxu0 0.0
    %1319 = vmatmul.mubr.f32.gmra.mrb[0].mxu0 %v1239
    %v1320 = vpop.f32.mrb[0].mxu0
    %v1321 = vadd.f32 %v1225, %v1320
    %v1322 = vpop.f32.mrb[0].mxu0
    %1323 = vmatprep.mubr.f32.mxu0 0.0
    %1324 = vmatmul.mubr.f32.gmra.mrb[0].mxu0 %v1242
    %v1325 = vpop.f32.mrb[0].mxu0
    %v1326 = vadd.f32 %v1230, %v1325
    %v1327 = vpop.f32.mrb[0].mxu0
    %1328 = vdwg.mxu0
    %v1329 = vsel %vm503, %v1311, 0.0
    %1330 = vadd.xlane.f32.xlu0 %v1329
    %v1331 = vpop.xlane.xlu0 %1330
    %v1332 = vsel %vm503, %v1316, 0.0
    %1333 = vadd.xlane.f32.xlu0 %v1332
    %v1334 = vpop.xlane.xlu0 %1333
    %v1335 = vsel %vm503, %v1321, 0.0
    %1336 = vadd.xlane.f32.xlu0 %v1335
    %v1337 = vpop.xlane.xlu0 %1336
    %v1338 = vsel %vm503, %v1326, 0.0
    %1339 = vadd.xlane.f32.xlu0 %v1338
    %v1340 = vpop.xlane.xlu0 %1339
    %v1341 = vrcp.pop 8.0
    %v1342 = vmul.f32 %v1331, %v1341
    %v1343 = vmul.f32 %v1334, %v1341
    %v1344 = vmul.f32 %v1337, %v1341
    %v1345 = vmul.f32 %v1340, %v1341
    %v1346 = vld [vmem:[%s13] sm:$0x1f]
    %v1348 = vsel %vm224, %v1346, 0
    %1350 = vmatprep.subr.mxu0 0.0
    %1351 = vmatpush1.msra.mxu0 %v1342
    %1352 = vmatprep.subr.mxu0 0.0
    %1353 = vmatpush1.msra.mxu0 %v1343
    %1354 = vmatprep.subr.mxu0 0.0
    %1355 = vmatpush1.msra.mxu0 %v1344
    %1356 = vmatprep.subr.mxu0 0.0
    %1357 = vmatpush1.msra.mxu0 %v1345
    %1358 = vmatprep.subr.mxu0 0.0
    %1359 = vmatpush1.msra.mxu0 0.0
    %1360 = vmatprep.subr.mxu0 0.0
    %1361 = vmatpush1.msra.mxu0 0.0
    %1362 = vmatprep.subr.mxu0 0.0
    %1363 = vmatpush1.msra.mxu0 0.0
    %1364 = vmatprep.subr.mxu0 0.0
    %1365 = vmatpush1.msra.mxu0 0.0
    %1366 = vmatprep.subr.mxu0 0.0
    %1367 = vmatpush1.msra.mxu0 0.0
    %1368 = vmatprep.subr.mxu0 0.0
    %1369 = vmatpush1.msra.mxu0 0.0
    %1370 = vmatprep.subr.mxu0 0.0
    %1371 = vmatpush1.msra.mxu0 0.0
    %1372 = vmatprep.subr.mxu0 0.0
    %1373 = vmatpush1.msra.mxu0 0.0
    %1374 = vmatprep.subr.mxu0 0.0
    %1375 = vmatpush1.msra.mxu0 0.0
    %1376 = vmatprep.subr.mxu0 0.0
    %1377 = vmatpush1.msra.mxu0 0.0
    %1378 = vmatprep.subr.mxu0 0.0
    %1379 = vmatpush1.msra.mxu0 0.0
    %1380 = vmatprep.subr.mxu0 0.0
    %1381 = vmatpush1.msra.mxu0 0.0
    %1382 = vmatprep.subr.mxu0 0.0
    %1383 = vmatpush1.msra.mxu0 0.0
    %1384 = vmatprep.subr.mxu0 0.0
    %1385 = vmatpush1.msra.mxu0 0.0
    %1386 = vmatprep.subr.mxu0 0.0
    %1387 = vmatpush1.msra.mxu0 0.0
    %1388 = vmatprep.subr.mxu0 0.0
    %1389 = vmatpush1.msra.mxu0 0.0
    %1390 = vmatprep.subr.mxu0 0.0
    %1391 = vmatpush1.msra.mxu0 0.0
    %1392 = vmatprep.subr.mxu0 0.0
    %1393 = vmatpush1.msra.mxu0 0.0
    %1394 = vmatprep.subr.mxu0 0.0
    %1395 = vmatpush1.msra.mxu0 0.0
    %1396 = vmatprep.subr.mxu0 0.0
    %1397 = vmatpush1.msra.mxu0 0.0
    %1398 = vmatprep.subr.mxu0 0.0
    %1399 = vmatpush1.msra.mxu0 0.0
    %1400 = vmatprep.subr.mxu0 0.0
    %1401 = vmatpush1.msra.mxu0 0.0
    %1402 = vmatprep.subr.mxu0 0.0
    %1403 = vmatpush1.msra.mxu0 0.0
    %1404 = vmatprep.subr.mxu0 0.0
    %1405 = vmatpush1.msra.mxu0 0.0
    %1406 = vmatprep.subr.mxu0 0.0
    %1407 = vmatpush1.msra.mxu0 0.0
    %1408 = vmatprep.subr.mxu0 0.0
    %1409 = vmatpush1.msra.mxu0 0.0
    %1410 = vmatprep.subr.mxu0 0.0
    %1411 = vmatpush1.msra.mxu0 0.0
    %1412 = vmatprep.subr.mxu0 0.0
    %1413 = vmatpush1.msra.mxu0 0.0
    %1414 = vmatprep.mubr.f32.mxu0 0.0
    %1415 = vmatmul.mubr.f32.gmra.mrb[0].mxu0 %v1348
    %v1416 = vpop.f32.mrb[0].mxu0
    %v1417 = vadd.f32 0.0, %v1416
    %v1418 = vpop.f32.mrb[0].mxu0
    %1419 = vdwg.mxu0
    %v1420 = vadd.f32 %v215, %v1417
    %1421 = vst.msk [vmem:[#allocation2] sm:$0x3] %vm653, %v807
    %vm1422 = vcmp.gt.f32.partialorder %v1311, 0.0
    %vm1423 = vcmp.gt.f32.partialorder %v1316, 0.0
    %vm1424 = vcmp.gt.f32.partialorder %v1321, 0.0
    %vm1425 = vcmp.gt.f32.partialorder %v1326, 0.0
    %v1426 = vmul.f32 %v1311, 0.2
    %v1427 = vmul.f32 %v1316, 0.2
    %v1428 = vmul.f32 %v1321, 0.2
    %v1429 = vmul.f32 %v1326, 0.2
    %v1430 = vsel %vm1422, %v1311, %v1426
    %v1431 = vsel %vm1423, %v1316, %v1427
    %v1432 = vsel %vm1424, %v1321, %v1428
    %v1433 = vsel %vm1425, %v1326, %v1429
    %s1434 = scalar_lea.vmem %s7, 64
    %v1435 = vld [vmem:[%s1434] sm:$0xff]
    %v1436 = vld [vmem:[%s1434 + $0x8] sm:$0xff]
    %v1437 = vld [vmem:[%s1434 + $0x10] sm:$0xff]
    %v1438 = vld [vmem:[%s1434 + $0x18] sm:$0xff]
    %v1439 = vld [vmem:[%s1434 + $0x20] sm:$0xff]
    %v1440 = vld [vmem:[%s1434 + $0x28] sm:$0xff]
    %v1441 = vld [vmem:[%s1434 + $0x30] sm:$0xff]
    %v1442 = vld [vmem:[%s1434 + $0x38] sm:$0xff]
    %v1444 = vsel %vm224, %v1435, 0
    %v1447 = vsel %vm224, %v1436, 0
    %v1450 = vsel %vm224, %v1437, 0
    %v1453 = vsel %vm224, %v1438, 0
    %v1456 = vsel %vm224, %v1439, 0
    %v1459 = vsel %vm224, %v1440, 0
    %v1462 = vsel %vm224, %v1441, 0
    %v1465 = vsel %vm224, %v1442, 0
    %1467 = vmatprep.subr.mxu0 0.0
    %1468 = vmatpush1.msra.mxu0 %v1430
    %1469 = vmatprep.subr.mxu0 0.0
    %1470 = vmatpush1.msra.mxu0 %v1431
    %1471 = vmatprep.subr.mxu0 0.0
    %1472 = vmatpush1.msra.mxu0 %v1432
    %1473 = vmatprep.subr.mxu0 0.0
    %1474 = vmatpush1.msra.mxu0 %v1433
    %1475 = vmatprep.subr.mxu0 0.0
    %1476 = vmatpush1.msra.mxu0 0.0
    %1477 = vmatprep.subr.mxu0 0.0
    %1478 = vmatpush1.msra.mxu0 0.0
    %1479 = vmatprep.subr.mxu0 0.0
    %1480 = vmatpush1.msra.mxu0 0.0
    %1481 = vmatprep.subr.mxu0 0.0
    %1482 = vmatpush1.msra.mxu0 0.0
    %1483 = vmatprep.subr.mxu0 0.0
    %1484 = vmatpush1.msra.mxu0 0.0
    %1485 = vmatprep.subr.mxu0 0.0
    %1486 = vmatpush1.msra.mxu0 0.0
    %1487 = vmatprep.subr.mxu0 0.0
    %1488 = vmatpush1.msra.mxu0 0.0
    %1489 = vmatprep.subr.mxu0 0.0
    %1490 = vmatpush1.msra.mxu0 0.0
    %1491 = vmatprep.subr.mxu0 0.0
    %1492 = vmatpush1.msra.mxu0 0.0
    %1493 = vmatprep.subr.mxu0 0.0
    %1494 = vmatpush1.msra.mxu0 0.0
    %1495 = vmatprep.subr.mxu0 0.0
    %1496 = vmatpush1.msra.mxu0 0.0
    %1497 = vmatprep.subr.mxu0 0.0
    %1498 = vmatpush1.msra.mxu0 0.0
    %1499 = vmatprep.subr.mxu0 0.0
    %1500 = vmatpush1.msra.mxu0 0.0
    %1501 = vmatprep.subr.mxu0 0.0
    %1502 = vmatpush1.msra.mxu0 0.0
    %1503 = vmatprep.subr.mxu0 0.0
    %1504 = vmatpush1.msra.mxu0 0.0
    %1505 = vmatprep.subr.mxu0 0.0
    %1506 = vmatpush1.msra.mxu0 0.0
    %1507 = vmatprep.subr.mxu0 0.0
    %1508 = vmatpush1.msra.mxu0 0.0
    %1509 = vmatprep.subr.mxu0 0.0
    %1510 = vmatpush1.msra.mxu0 0.0
    %1511 = vmatprep.subr.mxu0 0.0
    %1512 = vmatpush1.msra.mxu0 0.0
    %1513 = vmatprep.subr.mxu0 0.0
    %1514 = vmatpush1.msra.mxu0 0.0
    %1515 = vmatprep.subr.mxu0 0.0
    %1516 = vmatpush1.msra.mxu0 0.0
    %1517 = vmatprep.subr.mxu0 0.0
    %1518 = vmatpush1.msra.mxu0 0.0
    %1519 = vmatprep.subr.mxu0 0.0
    %1520 = vmatpush1.msra.mxu0 0.0
    %1521 = vmatprep.subr.mxu0 0.0
    %1522 = vmatpush1.msra.mxu0 0.0
    %1523 = vmatprep.subr.mxu0 0.0
    %1524 = vmatpush1.msra.mxu0 0.0
    %1525 = vmatprep.subr.mxu0 0.0
    %1526 = vmatpush1.msra.mxu0 0.0
    %1527 = vmatprep.subr.mxu0 0.0
    %1528 = vmatpush1.msra.mxu0 0.0
    %1529 = vmatprep.subr.mxu0 0.0
    %1530 = vmatpush1.msra.mxu0 0.0
    %1531 = vmatprep.mubr.f32.mxu0 0.0
    %1532 = vmatmul.mubr.f32.gmra.mrb[0].mxu0 %v1444
    %v1533 = vpop.f32.mrb[0].mxu0
    %v1534 = vadd.f32 0.0, %v1533
    %v1535 = vpop.f32.mrb[0].mxu0
    %1536 = vmatprep.mubr.f32.mxu0 0.0
    %1537 = vmatmul.mubr.f32.gmra.mrb[0].mxu0 %v1447
    %v1538 = vpop.f32.mrb[0].mxu0
    %v1539 = vadd.f32 0.0, %v1538
    %v1540 = vpop.f32.mrb[0].mxu0
    %1541 = vmatprep.mubr.f32.mxu0 0.0
    %1542 = vmatmul.mubr.f32.gmra.mrb[0].mxu0 %v1450
    %v1543 = vpop.f32.mrb[0].mxu0
    %v1544 = vadd.f32 0.0, %v1543
    %v1545 = vpop.f32.mrb[0].mxu0
    %1546 = vmatprep.mubr.f32.mxu0 0.0
    %1547 = vmatmul.mubr.f32.gmra.mrb[0].mxu0 %v1453
    %v1548 = vpop.f32.mrb[0].mxu0
    %v1549 = vadd.f32 0.0, %v1548
    %v1550 = vpop.f32.mrb[0].mxu0
    %1551 = vmatprep.mubr.f32.mxu0 0.0
    %1552 = vmatmul.mubr.f32.gmra.mrb[0].mxu0 %v1456
    %v1553 = vpop.f32.mrb[0].mxu0
    %v1554 = vadd.f32 0.0, %v1553
    %v1555 = vpop.f32.mrb[0].mxu0
    %1556 = vmatprep.mubr.f32.mxu0 0.0
    %1557 = vmatmul.mubr.f32.gmra.mrb[0].mxu0 %v1459
    %v1558 = vpop.f32.mrb[0].mxu0
    %v1559 = vadd.f32 0.0, %v1558
    %v1560 = vpop.f32.mrb[0].mxu0
    %1561 = vmatprep.mubr.f32.mxu0 0.0
    %1562 = vmatmul.mubr.f32.gmra.mrb[0].mxu0 %v1462
    %v1563 = vpop.f32.mrb[0].mxu0
    %v1564 = vadd.f32 0.0, %v1563
    %v1565 = vpop.f32.mrb[0].mxu0
    %1566 = vmatprep.mubr.f32.mxu0 0.0
    %1567 = vmatmul.mubr.f32.gmra.mrb[0].mxu0 %v1465
    %v1568 = vpop.f32.mrb[0].mxu0
    %v1569 = vadd.f32 0.0, %v1568
    %v1570 = vpop.f32.mrb[0].mxu0
    %1571 = vdwg.mxu0
    %s1572 = scalar_lea.vmem %s8, 2
    %v1573 = vld [vmem:[%s1572] sm:$0x3]
    %v1575 = vsel %vm355, %v1573, 0
    %1577 = vmatprep.subr.mxu0 0.0
    %1578 = vmatpush1.msra.mxu0 %v1534
    %1579 = vmatprep.subr.mxu0 0.0
    %1580 = vmatpush1.msra.mxu0 %v1539
    %1581 = vmatprep.subr.mxu0 0.0
    %1582 = vmatpush1.msra.mxu0 %v1544
    %1583 = vmatprep.subr.mxu0 0.0
    %1584 = vmatpush1.msra.mxu0 %v1549
    %1585 = vmatprep.subr.mxu0 0.0
    %1586 = vmatpush1.msra.mxu0 %v1554
    %1587 = vmatprep.subr.mxu0 0.0
    %1588 = vmatpush1.msra.mxu0 %v1559
    %1589 = vmatprep.subr.mxu0 0.0
    %1590 = vmatpush1.msra.mxu0 %v1564
    %1591 = vmatprep.subr.mxu0 0.0
    %1592 = vmatpush1.msra.mxu0 %v1569
    %1593 = vmatprep.subr.mxu0 0.0
    %1594 = vmatpush1.msra.mxu0 0.0
    %1595 = vmatprep.subr.mxu0 0.0
    %1596 = vmatpush1.msra.mxu0 0.0
    %1597 = vmatprep.subr.mxu0 0.0
    %1598 = vmatpush1.msra.mxu0 0.0
    %1599 = vmatprep.subr.mxu0 0.0
    %1600 = vmatpush1.msra.mxu0 0.0
    %1601 = vmatprep.subr.mxu0 0.0
    %1602 = vmatpush1.msra.mxu0 0.0
    %1603 = vmatprep.subr.mxu0 0.0
    %1604 = vmatpush1.msra.mxu0 0.0
    %1605 = vmatprep.subr.mxu0 0.0
    %1606 = vmatpush1.msra.mxu0 0.0
    %1607 = vmatprep.subr.mxu0 0.0
    %1608 = vmatpush1.msra.mxu0 0.0
    %1609 = vmatprep.subr.mxu0 0.0
    %1610 = vmatpush1.msra.mxu0 0.0
    %1611 = vmatprep.subr.mxu0 0.0
    %1612 = vmatpush1.msra.mxu0 0.0
    %1613 = vmatprep.subr.mxu0 0.0
    %1614 = vmatpush1.msra.mxu0 0.0
    %1615 = vmatprep.subr.mxu0 0.0
    %1616 = vmatpush1.msra.mxu0 0.0
    %1617 = vmatprep.subr.mxu0 0.0
    %1618 = vmatpush1.msra.mxu0 0.0
    %1619 = vmatprep.subr.mxu0 0.0
    %1620 = vmatpush1.msra.mxu0 0.0
    %1621 = vmatprep.subr.mxu0 0.0
    %1622 = vmatpush1.msra.mxu0 0.0
    %1623 = vmatprep.subr.mxu0 0.0
    %1624 = vmatpush1.msra.mxu0 0.0
    %1625 = vmatprep.subr.mxu0 0.0
    %1626 = vmatpush1.msra.mxu0 0.0
    %1627 = vmatprep.subr.mxu0 0.0
    %1628 = vmatpush1.msra.mxu0 0.0
    %1629 = vmatprep.subr.mxu0 0.0
    %1630 = vmatpush1.msra.mxu0 0.0
    %1631 = vmatprep.subr.mxu0 0.0
    %1632 = vmatpush1.msra.mxu0 0.0
    %1633 = vmatprep.subr.mxu0 0.0
    %1634 = vmatpush1.msra.mxu0 0.0
    %1635 = vmatprep.subr.mxu0 0.0
    %1636 = vmatpush1.msra.mxu0 0.0
    %1637 = vmatprep.subr.mxu0 0.0
    %1638 = vmatpush1.msra.mxu0 0.0
    %1639 = vmatprep.subr.mxu0 0.0
    %1640 = vmatpush1.msra.mxu0 0.0
    %1641 = vmatprep.mubr.f32.mxu0 0.0
    %1642 = vmatmul.mubr.f32.gmra.mrb[0].mxu0 %v1575
    %v1643 = vpop.f32.mrb[0].mxu0
    %v1644 = vadd.f32 0.0, %v1643
    %v1645 = vpop.f32.mrb[0].mxu0
    %1646 = vdwg.mxu0
    %s1647 = scalar_lea.vmem %s9, 2
    %v1648 = vld [vmem:[%s1647] sm:$0x3]
    %v1650 = vsel %vm355, %v1648, 0
    %1652 = vmatprep.subr.mxu0 0.0
    %1653 = vmatpush1.msra.mxu0 %v1534
    %1654 = vmatprep.subr.mxu0 0.0
    %1655 = vmatpush1.msra.mxu0 %v1539
    %1656 = vmatprep.subr.mxu0 0.0
    %1657 = vmatpush1.msra.mxu0 %v1544
    %1658 = vmatprep.subr.mxu0 0.0
    %1659 = vmatpush1.msra.mxu0 %v1549
    %1660 = vmatprep.subr.mxu0 0.0
    %1661 = vmatpush1.msra.mxu0 %v1554
    %1662 = vmatprep.subr.mxu0 0.0
    %1663 = vmatpush1.msra.mxu0 %v1559
    %1664 = vmatprep.subr.mxu0 0.0
    %1665 = vmatpush1.msra.mxu0 %v1564
    %1666 = vmatprep.subr.mxu0 0.0
    %1667 = vmatpush1.msra.mxu0 %v1569
    %1668 = vmatprep.subr.mxu0 0.0
    %1669 = vmatpush1.msra.mxu0 0.0
    %1670 = vmatprep.subr.mxu0 0.0
    %1671 = vmatpush1.msra.mxu0 0.0
    %1672 = vmatprep.subr.mxu0 0.0
    %1673 = vmatpush1.msra.mxu0 0.0
    %1674 = vmatprep.subr.mxu0 0.0
    %1675 = vmatpush1.msra.mxu0 0.0
    %1676 = vmatprep.subr.mxu0 0.0
    %1677 = vmatpush1.msra.mxu0 0.0
    %1678 = vmatprep.subr.mxu0 0.0
    %1679 = vmatpush1.msra.mxu0 0.0
    %1680 = vmatprep.subr.mxu0 0.0
    %1681 = vmatpush1.msra.mxu0 0.0
    %1682 = vmatprep.subr.mxu0 0.0
    %1683 = vmatpush1.msra.mxu0 0.0
    %1684 = vmatprep.subr.mxu0 0.0
    %1685 = vmatpush1.msra.mxu0 0.0
    %1686 = vmatprep.subr.mxu0 0.0
    %1687 = vmatpush1.msra.mxu0 0.0
    %1688 = vmatprep.subr.mxu0 0.0
    %1689 = vmatpush1.msra.mxu0 0.0
    %1690 = vmatprep.subr.mxu0 0.0
    %1691 = vmatpush1.msra.mxu0 0.0
    %1692 = vmatprep.subr.mxu0 0.0
    %1693 = vmatpush1.msra.mxu0 0.0
    %1694 = vmatprep.subr.mxu0 0.0
    %1695 = vmatpush1.msra.mxu0 0.0
    %1696 = vmatprep.subr.mxu0 0.0
    %1697 = vmatpush1.msra.mxu0 0.0
    %1698 = vmatprep.subr.mxu0 0.0
    %1699 = vmatpush1.msra.mxu0 0.0
    %1700 = vmatprep.subr.mxu0 0.0
    %1701 = vmatpush1.msra.mxu0 0.0
    %1702 = vmatprep.subr.mxu0 0.0
    %1703 = vmatpush1.msra.mxu0 0.0
    %1704 = vmatprep.subr.mxu0 0.0
    %1705 = vmatpush1.msra.mxu0 0.0
    %1706 = vmatprep.subr.mxu0 0.0
    %1707 = vmatpush1.msra.mxu0 0.0
    %1708 = vmatprep.subr.mxu0 0.0
    %1709 = vmatpush1.msra.mxu0 0.0
    %1710 = vmatprep.subr.mxu0 0.0
    %1711 = vmatpush1.msra.mxu0 0.0
    %1712 = vmatprep.subr.mxu0 0.0
    %1713 = vmatpush1.msra.mxu0 0.0
    %1714 = vmatprep.subr.mxu0 0.0
    %1715 = vmatpush1.msra.mxu0 0.0
    %1716 = vmatprep.mubr.f32.mxu0 0.0
    %1717 = vmatmul.mubr.f32.gmra.mrb[0].mxu0 %v1650
    %v1718 = vpop.f32.mrb[0].mxu0
    %v1719 = vadd.f32 0.0, %v1718
    %v1720 = vpop.f32.mrb[0].mxu0
    %1721 = vdwg.mxu0
    %v1723 = vsel %vm503, %v1719, 0
    %1725 = vmatprep.subr.mxu0 0.0
    %1726 = vmatpush1.msra.mxu0 %v74
    %1727 = vmatprep.subr.mxu0 0.0
    %1728 = vmatpush1.msra.mxu0 0.0
    %1729 = vmatprep.subr.mxu0 0.0
    %1730 = vmatpush1.msra.mxu0 0.0
    %1731 = vmatprep.subr.mxu0 0.0
    %1732 = vmatpush1.msra.mxu0 0.0
    %1733 = vmatprep.subr.mxu0 0.0
    %1734 = vmatpush1.msra.mxu0 0.0
    %1735 = vmatprep.subr.mxu0 0.0
    %1736 = vmatpush1.msra.mxu0 0.0
    %1737 = vmatprep.subr.mxu0 0.0
    %1738 = vmatpush1.msra.mxu0 0.0
    %1739 = vmatprep.subr.mxu0 0.0
    %1740 = vmatpush1.msra.mxu0 0.0
    %1741 = vmatprep.subr.mxu0 0.0
    %1742 = vmatpush1.msra.mxu0 0.0
    %1743 = vmatprep.subr.mxu0 0.0
    %1744 = vmatpush1.msra.mxu0 0.0
    %1745 = vmatprep.subr.mxu0 0.0
    %1746 = vmatpush1.msra.mxu0 0.0
    %1747 = vmatprep.subr.mxu0 0.0
    %1748 = vmatpush1.msra.mxu0 0.0
    %1749 = vmatprep.subr.mxu0 0.0
    %1750 = vmatpush1.msra.mxu0 0.0
    %1751 = vmatprep.subr.mxu0 0.0
    %1752 = vmatpush1.msra.mxu0 0.0
    %1753 = vmatprep.subr.mxu0 0.0
    %1754 = vmatpush1.msra.mxu0 0.0
    %1755 = vmatprep.subr.mxu0 0.0
    %1756 = vmatpush1.msra.mxu0 0.0
    %1757 = vmatprep.subr.mxu0 0.0
    %1758 = vmatpush1.msra.mxu0 0.0
    %1759 = vmatprep.subr.mxu0 0.0
    %1760 = vmatpush1.msra.mxu0 0.0
    %1761 = vmatprep.subr.mxu0 0.0
    %1762 = vmatpush1.msra.mxu0 0.0
    %1763 = vmatprep.subr.mxu0 0.0
    %1764 = vmatpush1.msra.mxu0 0.0
    %1765 = vmatprep.subr.mxu0 0.0
    %1766 = vmatpush1.msra.mxu0 0.0
    %1767 = vmatprep.subr.mxu0 0.0
    %1768 = vmatpush1.msra.mxu0 0.0
    %1769 = vmatprep.subr.mxu0 0.0
    %1770 = vmatpush1.msra.mxu0 0.0
    %1771 = vmatprep.subr.mxu0 0.0
    %1772 = vmatpush1.msra.mxu0 0.0
    %1773 = vmatprep.subr.mxu0 0.0
    %1774 = vmatpush1.msra.mxu0 0.0
    %1775 = vmatprep.subr.mxu0 0.0
    %1776 = vmatpush1.msra.mxu0 0.0
    %1777 = vmatprep.subr.mxu0 0.0
    %1778 = vmatpush1.msra.mxu0 0.0
    %1779 = vmatprep.subr.mxu0 0.0
    %1780 = vmatpush1.msra.mxu0 0.0
    %1781 = vmatprep.subr.mxu0 0.0
    %1782 = vmatpush1.msra.mxu0 0.0
    %1783 = vmatprep.subr.mxu0 0.0
    %1784 = vmatpush1.msra.mxu0 0.0
    %1785 = vmatprep.subr.mxu0 0.0
    %1786 = vmatpush1.msra.mxu0 0.0
    %1787 = vmatprep.subr.mxu0 0.0
    %1788 = vmatpush1.msra.mxu0 0.0
    %1789 = vmatprep.mubr.f32.mxu0 0.0
    %1790 = vmatmul.mubr.f32.gmra.mrb[0].mxu0 %v1723
    %v1791 = vpop.f32.mrb[0].mxu0
    %v1792 = vadd.f32 0.0, %v1791
    %v1793 = vpop.f32.mrb[0].mxu0
    %1794 = vdwg.mxu0
    %v1796 = vsel %vm503, %v1644, 0
    %1798 = vmatprep.subr.mxu0 0.0
    %1799 = vmatpush1.msra.mxu0 %v71
    %1800 = vmatprep.subr.mxu0 0.0
    %1801 = vmatpush1.msra.mxu0 0.0
    %1802 = vmatprep.subr.mxu0 0.0
    %1803 = vmatpush1.msra.mxu0 0.0
    %1804 = vmatprep.subr.mxu0 0.0
    %1805 = vmatpush1.msra.mxu0 0.0
    %1806 = vmatprep.subr.mxu0 0.0
    %1807 = vmatpush1.msra.mxu0 0.0
    %1808 = vmatprep.subr.mxu0 0.0
    %1809 = vmatpush1.msra.mxu0 0.0
    %1810 = vmatprep.subr.mxu0 0.0
    %1811 = vmatpush1.msra.mxu0 0.0
    %1812 = vmatprep.subr.mxu0 0.0
    %1813 = vmatpush1.msra.mxu0 0.0
    %1814 = vmatprep.subr.mxu0 0.0
    %1815 = vmatpush1.msra.mxu0 0.0
    %1816 = vmatprep.subr.mxu0 0.0
    %1817 = vmatpush1.msra.mxu0 0.0
    %1818 = vmatprep.subr.mxu0 0.0
    %1819 = vmatpush1.msra.mxu0 0.0
    %1820 = vmatprep.subr.mxu0 0.0
    %1821 = vmatpush1.msra.mxu0 0.0
    %1822 = vmatprep.subr.mxu0 0.0
    %1823 = vmatpush1.msra.mxu0 0.0
    %1824 = vmatprep.subr.mxu0 0.0
    %1825 = vmatpush1.msra.mxu0 0.0
    %1826 = vmatprep.subr.mxu0 0.0
    %1827 = vmatpush1.msra.mxu0 0.0
    %1828 = vmatprep.subr.mxu0 0.0
    %1829 = vmatpush1.msra.mxu0 0.0
    %1830 = vmatprep.subr.mxu0 0.0
    %1831 = vmatpush1.msra.mxu0 0.0
    %1832 = vmatprep.subr.mxu0 0.0
    %1833 = vmatpush1.msra.mxu0 0.0
    %1834 = vmatprep.subr.mxu0 0.0
    %1835 = vmatpush1.msra.mxu0 0.0
    %1836 = vmatprep.subr.mxu0 0.0
    %1837 = vmatpush1.msra.mxu0 0.0
    %1838 = vmatprep.subr.mxu0 0.0
    %1839 = vmatpush1.msra.mxu0 0.0
    %1840 = vmatprep.subr.mxu0 0.0
    %1841 = vmatpush1.msra.mxu0 0.0
    %1842 = vmatprep.subr.mxu0 0.0
    %1843 = vmatpush1.msra.mxu0 0.0
    %1844 = vmatprep.subr.mxu0 0.0
    %1845 = vmatpush1.msra.mxu0 0.0
    %1846 = vmatprep.subr.mxu0 0.0
    %1847 = vmatpush1.msra.mxu0 0.0
    %1848 = vmatprep.subr.mxu0 0.0
    %1849 = vmatpush1.msra.mxu0 0.0
    %1850 = vmatprep.subr.mxu0 0.0
    %1851 = vmatpush1.msra.mxu0 0.0
    %1852 = vmatprep.subr.mxu0 0.0
    %1853 = vmatpush1.msra.mxu0 0.0
    %1854 = vmatprep.subr.mxu0 0.0
    %1855 = vmatpush1.msra.mxu0 0.0
    %1856 = vmatprep.subr.mxu0 0.0
    %1857 = vmatpush1.msra.mxu0 0.0
    %1858 = vmatprep.subr.mxu0 0.0
    %1859 = vmatpush1.msra.mxu0 0.0
    %1860 = vmatprep.subr.mxu0 0.0
    %1861 = vmatpush1.msra.mxu0 0.0
    %1862 = vmatprep.mubr.f32.mxu0 0.0
    %1863 = vmatmul.mubr.f32.gmra.mrb[0].mxu0 %v1796
    %v1864 = vpop.f32.mrb[0].mxu0
    %v1865 = vadd.f32 %v1792, %v1864
    %v1866 = vpop.f32.mrb[0].mxu0
    %1867 = vdwg.mxu0
    %vm1868 = vcmp.gt.f32.partialorder %v1865, 0.0
    %v1869 = vmul.f32 %v1865, 0.2
    %v1870 = vsel %vm1868, %v1865, %v1869
    %v1871 = vsel %vm653, %v1870, -inf
    %1872 = vmax.xlane.f32.xlu0 %v1871
    %v1873 = vpop.xlane.xlu0 %1872
    %v1874 = vsub.f32 %v1870, %v1873
    %v1875 = vmul.f32 %v1874, 1.442695
    %v1876 = vpow.pop %v1875
    %v1878 = vsel %vm117, %v1876, 0
    %1880 = vmatprep.subr.mxu0 0.0
    %1881 = vmatpush1.msra.mxu0 %v72
    %1882 = vmatprep.subr.mxu0 0.0
    %1883 = vmatpush1.msra.mxu0 %v73
    %1884 = vmatprep.subr.mxu0 0.0
    %1885 = vmatpush1.msra.mxu0 0.0
    %1886 = vmatprep.subr.mxu0 0.0
    %1887 = vmatpush1.msra.mxu0 0.0
    %1888 = vmatprep.subr.mxu0 0.0
    %1889 = vmatpush1.msra.mxu0 0.0
    %1890 = vmatprep.subr.mxu0 0.0
    %1891 = vmatpush1.msra.mxu0 0.0
    %1892 = vmatprep.subr.mxu0 0.0
    %1893 = vmatpush1.msra.mxu0 0.0
    %1894 = vmatprep.subr.mxu0 0.0
    %1895 = vmatpush1.msra.mxu0 0.0
    %1896 = vmatprep.subr.mxu0 0.0
    %1897 = vmatpush1.msra.mxu0 0.0
    %1898 = vmatprep.subr.mxu0 0.0
    %1899 = vmatpush1.msra.mxu0 0.0
    %1900 = vmatprep.subr.mxu0 0.0
    %1901 = vmatpush1.msra.mxu0 0.0
    %1902 = vmatprep.subr.mxu0 0.0
    %1903 = vmatpush1.msra.mxu0 0.0
    %1904 = vmatprep.subr.mxu0 0.0
    %1905 = vmatpush1.msra.mxu0 0.0
    %1906 = vmatprep.subr.mxu0 0.0
    %1907 = vmatpush1.msra.mxu0 0.0
    %1908 = vmatprep.subr.mxu0 0.0
    %1909 = vmatpush1.msra.mxu0 0.0
    %1910 = vmatprep.subr.mxu0 0.0
    %1911 = vmatpush1.msra.mxu0 0.0
    %1912 = vmatprep.subr.mxu0 0.0
    %1913 = vmatpush1.msra.mxu0 0.0
    %1914 = vmatprep.subr.mxu0 0.0
    %1915 = vmatpush1.msra.mxu0 0.0
    %1916 = vmatprep.subr.mxu0 0.0
    %1917 = vmatpush1.msra.mxu0 0.0
    %1918 = vmatprep.subr.mxu0 0.0
    %1919 = vmatpush1.msra.mxu0 0.0
    %1920 = vmatprep.subr.mxu0 0.0
    %1921 = vmatpush1.msra.mxu0 0.0
    %1922 = vmatprep.subr.mxu0 0.0
    %1923 = vmatpush1.msra.mxu0 0.0
    %1924 = vmatprep.subr.mxu0 0.0
    %1925 = vmatpush1.msra.mxu0 0.0
    %1926 = vmatprep.subr.mxu0 0.0
    %1927 = vmatpush1.msra.mxu0 0.0
    %1928 = vmatprep.subr.mxu0 0.0
    %1929 = vmatpush1.msra.mxu0 0.0
    %1930 = vmatprep.subr.mxu0 0.0
    %1931 = vmatpush1.msra.mxu0 0.0
    %1932 = vmatprep.subr.mxu0 0.0
    %1933 = vmatpush1.msra.mxu0 0.0
    %1934 = vmatprep.subr.mxu0 0.0
    %1935 = vmatpush1.msra.mxu0 0.0
    %1936 = vmatprep.subr.mxu0 0.0
    %1937 = vmatpush1.msra.mxu0 0.0
    %1938 = vmatprep.subr.mxu0 0.0
    %1939 = vmatpush1.msra.mxu0 0.0
    %1940 = vmatprep.subr.mxu0 0.0
    %1941 = vmatpush1.msra.mxu0 0.0
    %1942 = vmatprep.subr.mxu0 0.0
    %1943 = vmatpush1.msra.mxu0 0.0
    %1944 = vmatprep.mubr.f32.mxu0 0.0
    %1945 = vmatmul.mubr.f32.gmra.mrb[0].mxu0 %v1878
    %v1946 = vpop.f32.mrb[0].mxu0
    %v1947 = vadd.f32 0.0, %v1946
    %v1948 = vpop.f32.mrb[0].mxu0
    %1949 = vdwg.mxu0
    %v1951 = vsel %vm503, %v1947, 0
    %1953 = vmatprep.subr.mxu0 0.0
    %1954 = vmatpush1.msra.mxu0 %v74
    %1955 = vmatprep.subr.mxu0 0.0
    %1956 = vmatpush1.msra.mxu0 0.0
    %1957 = vmatprep.subr.mxu0 0.0
    %1958 = vmatpush1.msra.mxu0 0.0
    %1959 = vmatprep.subr.mxu0 0.0
    %1960 = vmatpush1.msra.mxu0 0.0
    %1961 = vmatprep.subr.mxu0 0.0
    %1962 = vmatpush1.msra.mxu0 0.0
    %1963 = vmatprep.subr.mxu0 0.0
    %1964 = vmatpush1.msra.mxu0 0.0
    %1965 = vmatprep.subr.mxu0 0.0
    %1966 = vmatpush1.msra.mxu0 0.0
    %1967 = vmatprep.subr.mxu0 0.0
    %1968 = vmatpush1.msra.mxu0 0.0
    %1969 = vmatprep.subr.mxu0 0.0
    %1970 = vmatpush1.msra.mxu0 0.0
    %1971 = vmatprep.subr.mxu0 0.0
    %1972 = vmatpush1.msra.mxu0 0.0
    %1973 = vmatprep.subr.mxu0 0.0
    %1974 = vmatpush1.msra.mxu0 0.0
    %1975 = vmatprep.subr.mxu0 0.0
    %1976 = vmatpush1.msra.mxu0 0.0
    %1977 = vmatprep.subr.mxu0 0.0
    %1978 = vmatpush1.msra.mxu0 0.0
    %1979 = vmatprep.subr.mxu0 0.0
    %1980 = vmatpush1.msra.mxu0 0.0
    %1981 = vmatprep.subr.mxu0 0.0
    %1982 = vmatpush1.msra.mxu0 0.0
    %1983 = vmatprep.subr.mxu0 0.0
    %1984 = vmatpush1.msra.mxu0 0.0
    %1985 = vmatprep.subr.mxu0 0.0
    %1986 = vmatpush1.msra.mxu0 0.0
    %1987 = vmatprep.subr.mxu0 0.0
    %1988 = vmatpush1.msra.mxu0 0.0
    %1989 = vmatprep.subr.mxu0 0.0
    %1990 = vmatpush1.msra.mxu0 0.0
    %1991 = vmatprep.subr.mxu0 0.0
    %1992 = vmatpush1.msra.mxu0 0.0
    %1993 = vmatprep.subr.mxu0 0.0
    %1994 = vmatpush1.msra.mxu0 0.0
    %1995 = vmatprep.subr.mxu0 0.0
    %1996 = vmatpush1.msra.mxu0 0.0
    %1997 = vmatprep.subr.mxu0 0.0
    %1998 = vmatpush1.msra.mxu0 0.0
    %1999 = vmatprep.subr.mxu0 0.0
    %2000 = vmatpush1.msra.mxu0 0.0
    %2001 = vmatprep.subr.mxu0 0.0
    %2002 = vmatpush1.msra.mxu0 0.0
    %2003 = vmatprep.subr.mxu0 0.0
    %2004 = vmatpush1.msra.mxu0 0.0
    %2005 = vmatprep.subr.mxu0 0.0
    %2006 = vmatpush1.msra.mxu0 0.0
    %2007 = vmatprep.subr.mxu0 0.0
    %2008 = vmatpush1.msra.mxu0 0.0
    %2009 = vmatprep.subr.mxu0 0.0
    %2010 = vmatpush1.msra.mxu0 0.0
    %2011 = vmatprep.subr.mxu0 0.0
    %2012 = vmatpush1.msra.mxu0 0.0
    %2013 = vmatprep.subr.mxu0 0.0
    %2014 = vmatpush1.msra.mxu0 0.0
    %2015 = vmatprep.subr.mxu0 0.0
    %2016 = vmatpush1.msra.mxu0 0.0
    %2017 = vmatprep.mubr.f32.mxu0 0.0
    %2018 = vmatmul.mubr.f32.gmra.mrb[0].mxu0 %v1951
    %v2019 = vpop.f32.mrb[0].mxu0
    %v2020 = vadd.f32 1e-16, %v2019
    %v2021 = vpop.f32.mrb[0].mxu0
    %2022 = vdwg.mxu0
    %v2023 = vrcp.pop %v2020
    %v2024 = vmul.f32 %v1876, %v2023
    %v2026 = vsel %vm503, %v1534, 0
    %v2029 = vsel %vm503, %v1539, 0
    %v2032 = vsel %vm503, %v1544, 0
    %v2035 = vsel %vm503, %v1549, 0
    %v2038 = vsel %vm503, %v1554, 0
    %v2041 = vsel %vm503, %v1559, 0
    %v2044 = vsel %vm503, %v1564, 0
    %v2047 = vsel %vm503, %v1569, 0
    %2049 = vmatprep.subr.mxu0 0.0
    %2050 = vmatpush1.msra.mxu0 %v71
    %2051 = vmatprep.subr.mxu0 0.0
    %2052 = vmatpush1.msra.mxu0 0.0
    %2053 = vmatprep.subr.mxu0 0.0
    %2054 = vmatpush1.msra.mxu0 0.0
    %2055 = vmatprep.subr.mxu0 0.0
    %2056 = vmatpush1.msra.mxu0 0.0
    %2057 = vmatprep.subr.mxu0 0.0
    %2058 = vmatpush1.msra.mxu0 0.0
    %2059 = vmatprep.subr.mxu0 0.0
    %2060 = vmatpush1.msra.mxu0 0.0
    %2061 = vmatprep.subr.mxu0 0.0
    %2062 = vmatpush1.msra.mxu0 0.0
    %2063 = vmatprep.subr.mxu0 0.0
    %2064 = vmatpush1.msra.mxu0 0.0
    %2065 = vmatprep.subr.mxu0 0.0
    %2066 = vmatpush1.msra.mxu0 0.0
    %2067 = vmatprep.subr.mxu0 0.0
    %2068 = vmatpush1.msra.mxu0 0.0
    %2069 = vmatprep.subr.mxu0 0.0
    %2070 = vmatpush1.msra.mxu0 0.0
    %2071 = vmatprep.subr.mxu0 0.0
    %2072 = vmatpush1.msra.mxu0 0.0
    %2073 = vmatprep.subr.mxu0 0.0
    %2074 = vmatpush1.msra.mxu0 0.0
    %2075 = vmatprep.subr.mxu0 0.0
    %2076 = vmatpush1.msra.mxu0 0.0
    %2077 = vmatprep.subr.mxu0 0.0
    %2078 = vmatpush1.msra.mxu0 0.0
    %2079 = vmatprep.subr.mxu0 0.0
    %2080 = vmatpush1.msra.mxu0 0.0
    %2081 = vmatprep.subr.mxu0 0.0
    %2082 = vmatpush1.msra.mxu0 0.0
    %2083 = vmatprep.subr.mxu0 0.0
    %2084 = vmatpush1.msra.mxu0 0.0
    %2085 = vmatprep.subr.mxu0 0.0
    %2086 = vmatpush1.msra.mxu0 0.0
    %2087 = vmatprep.subr.mxu0 0.0
    %2088 = vmatpush1.msra.mxu0 0.0
    %2089 = vmatprep.subr.mxu0 0.0
    %2090 = vmatpush1.msra.mxu0 0.0
    %2091 = vmatprep.subr.mxu0 0.0
    %2092 = vmatpush1.msra.mxu0 0.0
    %2093 = vmatprep.subr.mxu0 0.0
    %2094 = vmatpush1.msra.mxu0 0.0
    %2095 = vmatprep.subr.mxu0 0.0
    %2096 = vmatpush1.msra.mxu0 0.0
    %2097 = vmatprep.subr.mxu0 0.0
    %2098 = vmatpush1.msra.mxu0 0.0
    %2099 = vmatprep.subr.mxu0 0.0
    %2100 = vmatpush1.msra.mxu0 0.0
    %2101 = vmatprep.subr.mxu0 0.0
    %2102 = vmatpush1.msra.mxu0 0.0
    %2103 = vmatprep.subr.mxu0 0.0
    %2104 = vmatpush1.msra.mxu0 0.0
    %2105 = vmatprep.subr.mxu0 0.0
    %2106 = vmatpush1.msra.mxu0 0.0
    %2107 = vmatprep.subr.mxu0 0.0
    %2108 = vmatpush1.msra.mxu0 0.0
    %2109 = vmatprep.subr.mxu0 0.0
    %2110 = vmatpush1.msra.mxu0 0.0
    %2111 = vmatprep.subr.mxu0 0.0
    %2112 = vmatpush1.msra.mxu0 0.0
    %2113 = vmatprep.mubr.f32.mxu0 0.0
    %2114 = vmatmul.mubr.f32.gmra.mrb[0].mxu0 %v2026
    %v2115 = vpop.f32.mrb[0].mxu0
    %v2116 = vadd.f32 0.0, %v2115
    %v2117 = vpop.f32.mrb[0].mxu0
    %2118 = vmatprep.mubr.f32.mxu0 0.0
    %2119 = vmatmul.mubr.f32.gmra.mrb[0].mxu0 %v2029
    %v2120 = vpop.f32.mrb[0].mxu0
    %v2121 = vadd.f32 0.0, %v2120
    %v2122 = vpop.f32.mrb[0].mxu0
    %2123 = vmatprep.mubr.f32.mxu0 0.0
    %2124 = vmatmul.mubr.f32.gmra.mrb[0].mxu0 %v2032
    %v2125 = vpop.f32.mrb[0].mxu0
    %v2126 = vadd.f32 0.0, %v2125
    %v2127 = vpop.f32.mrb[0].mxu0
    %2128 = vmatprep.mubr.f32.mxu0 0.0
    %2129 = vmatmul.mubr.f32.gmra.mrb[0].mxu0 %v2035
    %v2130 = vpop.f32.mrb[0].mxu0
    %v2131 = vadd.f32 0.0, %v2130
    %v2132 = vpop.f32.mrb[0].mxu0
    %2133 = vmatprep.mubr.f32.mxu0 0.0
    %2134 = vmatmul.mubr.f32.gmra.mrb[0].mxu0 %v2038
    %v2135 = vpop.f32.mrb[0].mxu0
    %v2136 = vadd.f32 0.0, %v2135
    %v2137 = vpop.f32.mrb[0].mxu0
    %2138 = vmatprep.mubr.f32.mxu0 0.0
    %2139 = vmatmul.mubr.f32.gmra.mrb[0].mxu0 %v2041
    %v2140 = vpop.f32.mrb[0].mxu0
    %v2141 = vadd.f32 0.0, %v2140
    %v2142 = vpop.f32.mrb[0].mxu0
    %2143 = vmatprep.mubr.f32.mxu0 0.0
    %2144 = vmatmul.mubr.f32.gmra.mrb[0].mxu0 %v2044
    %v2145 = vpop.f32.mrb[0].mxu0
    %v2146 = vadd.f32 0.0, %v2145
    %v2147 = vpop.f32.mrb[0].mxu0
    %2148 = vmatprep.mubr.f32.mxu0 0.0
    %2149 = vmatmul.mubr.f32.gmra.mrb[0].mxu0 %v2047
    %v2150 = vpop.f32.mrb[0].mxu0
    %v2151 = vadd.f32 0.0, %v2150
    %v2152 = vpop.f32.mrb[0].mxu0
    %2153 = vdwg.mxu0
    %v2155 = vsel %vm962, %v2024, 0
    %2157 = vmatprep.subr.mxu0 0.0
    %2158 = vmatpush1.msra.mxu0 %v2155
    %2159 = vmatprep.subr.mxu0 0.0
    %2160 = vmatpush1.msra.mxu0 0.0
    %2161 = vmatprep.subr.mxu0 0.0
    %2162 = vmatpush1.msra.mxu0 0.0
    %2163 = vmatprep.subr.mxu0 0.0
    %2164 = vmatpush1.msra.mxu0 0.0
    %2165 = vmatprep.subr.mxu0 0.0
    %2166 = vmatpush1.msra.mxu0 0.0
    %2167 = vmatprep.subr.mxu0 0.0
    %2168 = vmatpush1.msra.mxu0 0.0
    %2169 = vmatprep.subr.mxu0 0.0
    %2170 = vmatpush1.msra.mxu0 0.0
    %2171 = vmatprep.subr.mxu0 0.0
    %2172 = vmatpush1.msra.mxu0 0.0
    %2173 = vmatprep.subr.mxu0 0.0
    %2174 = vmatpush1.msra.mxu0 0.0
    %2175 = vmatprep.subr.mxu0 0.0
    %2176 = vmatpush1.msra.mxu0 0.0
    %2177 = vmatprep.subr.mxu0 0.0
    %2178 = vmatpush1.msra.mxu0 0.0
    %2179 = vmatprep.subr.mxu0 0.0
    %2180 = vmatpush1.msra.mxu0 0.0
    %2181 = vmatprep.subr.mxu0 0.0
    %2182 = vmatpush1.msra.mxu0 0.0
    %2183 = vmatprep.subr.mxu0 0.0
    %2184 = vmatpush1.msra.mxu0 0.0
    %2185 = vmatprep.subr.mxu0 0.0
    %2186 = vmatpush1.msra.mxu0 0.0
    %2187 = vmatprep.subr.mxu0 0.0
    %2188 = vmatpush1.msra.mxu0 0.0
    %2189 = vmatprep.subr.mxu0 0.0
    %2190 = vmatpush1.msra.mxu0 0.0
    %2191 = vmatprep.subr.mxu0 0.0
    %2192 = vmatpush1.msra.mxu0 0.0
    %2193 = vmatprep.subr.mxu0 0.0
    %2194 = vmatpush1.msra.mxu0 0.0
    %2195 = vmatprep.subr.mxu0 0.0
    %2196 = vmatpush1.msra.mxu0 0.0
    %2197 = vmatprep.subr.mxu0 0.0
    %2198 = vmatpush1.msra.mxu0 0.0
    %2199 = vmatprep.subr.mxu0 0.0
    %2200 = vmatpush1.msra.mxu0 0.0
    %2201 = vmatprep.subr.mxu0 0.0
    %2202 = vmatpush1.msra.mxu0 0.0
    %2203 = vmatprep.subr.mxu0 0.0
    %2204 = vmatpush1.msra.mxu0 0.0
    %2205 = vmatprep.subr.mxu0 0.0
    %2206 = vmatpush1.msra.mxu0 0.0
    %2207 = vmatprep.subr.mxu0 0.0
    %2208 = vmatpush1.msra.mxu0 0.0
    %2209 = vmatprep.subr.mxu0 0.0
    %2210 = vmatpush1.msra.mxu0 0.0
    %2211 = vmatprep.subr.mxu0 0.0
    %2212 = vmatpush1.msra.mxu0 0.0
    %2213 = vmatprep.subr.mxu0 0.0
    %2214 = vmatpush1.msra.mxu0 0.0
    %2215 = vmatprep.subr.mxu0 0.0
    %2216 = vmatpush1.msra.mxu0 0.0
    %2217 = vmatprep.subr.mxu0 0.0
    %2218 = vmatpush1.msra.mxu0 0.0
    %2219 = vmatprep.subr.mxu0 0.0
    %2220 = vmatpush1.msra.mxu0 0.0
    %2221 = vmatprep.mubr.f32.mxu0 0.0
    %2222 = vmatmul.mubr.f32.gmra.mrb[0].mxu0 %v939
    %v2223 = vpop.f32.mrb[0].mxu0
    %v2224 = vadd.f32 0.0, %v2223
    %v2225 = vpop.f32.mrb[0].mxu0
    %2226 = vmatprep.mubr.f32.mxu0 0.0
    %2227 = vmatmul.mubr.f32.gmra.mrb[0].mxu0 %v942
    %v2228 = vpop.f32.mrb[0].mxu0
    %v2229 = vadd.f32 0.0, %v2228
    %v2230 = vpop.f32.mrb[0].mxu0
    %2231 = vmatprep.mubr.f32.mxu0 0.0
    %2232 = vmatmul.mubr.f32.gmra.mrb[0].mxu0 %v945
    %v2233 = vpop.f32.mrb[0].mxu0
    %v2234 = vadd.f32 0.0, %v2233
    %v2235 = vpop.f32.mrb[0].mxu0
    %2236 = vmatprep.mubr.f32.mxu0 0.0
    %2237 = vmatmul.mubr.f32.gmra.mrb[0].mxu0 %v948
    %v2238 = vpop.f32.mrb[0].mxu0
    %v2239 = vadd.f32 0.0, %v2238
    %v2240 = vpop.f32.mrb[0].mxu0
    %2241 = vmatprep.mubr.f32.mxu0 0.0
    %2242 = vmatmul.mubr.f32.gmra.mrb[0].mxu0 %v951
    %v2243 = vpop.f32.mrb[0].mxu0
    %v2244 = vadd.f32 0.0, %v2243
    %v2245 = vpop.f32.mrb[0].mxu0
    %2246 = vmatprep.mubr.f32.mxu0 0.0
    %2247 = vmatmul.mubr.f32.gmra.mrb[0].mxu0 %v954
    %v2248 = vpop.f32.mrb[0].mxu0
    %v2249 = vadd.f32 0.0, %v2248
    %v2250 = vpop.f32.mrb[0].mxu0
    %2251 = vmatprep.mubr.f32.mxu0 0.0
    %2252 = vmatmul.mubr.f32.gmra.mrb[0].mxu0 %v957
    %v2253 = vpop.f32.mrb[0].mxu0
    %v2254 = vadd.f32 0.0, %v2253
    %v2255 = vpop.f32.mrb[0].mxu0
    %2256 = vmatprep.mubr.f32.mxu0 0.0
    %2257 = vmatmul.mubr.f32.gmra.mrb[0].mxu0 %v960
    %v2258 = vpop.f32.mrb[0].mxu0
    %v2259 = vadd.f32 0.0, %v2258
    %v2260 = vpop.f32.mrb[0].mxu0
    %2261 = vdwg.mxu0
    %v2262 = vmul.f32 %v2224, %v2116
    %v2263 = vmul.f32 %v2229, %v2121
    %v2264 = vmul.f32 %v2234, %v2126
    %v2265 = vmul.f32 %v2239, %v2131
    %v2266 = vmul.f32 %v2244, %v2136
    %v2267 = vmul.f32 %v2249, %v2141
    %v2268 = vmul.f32 %v2254, %v2146
    %v2269 = vmul.f32 %v2259, %v2151
    %v2271 = vsel %vm117, %v2262, 0
    %v2274 = vsel %vm117, %v2263, 0
    %v2277 = vsel %vm117, %v2264, 0
    %v2280 = vsel %vm117, %v2265, 0
    %v2283 = vsel %vm117, %v2266, 0
    %v2286 = vsel %vm117, %v2267, 0
    %v2289 = vsel %vm117, %v2268, 0
    %v2292 = vsel %vm117, %v2269, 0
    %2294 = vmatprep.subr.mxu0 0.0
    %2295 = vmatpush1.msra.mxu0 %v72
    %2296 = vmatprep.subr.mxu0 0.0
    %2297 = vmatpush1.msra.mxu0 %v73
    %2298 = vmatprep.subr.mxu0 0.0
    %2299 = vmatpush1.msra.mxu0 0.0
    %2300 = vmatprep.subr.mxu0 0.0
    %2301 = vmatpush1.msra.mxu0 0.0
    %2302 = vmatprep.subr.mxu0 0.0
    %2303 = vmatpush1.msra.mxu0 0.0
    %2304 = vmatprep.subr.mxu0 0.0
    %2305 = vmatpush1.msra.mxu0 0.0
    %2306 = vmatprep.subr.mxu0 0.0
    %2307 = vmatpush1.msra.mxu0 0.0
    %2308 = vmatprep.subr.mxu0 0.0
    %2309 = vmatpush1.msra.mxu0 0.0
    %2310 = vmatprep.subr.mxu0 0.0
    %2311 = vmatpush1.msra.mxu0 0.0
    %2312 = vmatprep.subr.mxu0 0.0
    %2313 = vmatpush1.msra.mxu0 0.0
    %2314 = vmatprep.subr.mxu0 0.0
    %2315 = vmatpush1.msra.mxu0 0.0
    %2316 = vmatprep.subr.mxu0 0.0
    %2317 = vmatpush1.msra.mxu0 0.0
    %2318 = vmatprep.subr.mxu0 0.0
    %2319 = vmatpush1.msra.mxu0 0.0
    %2320 = vmatprep.subr.mxu0 0.0
    %2321 = vmatpush1.msra.mxu0 0.0
    %2322 = vmatprep.subr.mxu0 0.0
    %2323 = vmatpush1.msra.mxu0 0.0
    %2324 = vmatprep.subr.mxu0 0.0
    %2325 = vmatpush1.msra.mxu0 0.0
    %2326 = vmatprep.subr.mxu0 0.0
    %2327 = vmatpush1.msra.mxu0 0.0
    %2328 = vmatprep.subr.mxu0 0.0
    %2329 = vmatpush1.msra.mxu0 0.0
    %2330 = vmatprep.subr.mxu0 0.0
    %2331 = vmatpush1.msra.mxu0 0.0
    %2332 = vmatprep.subr.mxu0 0.0
    %2333 = vmatpush1.msra.mxu0 0.0
    %2334 = vmatprep.subr.mxu0 0.0
    %2335 = vmatpush1.msra.mxu0 0.0
    %2336 = vmatprep.subr.mxu0 0.0
    %2337 = vmatpush1.msra.mxu0 0.0
    %2338 = vmatprep.subr.mxu0 0.0
    %2339 = vmatpush1.msra.mxu0 0.0
    %2340 = vmatprep.subr.mxu0 0.0
    %2341 = vmatpush1.msra.mxu0 0.0
    %2342 = vmatprep.subr.mxu0 0.0
    %2343 = vmatpush1.msra.mxu0 0.0
    %2344 = vmatprep.subr.mxu0 0.0
    %2345 = vmatpush1.msra.mxu0 0.0
    %2346 = vmatprep.subr.mxu0 0.0
    %2347 = vmatpush1.msra.mxu0 0.0
    %2348 = vmatprep.subr.mxu0 0.0
    %2349 = vmatpush1.msra.mxu0 0.0
    %2350 = vmatprep.subr.mxu0 0.0
    %2351 = vmatpush1.msra.mxu0 0.0
    %2352 = vmatprep.subr.mxu0 0.0
    %2353 = vmatpush1.msra.mxu0 0.0
    %2354 = vmatprep.subr.mxu0 0.0
    %2355 = vmatpush1.msra.mxu0 0.0
    %2356 = vmatprep.subr.mxu0 0.0
    %2357 = vmatpush1.msra.mxu0 0.0
    %2358 = vmatprep.mubr.f32.mxu0 0.0
    %2359 = vmatmul.mubr.f32.gmra.mrb[0].mxu0 %v2271
    %v2360 = vpop.f32.mrb[0].mxu0
    %v2361 = vadd.f32 0.0, %v2360
    %v2362 = vpop.f32.mrb[0].mxu0
    %2363 = vmatprep.mubr.f32.mxu0 0.0
    %2364 = vmatmul.mubr.f32.gmra.mrb[0].mxu0 %v2274
    %v2365 = vpop.f32.mrb[0].mxu0
    %v2366 = vadd.f32 0.0, %v2365
    %v2367 = vpop.f32.mrb[0].mxu0
    %2368 = vmatprep.mubr.f32.mxu0 0.0
    %2369 = vmatmul.mubr.f32.gmra.mrb[0].mxu0 %v2277
    %v2370 = vpop.f32.mrb[0].mxu0
    %v2371 = vadd.f32 0.0, %v2370
    %v2372 = vpop.f32.mrb[0].mxu0
    %2373 = vmatprep.mubr.f32.mxu0 0.0
    %2374 = vmatmul.mubr.f32.gmra.mrb[0].mxu0 %v2280
    %v2375 = vpop.f32.mrb[0].mxu0
    %v2376 = vadd.f32 0.0, %v2375
    %v2377 = vpop.f32.mrb[0].mxu0
    %2378 = vmatprep.mubr.f32.mxu0 0.0
    %2379 = vmatmul.mubr.f32.gmra.mrb[0].mxu0 %v2283
    %v2380 = vpop.f32.mrb[0].mxu0
    %v2381 = vadd.f32 0.0, %v2380
    %v2382 = vpop.f32.mrb[0].mxu0
    %2383 = vmatprep.mubr.f32.mxu0 0.0
    %2384 = vmatmul.mubr.f32.gmra.mrb[0].mxu0 %v2286
    %v2385 = vpop.f32.mrb[0].mxu0
    %v2386 = vadd.f32 0.0, %v2385
    %v2387 = vpop.f32.mrb[0].mxu0
    %2388 = vmatprep.mubr.f32.mxu0 0.0
    %2389 = vmatmul.mubr.f32.gmra.mrb[0].mxu0 %v2289
    %v2390 = vpop.f32.mrb[0].mxu0
    %v2391 = vadd.f32 0.0, %v2390
    %v2392 = vpop.f32.mrb[0].mxu0
    %2393 = vmatprep.mubr.f32.mxu0 0.0
    %2394 = vmatmul.mubr.f32.gmra.mrb[0].mxu0 %v2292
    %v2395 = vpop.f32.mrb[0].mxu0
    %v2396 = vadd.f32 0.0, %v2395
    %v2397 = vpop.f32.mrb[0].mxu0
    %2398 = vdwg.mxu0
    %s2399 = scalar_lea.vmem %s12, 32
    %v2400 = vld [vmem:[%s2399] sm:$0xff]
    %v2401 = vld [vmem:[%s2399 + $0x8] sm:$0xff]
    %v2402 = vld [vmem:[%s2399 + $0x10] sm:$0xff]
    %v2403 = vld [vmem:[%s2399 + $0x18] sm:$0xff]
    %2405 = vset.pattern.permute.xlu0 0
    %2406 = vperm.xlu0 %2405, %v2400
    %v2407 = vpop.permute.xlu0 %2406
    %2410 = vset.pattern.permute.xlu0 0
    %2411 = vperm.xlu0 %2410, %v2401
    %v2412 = vpop.permute.xlu0 %2411
    %2415 = vset.pattern.permute.xlu0 0
    %2416 = vperm.xlu0 %2415, %v2402
    %v2417 = vpop.permute.xlu0 %2416
    %2420 = vset.pattern.permute.xlu0 0
    %2421 = vperm.xlu0 %2420, %v2403
    %v2422 = vpop.permute.xlu0 %2421
    %2424 = vmatprep.subr.mxu0 0.0
    %2425 = vmatpush1.msra.mxu0 %v2361
    %2426 = vmatprep.subr.mxu0 0.0
    %2427 = vmatpush1.msra.mxu0 %v2366
    %2428 = vmatprep.subr.mxu0 0.0
    %2429 = vmatpush1.msra.mxu0 %v2371
    %2430 = vmatprep.subr.mxu0 0.0
    %2431 = vmatpush1.msra.mxu0 %v2376
    %2432 = vmatprep.subr.mxu0 0.0
    %2433 = vmatpush1.msra.mxu0 %v2381
    %2434 = vmatprep.subr.mxu0 0.0
    %2435 = vmatpush1.msra.mxu0 %v2386
    %2436 = vmatprep.subr.mxu0 0.0
    %2437 = vmatpush1.msra.mxu0 %v2391
    %2438 = vmatprep.subr.mxu0 0.0
    %2439 = vmatpush1.msra.mxu0 %v2396
    %2440 = vmatprep.subr.mxu0 0.0
    %2441 = vmatpush1.msra.mxu0 0.0
    %2442 = vmatprep.subr.mxu0 0.0
    %2443 = vmatpush1.msra.mxu0 0.0
    %2444 = vmatprep.subr.mxu0 0.0
    %2445 = vmatpush1.msra.mxu0 0.0
    %2446 = vmatprep.subr.mxu0 0.0
    %2447 = vmatpush1.msra.mxu0 0.0
    %2448 = vmatprep.subr.mxu0 0.0
    %2449 = vmatpush1.msra.mxu0 0.0
    %2450 = vmatprep.subr.mxu0 0.0
    %2451 = vmatpush1.msra.mxu0 0.0
    %2452 = vmatprep.subr.mxu0 0.0
    %2453 = vmatpush1.msra.mxu0 0.0
    %2454 = vmatprep.subr.mxu0 0.0
    %2455 = vmatpush1.msra.mxu0 0.0
    %2456 = vmatprep.subr.mxu0 0.0
    %2457 = vmatpush1.msra.mxu0 0.0
    %2458 = vmatprep.subr.mxu0 0.0
    %2459 = vmatpush1.msra.mxu0 0.0
    %2460 = vmatprep.subr.mxu0 0.0
    %2461 = vmatpush1.msra.mxu0 0.0
    %2462 = vmatprep.subr.mxu0 0.0
    %2463 = vmatpush1.msra.mxu0 0.0
    %2464 = vmatprep.subr.mxu0 0.0
    %2465 = vmatpush1.msra.mxu0 0.0
    %2466 = vmatprep.subr.mxu0 0.0
    %2467 = vmatpush1.msra.mxu0 0.0
    %2468 = vmatprep.subr.mxu0 0.0
    %2469 = vmatpush1.msra.mxu0 0.0
    %2470 = vmatprep.subr.mxu0 0.0
    %2471 = vmatpush1.msra.mxu0 0.0
    %2472 = vmatprep.subr.mxu0 0.0
    %2473 = vmatpush1.msra.mxu0 0.0
    %2474 = vmatprep.subr.mxu0 0.0
    %2475 = vmatpush1.msra.mxu0 0.0
    %2476 = vmatprep.subr.mxu0 0.0
    %2477 = vmatpush1.msra.mxu0 0.0
    %2478 = vmatprep.subr.mxu0 0.0
    %2479 = vmatpush1.msra.mxu0 0.0
    %2480 = vmatprep.subr.mxu0 0.0
    %2481 = vmatpush1.msra.mxu0 0.0
    %2482 = vmatprep.subr.mxu0 0.0
    %2483 = vmatpush1.msra.mxu0 0.0
    %2484 = vmatprep.subr.mxu0 0.0
    %2485 = vmatpush1.msra.mxu0 0.0
    %2486 = vmatprep.subr.mxu0 0.0
    %2487 = vmatpush1.msra.mxu0 0.0
    %2488 = vmatprep.mubr.f32.mxu0 0.0
    %2489 = vmatmul.mubr.f32.gmra.mrb[0].mxu0 %v1233
    %v2490 = vpop.f32.mrb[0].mxu0
    %v2491 = vadd.f32 %v2407, %v2490
    %v2492 = vpop.f32.mrb[0].mxu0
    %2493 = vmatprep.mubr.f32.mxu0 0.0
    %2494 = vmatmul.mubr.f32.gmra.mrb[0].mxu0 %v1236
    %v2495 = vpop.f32.mrb[0].mxu0
    %v2496 = vadd.f32 %v2412, %v2495
    %v2497 = vpop.f32.mrb[0].mxu0
    %2498 = vmatprep.mubr.f32.mxu0 0.0
    %2499 = vmatmul.mubr.f32.gmra.mrb[0].mxu0 %v1239
    %v2500 = vpop.f32.mrb[0].mxu0
    %v2501 = vadd.f32 %v2417, %v2500
    %v2502 = vpop.f32.mrb[0].mxu0
    %2503 = vmatprep.mubr.f32.mxu0 0.0
    %2504 = vmatmul.mubr.f32.gmra.mrb[0].mxu0 %v1242
    %v2505 = vpop.f32.mrb[0].mxu0
    %v2506 = vadd.f32 %v2422, %v2505
    %v2507 = vpop.f32.mrb[0].mxu0
    %2508 = vdwg.mxu0
    %v2509 = vsel %vm503, %v2491, 0.0
    %2510 = vadd.xlane.f32.xlu0 %v2509
    %v2511 = vpop.xlane.xlu0 %2510
    %v2512 = vsel %vm503, %v2496, 0.0
    %2513 = vadd.xlane.f32.xlu0 %v2512
    %v2514 = vpop.xlane.xlu0 %2513
    %v2515 = vsel %vm503, %v2501, 0.0
    %2516 = vadd.xlane.f32.xlu0 %v2515
    %v2517 = vpop.xlane.xlu0 %2516
    %v2518 = vsel %vm503, %v2506, 0.0
    %2519 = vadd.xlane.f32.xlu0 %v2518
    %v2520 = vpop.xlane.xlu0 %2519
    %v2521 = vmul.f32 %v2511, %v1341
    %v2522 = vmul.f32 %v2514, %v1341
    %v2523 = vmul.f32 %v2517, %v1341
    %v2524 = vmul.f32 %v2520, %v1341
    %s2525 = scalar_lea.vmem %s13, 8
    %v2526 = vld [vmem:[%s2525] sm:$0x1f]
    %v2528 = vsel %vm224, %v2526, 0
    %2530 = vmatprep.subr.mxu0 0.0
    %2531 = vmatpush1.msra.mxu0 %v2521
    %2532 = vmatprep.subr.mxu0 0.0
    %2533 = vmatpush1.msra.mxu0 %v2522
    %2534 = vmatprep.subr.mxu0 0.0
    %2535 = vmatpush1.msra.mxu0 %v2523
    %2536 = vmatprep.subr.mxu0 0.0
    %2537 = vmatpush1.msra.mxu0 %v2524
    %2538 = vmatprep.subr.mxu0 0.0
    %2539 = vmatpush1.msra.mxu0 0.0
    %2540 = vmatprep.subr.mxu0 0.0
    %2541 = vmatpush1.msra.mxu0 0.0
    %2542 = vmatprep.subr.mxu0 0.0
    %2543 = vmatpush1.msra.mxu0 0.0
    %2544 = vmatprep.subr.mxu0 0.0
    %2545 = vmatpush1.msra.mxu0 0.0
    %2546 = vmatprep.subr.mxu0 0.0
    %2547 = vmatpush1.msra.mxu0 0.0
    %2548 = vmatprep.subr.mxu0 0.0
    %2549 = vmatpush1.msra.mxu0 0.0
    %2550 = vmatprep.subr.mxu0 0.0
    %2551 = vmatpush1.msra.mxu0 0.0
    %2552 = vmatprep.subr.mxu0 0.0
    %2553 = vmatpush1.msra.mxu0 0.0
    %2554 = vmatprep.subr.mxu0 0.0
    %2555 = vmatpush1.msra.mxu0 0.0
    %2556 = vmatprep.subr.mxu0 0.0
    %2557 = vmatpush1.msra.mxu0 0.0
    %2558 = vmatprep.subr.mxu0 0.0
    %2559 = vmatpush1.msra.mxu0 0.0
    %2560 = vmatprep.subr.mxu0 0.0
    %2561 = vmatpush1.msra.mxu0 0.0
    %2562 = vmatprep.subr.mxu0 0.0
    %2563 = vmatpush1.msra.mxu0 0.0
    %2564 = vmatprep.subr.mxu0 0.0
    %2565 = vmatpush1.msra.mxu0 0.0
    %2566 = vmatprep.subr.mxu0 0.0
    %2567 = vmatpush1.msra.mxu0 0.0
    %2568 = vmatprep.subr.mxu0 0.0
    %2569 = vmatpush1.msra.mxu0 0.0
    %2570 = vmatprep.subr.mxu0 0.0
    %2571 = vmatpush1.msra.mxu0 0.0
    %2572 = vmatprep.subr.mxu0 0.0
    %2573 = vmatpush1.msra.mxu0 0.0
    %2574 = vmatprep.subr.mxu0 0.0
    %2575 = vmatpush1.msra.mxu0 0.0
    %2576 = vmatprep.subr.mxu0 0.0
    %2577 = vmatpush1.msra.mxu0 0.0
    %2578 = vmatprep.subr.mxu0 0.0
    %2579 = vmatpush1.msra.mxu0 0.0
    %2580 = vmatprep.subr.mxu0 0.0
    %2581 = vmatpush1.msra.mxu0 0.0
    %2582 = vmatprep.subr.mxu0 0.0
    %2583 = vmatpush1.msra.mxu0 0.0
    %2584 = vmatprep.subr.mxu0 0.0
    %2585 = vmatpush1.msra.mxu0 0.0
    %2586 = vmatprep.subr.mxu0 0.0
    %2587 = vmatpush1.msra.mxu0 0.0
    %2588 = vmatprep.subr.mxu0 0.0
    %2589 = vmatpush1.msra.mxu0 0.0
    %2590 = vmatprep.subr.mxu0 0.0
    %2591 = vmatpush1.msra.mxu0 0.0
    %2592 = vmatprep.subr.mxu0 0.0
    %2593 = vmatpush1.msra.mxu0 0.0
    %2594 = vmatprep.mubr.f32.mxu0 0.0
    %2595 = vmatmul.mubr.f32.gmra.mrb[0].mxu0 %v2528
    %v2596 = vpop.f32.mrb[0].mxu0
    %v2597 = vadd.f32 0.0, %v2596
    %v2598 = vpop.f32.mrb[0].mxu0
    %2599 = vdwg.mxu0
    %v2600 = vadd.f32 %v1420, %v2597
    %2601 = vst.msk [vmem:[#allocation2 + $0x2] sm:$0x3] %vm653, %v2024
    %v2602 = vld [vmem:[%s15] sm:$0xff]
    %v2603 = vld [vmem:[%s15 + $0x8] sm:$0xff]
    %v2604 = vld [vmem:[%s15 + $0x10] sm:$0xff]
    %v2605 = vld [vmem:[%s15 + $0x18] sm:$0xff]
    %v2606 = vld [vmem:[%s16] sm:$0xff]
    %v2607 = vld [vmem:[%s16 + $0x8] sm:$0xff]
    %v2608 = vld [vmem:[%s16 + $0x10] sm:$0xff]
    %v2609 = vld [vmem:[%s16 + $0x18] sm:$0xff]
    %vm2610 = vcmask 39936
    %v2612 = vsel %vm2610, %v2602, 0
    %v2615 = vsel %vm2610, %v2603, 0
    %v2618 = vsel %vm2610, %v2604, 0
    %v2621 = vsel %vm2610, %v2605, 0
    %vm2623 = vcmask 1044480
    %v2625 = vsel %vm2623, %v2600, 0
    %2627 = vmatprep.subr.mxu0 0.0
    %2628 = vmatpush1.msra.mxu0 %v2625
    %2629 = vmatprep.subr.mxu0 0.0
    %2630 = vmatpush1.msra.mxu0 0.0
    %2631 = vmatprep.subr.mxu0 0.0
    %2632 = vmatpush1.msra.mxu0 0.0
    %2633 = vmatprep.subr.mxu0 0.0
    %2634 = vmatpush1.msra.mxu0 0.0
    %2635 = vmatprep.subr.mxu0 0.0
    %2636 = vmatpush1.msra.mxu0 0.0
    %2637 = vmatprep.subr.mxu0 0.0
    %2638 = vmatpush1.msra.mxu0 0.0
    %2639 = vmatprep.subr.mxu0 0.0
    %2640 = vmatpush1.msra.mxu0 0.0
    %2641 = vmatprep.subr.mxu0 0.0
    %2642 = vmatpush1.msra.mxu0 0.0
    %2643 = vmatprep.subr.mxu0 0.0
    %2644 = vmatpush1.msra.mxu0 0.0
    %2645 = vmatprep.subr.mxu0 0.0
    %2646 = vmatpush1.msra.mxu0 0.0
    %2647 = vmatprep.subr.mxu0 0.0
    %2648 = vmatpush1.msra.mxu0 0.0
    %2649 = vmatprep.subr.mxu0 0.0
    %2650 = vmatpush1.msra.mxu0 0.0
    %2651 = vmatprep.subr.mxu0 0.0
    %2652 = vmatpush1.msra.mxu0 0.0
    %2653 = vmatprep.subr.mxu0 0.0
    %2654 = vmatpush1.msra.mxu0 0.0
    %2655 = vmatprep.subr.mxu0 0.0
    %2656 = vmatpush1.msra.mxu0 0.0
    %2657 = vmatprep.subr.mxu0 0.0
    %2658 = vmatpush1.msra.mxu0 0.0
    %2659 = vmatprep.subr.mxu0 0.0
    %2660 = vmatpush1.msra.mxu0 0.0
    %2661 = vmatprep.subr.mxu0 0.0
    %2662 = vmatpush1.msra.mxu0 0.0
    %2663 = vmatprep.subr.mxu0 0.0
    %2664 = vmatpush1.msra.mxu0 0.0
    %2665 = vmatprep.subr.mxu0 0.0
    %2666 = vmatpush1.msra.mxu0 0.0
    %2667 = vmatprep.subr.mxu0 0.0
    %2668 = vmatpush1.msra.mxu0 0.0
    %2669 = vmatprep.subr.mxu0 0.0
    %2670 = vmatpush1.msra.mxu0 0.0
    %2671 = vmatprep.subr.mxu0 0.0
    %2672 = vmatpush1.msra.mxu0 0.0
    %2673 = vmatprep.subr.mxu0 0.0
    %2674 = vmatpush1.msra.mxu0 0.0
    %2675 = vmatprep.subr.mxu0 0.0
    %2676 = vmatpush1.msra.mxu0 0.0
    %2677 = vmatprep.subr.mxu0 0.0
    %2678 = vmatpush1.msra.mxu0 0.0
    %2679 = vmatprep.subr.mxu0 0.0
    %2680 = vmatpush1.msra.mxu0 0.0
    %2681 = vmatprep.subr.mxu0 0.0
    %2682 = vmatpush1.msra.mxu0 0.0
    %2683 = vmatprep.subr.mxu0 0.0
    %2684 = vmatpush1.msra.mxu0 0.0
    %2685 = vmatprep.subr.mxu0 0.0
    %2686 = vmatpush1.msra.mxu0 0.0
    %2687 = vmatprep.subr.mxu0 0.0
    %2688 = vmatpush1.msra.mxu0 0.0
    %2689 = vmatprep.subr.mxu0 0.0
    %2690 = vmatpush1.msra.mxu0 0.0
    %2691 = vmatprep.mubr.f32.mxu0 0.0
    %2692 = vmatmul.mubr.f32.gmra.mrb[0].mxu0 %v2612
    %v2693 = vpop.f32.mrb[0].mxu0
    %v2694 = vadd.f32 %v2606, %v2693
    %v2695 = vpop.f32.mrb[0].mxu0
    %2696 = vmatprep.mubr.f32.mxu0 0.0
    %2697 = vmatmul.mubr.f32.gmra.mrb[0].mxu0 %v2615
    %v2698 = vpop.f32.mrb[0].mxu0
    %v2699 = vadd.f32 %v2607, %v2698
    %v2700 = vpop.f32.mrb[0].mxu0
    %2701 = vmatprep.mubr.f32.mxu0 0.0
    %2702 = vmatmul.mubr.f32.gmra.mrb[0].mxu0 %v2618
    %v2703 = vpop.f32.mrb[0].mxu0
    %v2704 = vadd.f32 %v2608, %v2703
    %v2705 = vpop.f32.mrb[0].mxu0
    %2706 = vmatprep.mubr.f32.mxu0 0.0
    %2707 = vmatmul.mubr.f32.gmra.mrb[0].mxu0 %v2621
    %v2708 = vpop.f32.mrb[0].mxu0
    %v2709 = vadd.f32 %v2609, %v2708
    %v2710 = vpop.f32.mrb[0].mxu0
    %2711 = vdwg.mxu0
    %v2712 = vmax.f32 %v2694, 0.0
    %v2713 = vmax.f32 %v2699, 0.0
    %v2714 = vmax.f32 %v2704, 0.0
    %v2715 = vmax.f32 %v2709, 0.0
    %v2716 = vld [vmem:[%s19] sm:$0x1]
    %v2717 = vld [vmem:[#allocation3] sm:$0x1]
    %v2719 = vsel %vm224, %v2716, 0
    %2721 = vmatprep.subr.mxu0 0.0
    %2722 = vmatpush1.msra.mxu0 %v2712
    %2723 = vmatprep.subr.mxu0 0.0
    %2724 = vmatpush1.msra.mxu0 %v2713
    %2725 = vmatprep.subr.mxu0 0.0
    %2726 = vmatpush1.msra.mxu0 %v2714
    %2727 = vmatprep.subr.mxu0 0.0
    %2728 = vmatpush1.msra.mxu0 %v2715
    %2729 = vmatprep.subr.mxu0 0.0
    %2730 = vmatpush1.msra.mxu0 0.0
    %2731 = vmatprep.subr.mxu0 0.0
    %2732 = vmatpush1.msra.mxu0 0.0
    %2733 = vmatprep.subr.mxu0 0.0
    %2734 = vmatpush1.msra.mxu0 0.0
    %2735 = vmatprep.subr.mxu0 0.0
    %2736 = vmatpush1.msra.mxu0 0.0
    %2737 = vmatprep.subr.mxu0 0.0
    %2738 = vmatpush1.msra.mxu0 0.0
    %2739 = vmatprep.subr.mxu0 0.0
    %2740 = vmatpush1.msra.mxu0 0.0
    %2741 = vmatprep.subr.mxu0 0.0
    %2742 = vmatpush1.msra.mxu0 0.0
    %2743 = vmatprep.subr.mxu0 0.0
    %2744 = vmatpush1.msra.mxu0 0.0
    %2745 = vmatprep.subr.mxu0 0.0
    %2746 = vmatpush1.msra.mxu0 0.0
    %2747 = vmatprep.subr.mxu0 0.0
    %2748 = vmatpush1.msra.mxu0 0.0
    %2749 = vmatprep.subr.mxu0 0.0
    %2750 = vmatpush1.msra.mxu0 0.0
    %2751 = vmatprep.subr.mxu0 0.0
    %2752 = vmatpush1.msra.mxu0 0.0
    %2753 = vmatprep.subr.mxu0 0.0
    %2754 = vmatpush1.msra.mxu0 0.0
    %2755 = vmatprep.subr.mxu0 0.0
    %2756 = vmatpush1.msra.mxu0 0.0
    %2757 = vmatprep.subr.mxu0 0.0
    %2758 = vmatpush1.msra.mxu0 0.0
    %2759 = vmatprep.subr.mxu0 0.0
    %2760 = vmatpush1.msra.mxu0 0.0
    %2761 = vmatprep.subr.mxu0 0.0
    %2762 = vmatpush1.msra.mxu0 0.0
    %2763 = vmatprep.subr.mxu0 0.0
    %2764 = vmatpush1.msra.mxu0 0.0
    %2765 = vmatprep.subr.mxu0 0.0
    %2766 = vmatpush1.msra.mxu0 0.0
    %2767 = vmatprep.subr.mxu0 0.0
    %2768 = vmatpush1.msra.mxu0 0.0
    %2769 = vmatprep.subr.mxu0 0.0
    %2770 = vmatpush1.msra.mxu0 0.0
    %2771 = vmatprep.subr.mxu0 0.0
    %2772 = vmatpush1.msra.mxu0 0.0
    %2773 = vmatprep.subr.mxu0 0.0
    %2774 = vmatpush1.msra.mxu0 0.0
    %2775 = vmatprep.subr.mxu0 0.0
    %2776 = vmatpush1.msra.mxu0 0.0
    %2777 = vmatprep.subr.mxu0 0.0
    %2778 = vmatpush1.msra.mxu0 0.0
    %2779 = vmatprep.subr.mxu0 0.0
    %2780 = vmatpush1.msra.mxu0 0.0
    %2781 = vmatprep.subr.mxu0 0.0
    %2782 = vmatpush1.msra.mxu0 0.0
    %2783 = vmatprep.subr.mxu0 0.0
    %2784 = vmatpush1.msra.mxu0 0.0
    %2785 = vmatprep.mubr.f32.mxu0 0.0
    %2786 = vmatmul.mubr.f32.gmra.mrb[0].mxu0 %v2719
    %v2787 = vpop.f32.mrb[0].mxu0
    %v2788 = vadd.f32 %v2717, %v2787
    %v2789 = vpop.f32.mrb[0].mxu0
    %2790 = vdwg.mxu0
    %v2791 = vld [vmem:[%s17] sm:$0xff]
    %v2792 = vld [vmem:[%s17 + $0x8] sm:$0xff]
    %v2793 = vld [vmem:[%s17 + $0x10] sm:$0xff]
    %v2794 = vld [vmem:[%s17 + $0x18] sm:$0xff]
    %v2795 = vld [vmem:[#allocation2] sm:$0xf]
    %2797 = vset.pattern.permute.xlu0 0
    %2798 = vperm.xlu0 %2797, %v2606
    %v2799 = vpop.permute.xlu0 %2798
    %2802 = vset.pattern.permute.xlu0 0
    %2803 = vperm.xlu0 %2802, %v2607
    %v2804 = vpop.permute.xlu0 %2803
    %2807 = vset.pattern.permute.xlu0 0
    %2808 = vperm.xlu0 %2807, %v2608
    %v2809 = vpop.permute.xlu0 %2808
    %2812 = vset.pattern.permute.xlu0 0
    %2813 = vperm.xlu0 %2812, %v2609
    %v2814 = vpop.permute.xlu0 %2813
    %vm2816 = vcmask 31744
    %v2818 = vsel %vm2816, %v2791, 0
    %v2821 = vsel %vm2816, %v2792, 0
    %v2824 = vsel %vm2816, %v2793, 0
    %v2827 = vsel %vm2816, %v2794, 0
    %vm2829 = vcmask 1043456
    %v2831 = vsel %vm2829, %v2795, 0
    %2833 = vmatprep.subr.mxu0 0.0
    %2834 = vmatpush1.msra.mxu0 %v2831
    %2835 = vmatprep.subr.mxu0 0.0
    %2836 = vmatpush1.msra.mxu0 0.0
    %2837 = vmatprep.subr.mxu0 0.0
    %2838 = vmatpush1.msra.mxu0 0.0
    %2839 = vmatprep.subr.mxu0 0.0
    %2840 = vmatpush1.msra.mxu0 0.0
    %2841 = vmatprep.subr.mxu0 0.0
    %2842 = vmatpush1.msra.mxu0 0.0
    %2843 = vmatprep.subr.mxu0 0.0
    %2844 = vmatpush1.msra.mxu0 0.0
    %2845 = vmatprep.subr.mxu0 0.0
    %2846 = vmatpush1.msra.mxu0 0.0
    %2847 = vmatprep.subr.mxu0 0.0
    %2848 = vmatpush1.msra.mxu0 0.0
    %2849 = vmatprep.subr.mxu0 0.0
    %2850 = vmatpush1.msra.mxu0 0.0
    %2851 = vmatprep.subr.mxu0 0.0
    %2852 = vmatpush1.msra.mxu0 0.0
    %2853 = vmatprep.subr.mxu0 0.0
    %2854 = vmatpush1.msra.mxu0 0.0
    %2855 = vmatprep.subr.mxu0 0.0
    %2856 = vmatpush1.msra.mxu0 0.0
    %2857 = vmatprep.subr.mxu0 0.0
    %2858 = vmatpush1.msra.mxu0 0.0
    %2859 = vmatprep.subr.mxu0 0.0
    %2860 = vmatpush1.msra.mxu0 0.0
    %2861 = vmatprep.subr.mxu0 0.0
    %2862 = vmatpush1.msra.mxu0 0.0
    %2863 = vmatprep.subr.mxu0 0.0
    %2864 = vmatpush1.msra.mxu0 0.0
    %2865 = vmatprep.subr.mxu0 0.0
    %2866 = vmatpush1.msra.mxu0 0.0
    %2867 = vmatprep.subr.mxu0 0.0
    %2868 = vmatpush1.msra.mxu0 0.0
    %2869 = vmatprep.subr.mxu0 0.0
    %2870 = vmatpush1.msra.mxu0 0.0
    %2871 = vmatprep.subr.mxu0 0.0
    %2872 = vmatpush1.msra.mxu0 0.0
    %2873 = vmatprep.subr.mxu0 0.0
    %2874 = vmatpush1.msra.mxu0 0.0
    %2875 = vmatprep.subr.mxu0 0.0
    %2876 = vmatpush1.msra.mxu0 0.0
    %2877 = vmatprep.subr.mxu0 0.0
    %2878 = vmatpush1.msra.mxu0 0.0
    %2879 = vmatprep.subr.mxu0 0.0
    %2880 = vmatpush1.msra.mxu0 0.0
    %2881 = vmatprep.subr.mxu0 0.0
    %2882 = vmatpush1.msra.mxu0 0.0
    %2883 = vmatprep.subr.mxu0 0.0
    %2884 = vmatpush1.msra.mxu0 0.0
    %2885 = vmatprep.subr.mxu0 0.0
    %2886 = vmatpush1.msra.mxu0 0.0
    %2887 = vmatprep.subr.mxu0 0.0
    %2888 = vmatpush1.msra.mxu0 0.0
    %2889 = vmatprep.subr.mxu0 0.0
    %2890 = vmatpush1.msra.mxu0 0.0
    %2891 = vmatprep.subr.mxu0 0.0
    %2892 = vmatpush1.msra.mxu0 0.0
    %2893 = vmatprep.subr.mxu0 0.0
    %2894 = vmatpush1.msra.mxu0 0.0
    %2895 = vmatprep.subr.mxu0 0.0
    %2896 = vmatpush1.msra.mxu0 0.0
    %2897 = vmatprep.mubr.f32.mxu0 0.0
    %2898 = vmatmul.mubr.f32.gmra.mrb[0].mxu0 %v2818
    %v2899 = vpop.f32.mrb[0].mxu0
    %v2900 = vadd.f32 %v2799, %v2899
    %v2901 = vpop.f32.mrb[0].mxu0
    %2902 = vmatprep.mubr.f32.mxu0 0.0
    %2903 = vmatmul.mubr.f32.gmra.mrb[0].mxu0 %v2821
    %v2904 = vpop.f32.mrb[0].mxu0
    %v2905 = vadd.f32 %v2804, %v2904
    %v2906 = vpop.f32.mrb[0].mxu0
    %2907 = vmatprep.mubr.f32.mxu0 0.0
    %2908 = vmatmul.mubr.f32.gmra.mrb[0].mxu0 %v2824
    %v2909 = vpop.f32.mrb[0].mxu0
    %v2910 = vadd.f32 %v2809, %v2909
    %v2911 = vpop.f32.mrb[0].mxu0
    %2912 = vmatprep.mubr.f32.mxu0 0.0
    %2913 = vmatmul.mubr.f32.gmra.mrb[0].mxu0 %v2827
    %v2914 = vpop.f32.mrb[0].mxu0
    %v2915 = vadd.f32 %v2814, %v2914
    %v2916 = vpop.f32.mrb[0].mxu0
    %2917 = vdwg.mxu0
    %v2918 = vld [vmem:[%s18] sm:$0xff]
    %v2919 = vld [vmem:[%s18 + $0x8] sm:$0xff]
    %v2920 = vld [vmem:[%s18 + $0x10] sm:$0xff]
    %v2921 = vld [vmem:[%s18 + $0x18] sm:$0xff]
    %v2922 = vld [vmem:[%s4] sm:$0x3]
    %2924 = vset.pattern.permute.xlu0 0
    %2925 = vperm.xlu0 %2924, %v2918
    %v2926 = vpop.permute.xlu0 %2925
    %2929 = vset.pattern.permute.xlu0 0
    %2930 = vperm.xlu0 %2929, %v2919
    %v2931 = vpop.permute.xlu0 %2930
    %2934 = vset.pattern.permute.xlu0 0
    %2935 = vperm.xlu0 %2934, %v2920
    %v2936 = vpop.permute.xlu0 %2935
    %2939 = vset.pattern.permute.xlu0 0
    %2940 = vperm.xlu0 %2939, %v2921
    %v2941 = vpop.permute.xlu0 %2940
    %v2943 = vlaneseq
    %v2944 = vshrl.u32 %v2943, 7
    %v2945 = vsub.s32 0, %v2944
    %v2946 = vrot.slane %v2922, %v2945
    %v2947 = vmul.f32 %v2926, %v2946
    %v2948 = vmul.f32 %v2931, %v2946
    %v2949 = vmul.f32 %v2936, %v2946
    %v2950 = vmul.f32 %v2941, %v2946
    %v2951 = vadd.f32 %v2900, %v2947
    %v2952 = vadd.f32 %v2905, %v2948
    %v2953 = vadd.f32 %v2910, %v2949
    %v2954 = vadd.f32 %v2915, %v2950
    %v2955 = vmax.f32 %v2951, 0.0
    %v2956 = vmax.f32 %v2952, 0.0
    %v2957 = vmax.f32 %v2953, 0.0
    %v2958 = vmax.f32 %v2954, 0.0
    %2960 = vset.pattern.permute.xlu0 0
    %2961 = vperm.xlu0 %2960, %v2717
    %v2962 = vpop.permute.xlu0 %2961
    %v2964 = vlaneseq
    %v2965 = vshrl.u32 %v2964, 7
    %v2966 = vsub.s32 0, %v2965
    %v2967 = vrot.slane %v2962, %v2966
    %2968 = vmatprep.subr.mxu0 0.0
    %2969 = vmatpush1.msra.mxu0 %v2955
    %2970 = vmatprep.subr.mxu0 0.0
    %2971 = vmatpush1.msra.mxu0 %v2956
    %2972 = vmatprep.subr.mxu0 0.0
    %2973 = vmatpush1.msra.mxu0 %v2957
    %2974 = vmatprep.subr.mxu0 0.0
    %2975 = vmatpush1.msra.mxu0 %v2958
    %2976 = vmatprep.subr.mxu0 0.0
    %2977 = vmatpush1.msra.mxu0 0.0
    %2978 = vmatprep.subr.mxu0 0.0
    %2979 = vmatpush1.msra.mxu0 0.0
    %2980 = vmatprep.subr.mxu0 0.0
    %2981 = vmatpush1.msra.mxu0 0.0
    %2982 = vmatprep.subr.mxu0 0.0
    %2983 = vmatpush1.msra.mxu0 0.0
    %2984 = vmatprep.subr.mxu0 0.0
    %2985 = vmatpush1.msra.mxu0 0.0
    %2986 = vmatprep.subr.mxu0 0.0
    %2987 = vmatpush1.msra.mxu0 0.0
    %2988 = vmatprep.subr.mxu0 0.0
    %2989 = vmatpush1.msra.mxu0 0.0
    %2990 = vmatprep.subr.mxu0 0.0
    %2991 = vmatpush1.msra.mxu0 0.0
    %2992 = vmatprep.subr.mxu0 0.0
    %2993 = vmatpush1.msra.mxu0 0.0
    %2994 = vmatprep.subr.mxu0 0.0
    %2995 = vmatpush1.msra.mxu0 0.0
    %2996 = vmatprep.subr.mxu0 0.0
    %2997 = vmatpush1.msra.mxu0 0.0
    %2998 = vmatprep.subr.mxu0 0.0
    %2999 = vmatpush1.msra.mxu0 0.0
    %3000 = vmatprep.subr.mxu0 0.0
    %3001 = vmatpush1.msra.mxu0 0.0
    %3002 = vmatprep.subr.mxu0 0.0
    %3003 = vmatpush1.msra.mxu0 0.0
    %3004 = vmatprep.subr.mxu0 0.0
    %3005 = vmatpush1.msra.mxu0 0.0
    %3006 = vmatprep.subr.mxu0 0.0
    %3007 = vmatpush1.msra.mxu0 0.0
    %3008 = vmatprep.subr.mxu0 0.0
    %3009 = vmatpush1.msra.mxu0 0.0
    %3010 = vmatprep.subr.mxu0 0.0
    %3011 = vmatpush1.msra.mxu0 0.0
    %3012 = vmatprep.subr.mxu0 0.0
    %3013 = vmatpush1.msra.mxu0 0.0
    %3014 = vmatprep.subr.mxu0 0.0
    %3015 = vmatpush1.msra.mxu0 0.0
    %3016 = vmatprep.subr.mxu0 0.0
    %3017 = vmatpush1.msra.mxu0 0.0
    %3018 = vmatprep.subr.mxu0 0.0
    %3019 = vmatpush1.msra.mxu0 0.0
    %3020 = vmatprep.subr.mxu0 0.0
    %3021 = vmatpush1.msra.mxu0 0.0
    %3022 = vmatprep.subr.mxu0 0.0
    %3023 = vmatpush1.msra.mxu0 0.0
    %3024 = vmatprep.subr.mxu0 0.0
    %3025 = vmatpush1.msra.mxu0 0.0
    %3026 = vmatprep.subr.mxu0 0.0
    %3027 = vmatpush1.msra.mxu0 0.0
    %3028 = vmatprep.subr.mxu0 0.0
    %3029 = vmatpush1.msra.mxu0 0.0
    %3030 = vmatprep.subr.mxu0 0.0
    %3031 = vmatpush1.msra.mxu0 0.0
    %3032 = vmatprep.mubr.f32.mxu0 0.0
    %3033 = vmatmul.mubr.f32.gmra.mrb[0].mxu0 %v2719
    %v3034 = vpop.f32.mrb[0].mxu0
    %v3035 = vadd.f32 %v2967, %v3034
    %v3036 = vpop.f32.mrb[0].mxu0
    %3037 = vdwg.mxu0
    %3039 = vrot.lane.b32.xlu0 %v3035, 1
    %v3040 = vpop.permute.xlu0 %3039
    %vm3042 = vcmask 7168
    %v3043 = vsel %vm3042, %v2788, %v3040
    %v3044 = vlaneseq
    %v3045 = vshrl.u32 %v3044, 7
    %v3046 = vsub.s32 1, %v3045
    %v3047 = vrot.slane %v2922, %v3046
    %v3048 = vmul.f32 %v2926, %v3047
    %v3049 = vmul.f32 %v2931, %v3047
    %v3050 = vmul.f32 %v2936, %v3047
    %v3051 = vmul.f32 %v2941, %v3047
    %v3052 = vadd.f32 %v2900, %v3048
    %v3053 = vadd.f32 %v2905, %v3049
    %v3054 = vadd.f32 %v2910, %v3050
    %v3055 = vadd.f32 %v2915, %v3051
    %v3056 = vmax.f32 %v3052, 0.0
    %v3057 = vmax.f32 %v3053, 0.0
    %v3058 = vmax.f32 %v3054, 0.0
    %v3059 = vmax.f32 %v3055, 0.0
    %3060 = vmatprep.subr.mxu0 0.0
    %3061 = vmatpush1.msra.mxu0 %v3056
    %3062 = vmatprep.subr.mxu0 0.0
    %3063 = vmatpush1.msra.mxu0 %v3057
    %3064 = vmatprep.subr.mxu0 0.0
    %3065 = vmatpush1.msra.mxu0 %v3058
    %3066 = vmatprep.subr.mxu0 0.0
    %3067 = vmatpush1.msra.mxu0 %v3059
    %3068 = vmatprep.subr.mxu0 0.0
    %3069 = vmatpush1.msra.mxu0 0.0
    %3070 = vmatprep.subr.mxu0 0.0
    %3071 = vmatpush1.msra.mxu0 0.0
    %3072 = vmatprep.subr.mxu0 0.0
    %3073 = vmatpush1.msra.mxu0 0.0
    %3074 = vmatprep.subr.mxu0 0.0
    %3075 = vmatpush1.msra.mxu0 0.0
    %3076 = vmatprep.subr.mxu0 0.0
    %3077 = vmatpush1.msra.mxu0 0.0
    %3078 = vmatprep.subr.mxu0 0.0
    %3079 = vmatpush1.msra.mxu0 0.0
    %3080 = vmatprep.subr.mxu0 0.0
    %3081 = vmatpush1.msra.mxu0 0.0
    %3082 = vmatprep.subr.mxu0 0.0
    %3083 = vmatpush1.msra.mxu0 0.0
    %3084 = vmatprep.subr.mxu0 0.0
    %3085 = vmatpush1.msra.mxu0 0.0
    %3086 = vmatprep.subr.mxu0 0.0
    %3087 = vmatpush1.msra.mxu0 0.0
    %3088 = vmatprep.subr.mxu0 0.0
    %3089 = vmatpush1.msra.mxu0 0.0
    %3090 = vmatprep.subr.mxu0 0.0
    %3091 = vmatpush1.msra.mxu0 0.0
    %3092 = vmatprep.subr.mxu0 0.0
    %3093 = vmatpush1.msra.mxu0 0.0
    %3094 = vmatprep.subr.mxu0 0.0
    %3095 = vmatpush1.msra.mxu0 0.0
    %3096 = vmatprep.subr.mxu0 0.0
    %3097 = vmatpush1.msra.mxu0 0.0
    %3098 = vmatprep.subr.mxu0 0.0
    %3099 = vmatpush1.msra.mxu0 0.0
    %3100 = vmatprep.subr.mxu0 0.0
    %3101 = vmatpush1.msra.mxu0 0.0
    %3102 = vmatprep.subr.mxu0 0.0
    %3103 = vmatpush1.msra.mxu0 0.0
    %3104 = vmatprep.subr.mxu0 0.0
    %3105 = vmatpush1.msra.mxu0 0.0
    %3106 = vmatprep.subr.mxu0 0.0
    %3107 = vmatpush1.msra.mxu0 0.0
    %3108 = vmatprep.subr.mxu0 0.0
    %3109 = vmatpush1.msra.mxu0 0.0
    %3110 = vmatprep.subr.mxu0 0.0
    %3111 = vmatpush1.msra.mxu0 0.0
    %3112 = vmatprep.subr.mxu0 0.0
    %3113 = vmatpush1.msra.mxu0 0.0
    %3114 = vmatprep.subr.mxu0 0.0
    %3115 = vmatpush1.msra.mxu0 0.0
    %3116 = vmatprep.subr.mxu0 0.0
    %3117 = vmatpush1.msra.mxu0 0.0
    %3118 = vmatprep.subr.mxu0 0.0
    %3119 = vmatpush1.msra.mxu0 0.0
    %3120 = vmatprep.subr.mxu0 0.0
    %3121 = vmatpush1.msra.mxu0 0.0
    %3122 = vmatprep.subr.mxu0 0.0
    %3123 = vmatpush1.msra.mxu0 0.0
    %3124 = vmatprep.mubr.f32.mxu0 0.0
    %3125 = vmatmul.mubr.f32.gmra.mrb[0].mxu0 %v2719
    %v3126 = vpop.f32.mrb[0].mxu0
    %v3127 = vadd.f32 %v2967, %v3126
    %v3128 = vpop.f32.mrb[0].mxu0
    %3129 = vdwg.mxu0
    %3131 = vrot.lane.b32.xlu0 %v3127, 1
    %v3132 = vpop.permute.xlu0 %3131
    %v3134 = vsel %vm3042, %v2788, %v3132
    %v3136 = vrot.slane %v3134, 7
    %vm3138 = vcmask 1040384
    %v3139 = vsel %vm3138, %v3043, %v3136
    %vm3140 = vcmask 132096
    %3141 = vst.msk [vmem:[#allocation4] sm:$0x3] %vm3140, %v3139
    // Predicated region
    $region86: #{tpu_custom_call.1} parent=1 // pred_check
      _
    $region87: #{tpu_custom_call.1} parent=1 // pred_check_branch
      %3143 = sbr.rel (0) target = $region89
    $region88: #{tpu_custom_call.1} parent=1 // pred_region
      %s3145 = ssub.s32 32, 32
      %3146 = vsyncadd [#allocation5], %s3145
      %s3148 = sshll.u32 [#allocation4], 4
      %s3149 = int_to_ptr.vmem [resolvable:$true] %s3148
      %3151 = dma.vmem_to_hbm [thread:$0]  %s3149, 32, %s21, [#allocation5]
    $region89: #{tpu_custom_call.1} parent=1 // pred_fallthru
      _
    // Predicated region
    $region90: #{tpu_custom_call.1} parent=1 // pred_check
      _
    $region91: #{tpu_custom_call.1} parent=1 // pred_check_branch
      %3153 = sbr.rel (0) target = $region93
    $region92: #{tpu_custom_call.1} parent=1 // pred_region
      %3154 = dma.done [#allocation5], 32
    $region93: #{tpu_custom_call.1} parent=1 // pred_fallthru
      _
    %3155 = vsyncpa [#allocation5], 1

</llo_original>
